<compile_context>
chip_gen: v5e
topology: v5e:2x2
jax: 0.10.0
libtpu: 0.0.40
codegen_flags: <defaults>
</compile_context>

<pallas_src>
import functools

import jax
import jax.numpy as jnp
from jax.experimental import pallas as pl
from jax.experimental.pallas import tpu as pltpu

_BF16 = jnp.bfloat16
_F32 = jnp.float32
_LN_EPS = 1e-6  # IntagHand's SelfAttn blocks use nn.LayerNorm(..., eps=1e-6)


# ----------------------------------------------------------------------------- specs
def _full_spec(shape):
    n = len(shape)
    return pl.BlockSpec(shape, lambda b, _n=n: (0,) * _n)


# ---------------------------------------------------------------------------- helpers
def _layernorm(x, gamma, beta):
    mu = jnp.mean(x, axis=-1, keepdims=True)
    var = jnp.mean(jnp.square(x - mu), axis=-1, keepdims=True)
    return (x - mu) * jax.lax.rsqrt(var + _LN_EPS) * gamma + beta


def _bdot(a, w):
    """MXU matmul with bf16 operands and f32 accumulation."""
    return jnp.dot(a.astype(_BF16), w.astype(_BF16), preferred_element_type=_F32)


def _softmax_lastdim(s):
    s = s - jnp.max(s, axis=-1, keepdims=True)
    e = jnp.exp(s)
    return e * pl.reciprocal(jnp.sum(e, axis=-1, keepdims=True), approx=True)


def _encoder_block(x, wqkv_ref, wo_ref, w1_ref, w2_ref,
                   ln1_g, ln1_b, b1, b2, ln2_g, ln2_b, n_heads):
    """Post-LN transformer block (MHA + FFN) on a (BT, S, D) batch of sequences."""
    bt, s_len, d = x.shape
    dk = d // n_heads
    scale = 1.0 / (dk ** 0.5)
    x2 = x.reshape(bt * s_len, d)
    residual = x2
    qkv = _bdot(x2, wqkv_ref[...]).reshape(bt, s_len, 3 * d)   # one fused QKV matmul
    q = qkv[..., 0:d] * scale
    k = qkv[..., d:2 * d]
    v = qkv[..., 2 * d:3 * d]
    attn = None
    for h in range(n_heads):                                   # static unroll
        sl = slice(h * dk, (h + 1) * dk)
        sc = jnp.einsum('bqd,bkd->bqk', q[..., sl].astype(_BF16),
                        k[..., sl].astype(_BF16),
                        preferred_element_type=_F32)           # (BT, S, S), no k.T
        p = _softmax_lastdim(sc)
        ho = jnp.einsum('bqk,bkd->bqd', p.astype(_BF16),
                        v[..., sl].astype(_BF16),
                        preferred_element_type=_F32)           # (BT, S, dk)
        # fold straight into the output projection: sublane slice of wo is free
        contrib = _bdot(ho.reshape(bt * s_len, dk), wo_ref[sl, :])
        attn = contrib if attn is None else attn + contrib
    x2 = _layernorm(attn + residual, ln1_g, ln1_b)
    residual = x2
    hid = jnp.maximum(_bdot(x2, w1_ref[...]) + b1, 0.0)
    x2 = _bdot(hid, w2_ref[...]) + b2 + residual
    return _layernorm(x2, ln2_g, ln2_b).reshape(bt, s_len, d)


def _vert_img_block(verts, img_f, wqkv_ref, wo_ref, w1_ref, w2_ref,
                    ln1_g, ln1_b, b1, b2, ln2_g, ln2_b, n_heads):
    """Post-LN block on each sequence [vert_token_i ; img tokens], query row 0 only.

    verts: (BT, V, D)   img_f: (BT, GG, D)   ->   (BT*V, D)
    Equivalent to running SelfAttn on (BT*V, 1+GG, D) and keeping x[:, 0]; the FFN
    and LayerNorms are per-token, so only the vert-token row needs computing, and
    the V-fold broadcast/concat of image features is never materialized.
    """
    bt, v_len, d = verts.shape
    gg = img_f.shape[1]
    dk = d // n_heads
    scale = 1.0 / (dk ** 0.5)
    verts2 = verts.reshape(bt * v_len, d)
    residual = verts2
    qkv_v = _bdot(verts2, wqkv_ref[...]).reshape(bt, v_len, 3 * d)
    qkv_i = _bdot(img_f.reshape(bt * gg, d), wqkv_ref[...]).reshape(bt, gg, 3 * d)
    q = qkv_v[..., 0:d] * scale
    k_self = qkv_v[..., d:2 * d]
    v_self = qkv_v[..., 2 * d:3 * d]
    k_img = qkv_i[..., d:2 * d]
    v_img = qkv_i[..., 2 * d:3 * d]
    attn = None
    for h in range(n_heads):                                   # static unroll
        sl = slice(h * dk, (h + 1) * dk)
        qh = q[..., sl]                                                  # (BT, V, dk)
        s_self = jnp.sum(qh * k_self[..., sl], axis=-1, keepdims=True)   # (BT, V, 1)
        s_img = jnp.einsum('bvd,bgd->bvg', qh.astype(_BF16),
                           k_img[..., sl].astype(_BF16),
                           preferred_element_type=_F32)                  # (BT, V, GG)
        m = jnp.maximum(jnp.max(s_img, axis=-1, keepdims=True), s_self)
        e_self = jnp.exp(s_self - m)
        e_img = jnp.exp(s_img - m)
        inv = pl.reciprocal(e_self + jnp.sum(e_img, axis=-1, keepdims=True),
                            approx=True)                                 # (BT, V, 1)
        num = e_self * v_self[..., sl] + jnp.einsum(
            'bvg,bgd->bvd', e_img.astype(_BF16), v_img[..., sl].astype(_BF16),
            preferred_element_type=_F32)
        ho = (num * inv).reshape(bt * v_len, dk)
        contrib = _bdot(ho, wo_ref[sl, :])
        attn = contrib if attn is None else attn + contrib
    x2 = _layernorm(attn + residual, ln1_g, ln1_b)
    residual = x2
    hid = jnp.maximum(_bdot(x2, w1_ref[...]) + b1, 0.0)
    x2 = _bdot(hid, w2_ref[...]) + b2 + residual
    return _layernorm(x2, ln2_g, ln2_b)                                  # (BT*V, D)


# ----------------------------------------------------------------------- fused kernel
def img_ex_kernel(patches_ref, verts_ref,
                  proj_w_ref, enc_vec_ref, e_wqkv_ref, e_wo_ref, e_w1_ref, e_w2_ref,
                  fc_w_ref, vert_vec_ref, v_wqkv_ref, v_wo_ref, v_w1_ref, v_w2_ref,
                  o_ref, *, n_heads):
    """Whole img_ex forward for B_TILE batch elements per grid step."""
    bt, gg, k_dim = patches_ref.shape
    _, v_len, dv = verts_ref.shape
    dg = e_wo_ref.shape[0]

    # packed vector slabs (see wrapper): enc = [pos(GG); proj_b; ln1_g; ln1_b; b1; b2;
    # ln2_g; ln2_b], vert = [fc_b; ln1_g; ln1_b; b1; b2; ln2_g; ln2_b]
    pos = enc_vec_ref[0:gg, :]
    (proj_b, e_ln1g, e_ln1b, e_b1, e_b2, e_ln2g, e_ln2b) = [
        enc_vec_ref[gg + i:gg + i + 1, :] for i in range(7)]
    (fc_b, v_ln1g, v_ln1b, v_b1, v_b2, v_ln2g, v_ln2b) = [
        vert_vec_ref[i:i + 1, :] for i in range(7)]

    # --- img_feat_to_grid: strided patch conv (as one matmul) + ReLU + pos emb ---
    p2 = patches_ref[...].reshape(bt * gg, k_dim)
    g = jnp.maximum(_bdot(p2, proj_w_ref[...]) + proj_b, 0.0)
    g = g.reshape(bt, gg, dg) + pos

    # --- encoder SelfAttn block ---
    g = _encoder_block(g, e_wqkv_ref, e_wo_ref, e_w1_ref, e_w2_ref,
                       e_ln1g, e_ln1b, e_b1, e_b2, e_ln2g, e_ln2b, n_heads)

    # --- img_attn.fc ---
    img_f = (_bdot(g.reshape(bt * gg, dg), fc_w_ref[...]) + fc_b).reshape(bt, gg, dv)

    # --- img_attn.Attn: only the vert-token row of each [vert; img] sequence ---
    verts = verts_ref[...].astype(_F32)
    y = _vert_img_block(verts, img_f, v_wqkv_ref, v_wo_ref, v_w1_ref, v_w2_ref,
                        v_ln1g, v_ln1b, v_b1, v_b2, v_ln2g, v_ln2b, n_heads)
    o_ref[...] = y.reshape(bt, v_len, dv).astype(o_ref.dtype)


# -------------------------------------------------------------------------- forward
def _pick_batch_tile(bs, max_tile=8):
    """Fold batch into matmul M while keeping >=2 grid steps (v7x has 2 TensorCores)."""
    if bs <= 2:
        return 1
    best = 1
    for cand in range(2, max_tile + 1):
        if bs % cand == 0 and bs // cand >= 2:
            best = cand
    return best


def img_ex_forward(img, verts_f, params, batch_tile=None):
    bs, c, h, w = img.shape
    g_size = params["grid_size"]
    p_size = h // g_size
    gg = g_size * g_size
    k_dim = c * p_size * p_size
    dg = params["grid_f_dim"]
    dv = params["verts_f_dim"]
    n_heads = params["n_heads"]
    v_len = verts_f.shape[1]
    assert h == w
    assert verts_f.shape == (bs, v_len, dv)
    assert dg % n_heads == 0 and dv % n_heads == 0

    bt = batch_tile if batch_tile is not None else _pick_batch_tile(bs)
    assert bs % bt == 0

    # strided patch conv == matmul over flattened non-overlapping patches (glue only)
    patches = img.reshape(bs, c, g_size, p_size, g_size, p_size)
    patches = patches.transpose(0, 2, 4, 1, 3, 5).reshape(bs, gg, k_dim)

    e = params["enc_attn"]
    va = params["vert_attn"]
    # img_ex always builds SelfAttn with hid_dim == f_dim, so every (1, D) vector of
    # a block shares one width and can be packed into a single slab.
    assert e["w1"].shape[1] == dg and va["w1"].shape[1] == dv

    enc_vec = jnp.concatenate(
        [params["pos_emb"], params["proj_b"], e["ln1_g"], e["ln1_b"],
         e["b1"], e["b2"], e["ln2_g"], e["ln2_b"]], axis=0).astype(_F32)
    vert_vec = jnp.concatenate(
        [params["fc_b"], va["ln1_g"], va["ln1_b"],
         va["b1"], va["b2"], va["ln2_g"], va["ln2_b"]], axis=0).astype(_F32)

    weight_args = (
        params["proj_w"].astype(_BF16),
        enc_vec,
        jnp.concatenate([e["wq"], e["wk"], e["wv"]], axis=1).astype(_BF16),
        e["wo"].astype(_F32),      # f32 so 8-row head slices stay sublane-aligned
        e["w1"].astype(_BF16),
        e["w2"].astype(_BF16),
        params["fc_w"].astype(_BF16),
        vert_vec,
        jnp.concatenate([va["wq"], va["wk"], va["wv"]], axis=1).astype(_BF16),
        va["wo"].astype(_F32),
        va["w1"].astype(_BF16),
        va["w2"].astype(_BF16),
    )

    kernel = functools.partial(img_ex_kernel, n_heads=n_heads)
    return pl.pallas_call(
        kernel,
        out_shape=jax.ShapeDtypeStruct((bs, v_len, dv), verts_f.dtype),
        grid=(bs // bt,),
        in_specs=[pl.BlockSpec((bt, gg, k_dim), lambda b: (b, 0, 0)),
                  pl.BlockSpec((bt, v_len, dv), lambda b: (b, 0, 0))]
                 + [_full_spec(w.shape) for w in weight_args],
        out_specs=pl.BlockSpec((bt, v_len, dv), lambda b: (b, 0, 0)),
        compiler_params=pltpu.CompilerParams(dimension_semantics=("parallel",)),
    )(patches, verts_f, *weight_args)


# ------------------------------------------------------------- pure-JAX reference
def _layernorm_ref(x, g, b):
    mu = jnp.mean(x, axis=-1, keepdims=True)
    var = jnp.mean(jnp.square(x - mu), axis=-1, keepdims=True)
    return (x - mu) * jax.lax.rsqrt(var + _LN_EPS) * g + b


def _selfattn_ref(x, p, n_heads):
    bsz, s_len, d = x.shape
    dk = d // n_heads
    res = x
    q = (x @ p["wq"]).reshape(bsz, s_len, n_heads, dk).transpose(0, 2, 1, 3)
    k = (x @ p["wk"]).reshape(bsz, s_len, n_heads, dk).transpose(0, 2, 1, 3)
    v = (x @ p["wv"]).reshape(bsz, s_len, n_heads, dk).transpose(0, 2, 1, 3)
    s = jnp.einsum('bhqd,bhkd->bhqk', q, k) / (dk ** 0.5)
    a = jax.nn.softmax(s, axis=-1)
    o = jnp.einsum('bhqk,bhkd->bhqd', a, v).transpose(0, 2, 1, 3).reshape(bsz, s_len, d)
    x = _layernorm_ref(o @ p["wo"] + res, p["ln1_g"], p["ln1_b"])
    res = x
    hid = jax.nn.relu(x @ p["w1"] + p["b1"])
    x = hid @ p["w2"] + p["b2"] + res
    return _layernorm_ref(x, p["ln2_g"], p["ln2_b"])


def img_ex_ref(img, verts_f, params):
    bs, c, h, _ = img.shape
    g_size = params["grid_size"]
    p_size = h // g_size
    gg = g_size * g_size
    k_dim = c * p_size * p_size
    dv = params["verts_f_dim"]
    n_heads = params["n_heads"]
    v_len = verts_f.shape[1]
    patches = img.reshape(bs, c, g_size, p_size, g_size, p_size)
    patches = patches.transpose(0, 2, 4, 1, 3, 5).reshape(bs, gg, k_dim)
    g = jax.nn.relu(patches @ params["proj_w"] + params["proj_b"]) + params["pos_emb"]
    g = _selfattn_ref(g, params["enc_attn"], n_heads)
    img_f = g @ params["fc_w"] + params["fc_b"]
    verts = verts_f.reshape(bs * v_len, 1, dv)
    rep = jnp.repeat(img_f[:, None, :, :], v_len, axis=1).reshape(bs * v_len, gg, dv)
    x = jnp.concatenate([verts, rep], axis=1)
    x = _selfattn_ref(x, params["vert_attn"], n_heads)
    return x[:, 0].reshape(bs, v_len, dv)


# ------------------------------------------------------------------------ param init
def xavier_uniform(key, fan_in, fan_out, shape):
    bound = (6.0 / (fan_in + fan_out)) ** 0.5
    return jax.random.uniform(key, shape, jnp.float32, -bound, bound)


def init_selfattn_params(key, f_dim, n_heads, hid_dim):
    d_q = f_dim // n_heads
    d_v = f_dim // n_heads
    ks = jax.random.split(key, 6)
    return {
        # q/k/v/out projections are bias-free in IntagHand's MultiHeadAttention;
        # FFN biases exist but are zeroed by weights_init.
        "wq": xavier_uniform(ks[0], f_dim, n_heads * d_q, (f_dim, n_heads * d_q)),
        "wk": xavier_uniform(ks[1], f_dim, n_heads * d_q, (f_dim, n_heads * d_q)),
        "wv": xavier_uniform(ks[2], f_dim, n_heads * d_v, (f_dim, n_heads * d_v)),
        "wo": xavier_uniform(ks[3], n_heads * d_v, f_dim, (n_heads * d_v, f_dim)),
        "ln1_g": jnp.ones((1, f_dim), jnp.float32),
        "ln1_b": jnp.zeros((1, f_dim), jnp.float32),
        "w1": xavier_uniform(ks[4], f_dim, hid_dim, (f_dim, hid_dim)),
        "b1": jnp.zeros((1, hid_dim), jnp.float32),
        "w2": xavier_uniform(ks[5], hid_dim, f_dim, (hid_dim, f_dim)),
        "b2": jnp.zeros((1, f_dim), jnp.float32),
        "ln2_g": jnp.ones((1, f_dim), jnp.float32),
        "ln2_b": jnp.zeros((1, f_dim), jnp.float32),
    }


def init_img_ex_params(key, img_size, img_f_dim, grid_size, grid_f_dim,
                       verts_f_dim, n_heads):
    p_size = img_size // grid_size
    gg = grid_size * grid_size
    k_dim = img_f_dim * p_size * p_size
    ks = jax.random.split(key, 6)
    return {
        "grid_size": grid_size,
        "grid_f_dim": grid_f_dim,
        "verts_f_dim": verts_f_dim,
        "n_heads": n_heads,
        # Embedding: default torch init N(0, 1) (weights_init does not touch it).
        "pos_emb": jax.random.normal(ks[0], (gg, grid_f_dim), jnp.float32),
        # Conv2d(img_f_dim -> grid_f_dim, k=P, s=P): xavier weight, default small bias.
        "proj_w": xavier_uniform(ks[1], k_dim, grid_f_dim * p_size * p_size,
                                 (k_dim, grid_f_dim)),
        "proj_b": jax.random.uniform(ks[2], (1, grid_f_dim), jnp.float32,
                                     -1.0 / (k_dim ** 0.5), 1.0 / (k_dim ** 0.5)),
        "enc_attn": init_selfattn_params(ks[3], grid_f_dim, n_heads, grid_f_dim),
        # img_attn.fc: Linear(grid_f_dim -> verts_f_dim), bias zeroed by weights_init.
        "fc_w": xavier_uniform(ks[4], grid_f_dim, verts_f_dim,
                               (grid_f_dim, verts_f_dim)),
        "fc_b": jnp.zeros((1, verts_f_dim), jnp.float32),
        "vert_attn": init_selfattn_params(ks[5], verts_f_dim, n_heads, verts_f_dim),
    }


# ------------------------------------------------------------------------------ main
if __name__ == "__main__":
    img_size, img_f_dim = 16, 4
    grid_size, grid_f_dim = 4, 32
    verts_f_dim, n_heads = 32, 4
    bs, V = 2, 8

    key = jax.random.PRNGKey(0)
    k_params, k_img, k_verts = jax.random.split(key, 3)

    params = init_img_ex_params(k_params, img_size, img_f_dim, grid_size,
                                grid_f_dim, verts_f_dim, n_heads)

    img = jax.random.normal(k_img, (bs, img_f_dim, img_size, img_size), jnp.float32)
    verts_f = jax.random.normal(k_verts, (bs, V, verts_f_dim), jnp.float32)

    out = jax.block_until_ready(img_ex_forward(img, verts_f, params))
    ref = jax.block_until_ready(img_ex_ref(img, verts_f, params))
    assert out.shape == (bs, V, verts_f_dim)
    # Tolerances absorb bf16 MXU operands + approx-reciprocal softmax vs. f32 ref.
    rel = float(jnp.linalg.norm(out - ref) / jnp.linalg.norm(ref))
    max_abs = float(jnp.max(jnp.abs(out - ref)))
    assert rel < 5e-2 and max_abs < 5e-1, (rel, max_abs)
    print("KERNEL_OK")
</pallas_src>

<mosaic_0001>
module attributes {stable_mosaic.version = 11 : i64} {
  func.func @img_ex_kernel(%arg0: i32, %arg1: memref<1x16x64xf32, #tpu.memory_space<vmem>>, %arg2: memref<1x8x32xf32, #tpu.memory_space<vmem>>, %arg3: memref<64x32xbf16, #tpu.memory_space<vmem>>, %arg4: memref<23x32xf32, #tpu.memory_space<vmem>>, %arg5: memref<32x96xbf16, #tpu.memory_space<vmem>>, %arg6: memref<32x32xf32, #tpu.memory_space<vmem>>, %arg7: memref<32x32xbf16, #tpu.memory_space<vmem>>, %arg8: memref<32x32xbf16, #tpu.memory_space<vmem>>, %arg9: memref<32x32xbf16, #tpu.memory_space<vmem>>, %arg10: memref<7x32xf32, #tpu.memory_space<vmem>>, %arg11: memref<32x96xbf16, #tpu.memory_space<vmem>>, %arg12: memref<32x32xf32, #tpu.memory_space<vmem>>, %arg13: memref<32x32xbf16, #tpu.memory_space<vmem>>, %arg14: memref<32x32xbf16, #tpu.memory_space<vmem>>, %arg15: memref<1x8x32xf32, #tpu.memory_space<vmem>>) attributes {dimension_semantics = [#tpu.dimension_semantics<parallel>], iteration_bounds = array<i64: 2>, scalar_prefetch = 0 : i64, scratch_operands = 0 : i64, tpu.core_type = #tpu.core_type<tc>, window_params = [{transform_indices = @transform_0, window_bounds = array<i64: 1, 16, 64>}, {transform_indices = @transform_1, window_bounds = array<i64: 1, 8, 32>}, {pipeline_mode = #tpu.pipeline_mode<synchronous>, transform_indices = @transform_2, window_bounds = array<i64: 64, 32>}, {pipeline_mode = #tpu.pipeline_mode<synchronous>, transform_indices = @transform_3, window_bounds = array<i64: 23, 32>}, {pipeline_mode = #tpu.pipeline_mode<synchronous>, transform_indices = @transform_4, window_bounds = array<i64: 32, 96>}, {pipeline_mode = #tpu.pipeline_mode<synchronous>, transform_indices = @transform_5, window_bounds = array<i64: 32, 32>}, {pipeline_mode = #tpu.pipeline_mode<synchronous>, transform_indices = @transform_6, window_bounds = array<i64: 32, 32>}, {pipeline_mode = #tpu.pipeline_mode<synchronous>, transform_indices = @transform_7, window_bounds = array<i64: 32, 32>}, {pipeline_mode = #tpu.pipeline_mode<synchronous>, transform_indices = @transform_8, window_bounds = array<i64: 32, 32>}, {pipeline_mode = #tpu.pipeline_mode<synchronous>, transform_indices = @transform_9, window_bounds = array<i64: 7, 32>}, {pipeline_mode = #tpu.pipeline_mode<synchronous>, transform_indices = @transform_10, window_bounds = array<i64: 32, 96>}, {pipeline_mode = #tpu.pipeline_mode<synchronous>, transform_indices = @transform_11, window_bounds = array<i64: 32, 32>}, {pipeline_mode = #tpu.pipeline_mode<synchronous>, transform_indices = @transform_12, window_bounds = array<i64: 32, 32>}, {pipeline_mode = #tpu.pipeline_mode<synchronous>, transform_indices = @transform_13, window_bounds = array<i64: 32, 32>}, {transform_indices = @transform_14, window_bounds = array<i64: 1, 8, 32>}]} {
    %c0 = arith.constant 0 : index
    %c0_0 = arith.constant 0 : index
    %0 = vector.load %arg4[%c0, %c0_0] : memref<23x32xf32, #tpu.memory_space<vmem>>, vector<16x32xf32>
    %c16 = arith.constant 16 : index
    %c0_1 = arith.constant 0 : index
    %1 = vector.load %arg4[%c16, %c0_1] : memref<23x32xf32, #tpu.memory_space<vmem>>, vector<1x32xf32>
    %c17 = arith.constant 17 : index
    %c0_2 = arith.constant 0 : index
    %2 = vector.load %arg4[%c17, %c0_2] : memref<23x32xf32, #tpu.memory_space<vmem>>, vector<1x32xf32>
    %c18 = arith.constant 18 : index
    %c0_3 = arith.constant 0 : index
    %3 = vector.load %arg4[%c18, %c0_3] : memref<23x32xf32, #tpu.memory_space<vmem>>, vector<1x32xf32>
    %c19 = arith.constant 19 : index
    %c0_4 = arith.constant 0 : index
    %4 = vector.load %arg4[%c19, %c0_4] : memref<23x32xf32, #tpu.memory_space<vmem>>, vector<1x32xf32>
    %c20 = arith.constant 20 : index
    %c0_5 = arith.constant 0 : index
    %5 = vector.load %arg4[%c20, %c0_5] : memref<23x32xf32, #tpu.memory_space<vmem>>, vector<1x32xf32>
    %c21 = arith.constant 21 : index
    %c0_6 = arith.constant 0 : index
    %6 = vector.load %arg4[%c21, %c0_6] : memref<23x32xf32, #tpu.memory_space<vmem>>, vector<1x32xf32>
    %c22 = arith.constant 22 : index
    %c0_7 = arith.constant 0 : index
    %7 = vector.load %arg4[%c22, %c0_7] : memref<23x32xf32, #tpu.memory_space<vmem>>, vector<1x32xf32>
    %c0_8 = arith.constant 0 : index
    %c0_9 = arith.constant 0 : index
    %8 = vector.load %arg10[%c0_8, %c0_9] : memref<7x32xf32, #tpu.memory_space<vmem>>, vector<1x32xf32>
    %c1 = arith.constant 1 : index
    %c0_10 = arith.constant 0 : index
    %9 = vector.load %arg10[%c1, %c0_10] : memref<7x32xf32, #tpu.memory_space<vmem>>, vector<1x32xf32>
    %c2 = arith.constant 2 : index
    %c0_11 = arith.constant 0 : index
    %10 = vector.load %arg10[%c2, %c0_11] : memref<7x32xf32, #tpu.memory_space<vmem>>, vector<1x32xf32>
    %c3 = arith.constant 3 : index
    %c0_12 = arith.constant 0 : index
    %11 = vector.load %arg10[%c3, %c0_12] : memref<7x32xf32, #tpu.memory_space<vmem>>, vector<1x32xf32>
    %c4 = arith.constant 4 : index
    %c0_13 = arith.constant 0 : index
    %12 = vector.load %arg10[%c4, %c0_13] : memref<7x32xf32, #tpu.memory_space<vmem>>, vector<1x32xf32>
    %c5 = arith.constant 5 : index
    %c0_14 = arith.constant 0 : index
    %13 = vector.load %arg10[%c5, %c0_14] : memref<7x32xf32, #tpu.memory_space<vmem>>, vector<1x32xf32>
    %c6 = arith.constant 6 : index
    %c0_15 = arith.constant 0 : index
    %14 = vector.load %arg10[%c6, %c0_15] : memref<7x32xf32, #tpu.memory_space<vmem>>, vector<1x32xf32>
    %c0_16 = arith.constant 0 : index
    %c0_17 = arith.constant 0 : index
    %c0_18 = arith.constant 0 : index
    %15 = vector.load %arg1[%c0_16, %c0_17, %c0_18] : memref<1x16x64xf32, #tpu.memory_space<vmem>>, vector<1x16x64xf32>
    %16 = vector.shape_cast %15 : vector<1x16x64xf32> to vector<16x64xf32>
    %c0_19 = arith.constant 0 : index
    %c0_20 = arith.constant 0 : index
    %17 = vector.load %arg3[%c0_19, %c0_20] : memref<64x32xbf16, #tpu.memory_space<vmem>>, vector<64x32xbf16>
    %18 = arith.truncf %16 : vector<16x64xf32> to vector<16x64xbf16>
    %cst = arith.constant dense<0.000000e+00> : vector<16x32xf32>
    %19 = tpu.matmul %18, %17, %cst {dimension_numbers = #tpu.dot_dimension_numbers<[1], [0], [0], [1], [0, 0, 1, 1], [], []>} : vector<16x64xbf16>, vector<64x32xbf16>, vector<16x32xf32> -> vector<16x32xf32>
    %20 = vector.broadcast %1 : vector<1x32xf32> to vector<16x32xf32>
    %21 = arith.addf %19, %20 : vector<16x32xf32>
    %cst_21 = arith.constant 0.000000e+00 : f32
    %22 = vector.broadcast %cst_21 : f32 to vector<16x32xf32>
    %23 = arith.maximumf %21, %22 : vector<16x32xf32>
    %24 = vector.shape_cast %23 : vector<16x32xf32> to vector<1x16x32xf32>
    %25 = vector.shape_cast %0 : vector<16x32xf32> to vector<1x16x32xf32>
    %26 = arith.addf %24, %25 : vector<1x16x32xf32>
    %27 = vector.shape_cast %26 : vector<1x16x32xf32> to vector<16x32xf32>
    %c0_22 = arith.constant 0 : index
    %c0_23 = arith.constant 0 : index
    %28 = vector.load %arg5[%c0_22, %c0_23] : memref<32x96xbf16, #tpu.memory_space<vmem>>, vector<32x96xbf16>
    %29 = arith.truncf %27 : vector<16x32xf32> to vector<16x32xbf16>
    %cst_24 = arith.constant dense<0.000000e+00> : vector<16x96xf32>
    %30 = tpu.matmul %29, %28, %cst_24 {dimension_numbers = #tpu.dot_dimension_numbers<[1], [0], [0], [1], [0, 0, 1, 1], [], []>} : vector<16x32xbf16>, vector<32x96xbf16>, vector<16x96xf32> -> vector<16x96xf32>
    %31 = vector.shape_cast %30 : vector<16x96xf32> to vector<1x16x96xf32>
    %32 = vector.extract_strided_slice %31 {offsets = [0, 0, 0], sizes = [1, 16, 32], strides = [1, 1, 1]} : vector<1x16x96xf32> to vector<1x16x32xf32>
    %cst_25 = arith.constant 0.353553385 : f32
    %33 = vector.broadcast %cst_25 : f32 to vector<1x16x32xf32>
    %34 = arith.mulf %32, %33 : vector<1x16x32xf32>
    %35 = vector.extract_strided_slice %31 {offsets = [0, 0, 32], sizes = [1, 16, 32], strides = [1, 1, 1]} : vector<1x16x96xf32> to vector<1x16x32xf32>
    %36 = vector.extract_strided_slice %31 {offsets = [0, 0, 64], sizes = [1, 16, 32], strides = [1, 1, 1]} : vector<1x16x96xf32> to vector<1x16x32xf32>
    %37 = vector.extract_strided_slice %34 {offsets = [0, 0, 0], sizes = [1, 16, 8], strides = [1, 1, 1]} : vector<1x16x32xf32> to vector<1x16x8xf32>
    %38 = arith.truncf %37 : vector<1x16x8xf32> to vector<1x16x8xbf16>
    %39 = vector.extract_strided_slice %35 {offsets = [0, 0, 0], sizes = [1, 16, 8], strides = [1, 1, 1]} : vector<1x16x32xf32> to vector<1x16x8xf32>
    %40 = arith.truncf %39 : vector<1x16x8xf32> to vector<1x16x8xbf16>
    "tpu.trace_start"() <{level = 10 : i32, message = "bqd,bkd->bqk"}> : () -> ()
    %cst_26 = arith.constant dense<0.000000e+00> : vector<1x16x16xf32>
    %41 = tpu.matmul %38, %40, %cst_26 {dimension_numbers = #tpu.dot_dimension_numbers<[2], [2], [1], [1], [0, 0, 0, 1, 1, 1], [0], [0]>} : vector<1x16x8xbf16>, vector<1x16x8xbf16>, vector<1x16x16xf32> -> vector<1x16x16xf32>
    "tpu.trace_stop"() : () -> ()
    %cst_27 = arith.constant dense<0xFF800000> : vector<1x16xf32>
    %42 = vector.multi_reduction <maximumf>, %41, %cst_27 [2] : vector<1x16x16xf32> to vector<1x16xf32>
    %43 = vector.shape_cast %42 : vector<1x16xf32> to vector<1x16x1xf32>
    %44 = vector.broadcast %43 : vector<1x16x1xf32> to vector<1x16x16xf32>
    %45 = arith.subf %41, %44 : vector<1x16x16xf32>
    %46 = math.exp %45 : vector<1x16x16xf32>
    %cst_28 = arith.constant dense<0.000000e+00> : vector<1x16xf32>
    %47 = vector.multi_reduction <add>, %46, %cst_28 [2] : vector<1x16x16xf32> to vector<1x16xf32>
    %48 = vector.shape_cast %47 : vector<1x16xf32> to vector<1x16x1xf32>
    %49 = tpu.reciprocal %48 {approx = true} : vector<1x16x1xf32> -> vector<1x16x1xf32>
    %50 = vector.broadcast %49 : vector<1x16x1xf32> to vector<1x16x16xf32>
    %51 = arith.mulf %46, %50 : vector<1x16x16xf32>
    %52 = arith.truncf %51 : vector<1x16x16xf32> to vector<1x16x16xbf16>
    %53 = vector.extract_strided_slice %36 {offsets = [0, 0, 0], sizes = [1, 16, 8], strides = [1, 1, 1]} : vector<1x16x32xf32> to vector<1x16x8xf32>
    %54 = arith.truncf %53 : vector<1x16x8xf32> to vector<1x16x8xbf16>
    "tpu.trace_start"() <{level = 10 : i32, message = "bqk,bkd->bqd"}> : () -> ()
    %cst_29 = arith.constant dense<0.000000e+00> : vector<1x16x8xf32>
    %55 = tpu.matmul %52, %54, %cst_29 {dimension_numbers = #tpu.dot_dimension_numbers<[2], [1], [1], [2], [0, 0, 0, 1, 1, 2], [0], [0]>} : vector<1x16x16xbf16>, vector<1x16x8xbf16>, vector<1x16x8xf32> -> vector<1x16x8xf32>
    "tpu.trace_stop"() : () -> ()
    %56 = vector.shape_cast %55 : vector<1x16x8xf32> to vector<16x8xf32>
    %c0_30 = arith.constant 0 : index
    %c0_31 = arith.constant 0 : index
    %57 = vector.load %arg6[%c0_30, %c0_31] : memref<32x32xf32, #tpu.memory_space<vmem>>, vector<8x32xf32>
    %58 = arith.truncf %56 : vector<16x8xf32> to vector<16x8xbf16>
    %59 = arith.truncf %57 : vector<8x32xf32> to vector<8x32xbf16>
    %cst_32 = arith.constant dense<0.000000e+00> : vector<16x32xf32>
    %60 = tpu.matmul %58, %59, %cst_32 {dimension_numbers = #tpu.dot_dimension_numbers<[1], [0], [0], [1], [0, 0, 1, 1], [], []>} : vector<16x8xbf16>, vector<8x32xbf16>, vector<16x32xf32> -> vector<16x32xf32>
    %61 = vector.extract_strided_slice %34 {offsets = [0, 0, 8], sizes = [1, 16, 8], strides = [1, 1, 1]} : vector<1x16x32xf32> to vector<1x16x8xf32>
    %62 = arith.truncf %61 : vector<1x16x8xf32> to vector<1x16x8xbf16>
    %63 = vector.extract_strided_slice %35 {offsets = [0, 0, 8], sizes = [1, 16, 8], strides = [1, 1, 1]} : vector<1x16x32xf32> to vector<1x16x8xf32>
    %64 = arith.truncf %63 : vector<1x16x8xf32> to vector<1x16x8xbf16>
    "tpu.trace_start"() <{level = 10 : i32, message = "bqd,bkd->bqk"}> : () -> ()
    %cst_33 = arith.constant dense<0.000000e+00> : vector<1x16x16xf32>
    %65 = tpu.matmul %62, %64, %cst_33 {dimension_numbers = #tpu.dot_dimension_numbers<[2], [2], [1], [1], [0, 0, 0, 1, 1, 1], [0], [0]>} : vector<1x16x8xbf16>, vector<1x16x8xbf16>, vector<1x16x16xf32> -> vector<1x16x16xf32>
    "tpu.trace_stop"() : () -> ()
    %cst_34 = arith.constant dense<0xFF800000> : vector<1x16xf32>
    %66 = vector.multi_reduction <maximumf>, %65, %cst_34 [2] : vector<1x16x16xf32> to vector<1x16xf32>
    %67 = vector.shape_cast %66 : vector<1x16xf32> to vector<1x16x1xf32>
    %68 = vector.broadcast %67 : vector<1x16x1xf32> to vector<1x16x16xf32>
    %69 = arith.subf %65, %68 : vector<1x16x16xf32>
    %70 = math.exp %69 : vector<1x16x16xf32>
    %cst_35 = arith.constant dense<0.000000e+00> : vector<1x16xf32>
    %71 = vector.multi_reduction <add>, %70, %cst_35 [2] : vector<1x16x16xf32> to vector<1x16xf32>
    %72 = vector.shape_cast %71 : vector<1x16xf32> to vector<1x16x1xf32>
    %73 = tpu.reciprocal %72 {approx = true} : vector<1x16x1xf32> -> vector<1x16x1xf32>
    %74 = vector.broadcast %73 : vector<1x16x1xf32> to vector<1x16x16xf32>
    %75 = arith.mulf %70, %74 : vector<1x16x16xf32>
    %76 = arith.truncf %75 : vector<1x16x16xf32> to vector<1x16x16xbf16>
    %77 = vector.extract_strided_slice %36 {offsets = [0, 0, 8], sizes = [1, 16, 8], strides = [1, 1, 1]} : vector<1x16x32xf32> to vector<1x16x8xf32>
    %78 = arith.truncf %77 : vector<1x16x8xf32> to vector<1x16x8xbf16>
    "tpu.trace_start"() <{level = 10 : i32, message = "bqk,bkd->bqd"}> : () -> ()
    %cst_36 = arith.constant dense<0.000000e+00> : vector<1x16x8xf32>
    %79 = tpu.matmul %76, %78, %cst_36 {dimension_numbers = #tpu.dot_dimension_numbers<[2], [1], [1], [2], [0, 0, 0, 1, 1, 2], [0], [0]>} : vector<1x16x16xbf16>, vector<1x16x8xbf16>, vector<1x16x8xf32> -> vector<1x16x8xf32>
    "tpu.trace_stop"() : () -> ()
    %80 = vector.shape_cast %79 : vector<1x16x8xf32> to vector<16x8xf32>
    %c8 = arith.constant 8 : index
    %c0_37 = arith.constant 0 : index
    %81 = vector.load %arg6[%c8, %c0_37] : memref<32x32xf32, #tpu.memory_space<vmem>>, vector<8x32xf32>
    %82 = arith.truncf %80 : vector<16x8xf32> to vector<16x8xbf16>
    %83 = arith.truncf %81 : vector<8x32xf32> to vector<8x32xbf16>
    %cst_38 = arith.constant dense<0.000000e+00> : vector<16x32xf32>
    %84 = tpu.matmul %82, %83, %cst_38 {dimension_numbers = #tpu.dot_dimension_numbers<[1], [0], [0], [1], [0, 0, 1, 1], [], []>} : vector<16x8xbf16>, vector<8x32xbf16>, vector<16x32xf32> -> vector<16x32xf32>
    %85 = arith.addf %60, %84 : vector<16x32xf32>
    %86 = vector.extract_strided_slice %34 {offsets = [0, 0, 16], sizes = [1, 16, 8], strides = [1, 1, 1]} : vector<1x16x32xf32> to vector<1x16x8xf32>
    %87 = arith.truncf %86 : vector<1x16x8xf32> to vector<1x16x8xbf16>
    %88 = vector.extract_strided_slice %35 {offsets = [0, 0, 16], sizes = [1, 16, 8], strides = [1, 1, 1]} : vector<1x16x32xf32> to vector<1x16x8xf32>
    %89 = arith.truncf %88 : vector<1x16x8xf32> to vector<1x16x8xbf16>
    "tpu.trace_start"() <{level = 10 : i32, message = "bqd,bkd->bqk"}> : () -> ()
    %cst_39 = arith.constant dense<0.000000e+00> : vector<1x16x16xf32>
    %90 = tpu.matmul %87, %89, %cst_39 {dimension_numbers = #tpu.dot_dimension_numbers<[2], [2], [1], [1], [0, 0, 0, 1, 1, 1], [0], [0]>} : vector<1x16x8xbf16>, vector<1x16x8xbf16>, vector<1x16x16xf32> -> vector<1x16x16xf32>
    "tpu.trace_stop"() : () -> ()
    %cst_40 = arith.constant dense<0xFF800000> : vector<1x16xf32>
    %91 = vector.multi_reduction <maximumf>, %90, %cst_40 [2] : vector<1x16x16xf32> to vector<1x16xf32>
    %92 = vector.shape_cast %91 : vector<1x16xf32> to vector<1x16x1xf32>
    %93 = vector.broadcast %92 : vector<1x16x1xf32> to vector<1x16x16xf32>
    %94 = arith.subf %90, %93 : vector<1x16x16xf32>
    %95 = math.exp %94 : vector<1x16x16xf32>
    %cst_41 = arith.constant dense<0.000000e+00> : vector<1x16xf32>
    %96 = vector.multi_reduction <add>, %95, %cst_41 [2] : vector<1x16x16xf32> to vector<1x16xf32>
    %97 = vector.shape_cast %96 : vector<1x16xf32> to vector<1x16x1xf32>
    %98 = tpu.reciprocal %97 {approx = true} : vector<1x16x1xf32> -> vector<1x16x1xf32>
    %99 = vector.broadcast %98 : vector<1x16x1xf32> to vector<1x16x16xf32>
    %100 = arith.mulf %95, %99 : vector<1x16x16xf32>
    %101 = arith.truncf %100 : vector<1x16x16xf32> to vector<1x16x16xbf16>
    %102 = vector.extract_strided_slice %36 {offsets = [0, 0, 16], sizes = [1, 16, 8], strides = [1, 1, 1]} : vector<1x16x32xf32> to vector<1x16x8xf32>
    %103 = arith.truncf %102 : vector<1x16x8xf32> to vector<1x16x8xbf16>
    "tpu.trace_start"() <{level = 10 : i32, message = "bqk,bkd->bqd"}> : () -> ()
    %cst_42 = arith.constant dense<0.000000e+00> : vector<1x16x8xf32>
    %104 = tpu.matmul %101, %103, %cst_42 {dimension_numbers = #tpu.dot_dimension_numbers<[2], [1], [1], [2], [0, 0, 0, 1, 1, 2], [0], [0]>} : vector<1x16x16xbf16>, vector<1x16x8xbf16>, vector<1x16x8xf32> -> vector<1x16x8xf32>
    "tpu.trace_stop"() : () -> ()
    %105 = vector.shape_cast %104 : vector<1x16x8xf32> to vector<16x8xf32>
    %c16_43 = arith.constant 16 : index
    %c0_44 = arith.constant 0 : index
    %106 = vector.load %arg6[%c16_43, %c0_44] : memref<32x32xf32, #tpu.memory_space<vmem>>, vector<8x32xf32>
    %107 = arith.truncf %105 : vector<16x8xf32> to vector<16x8xbf16>
    %108 = arith.truncf %106 : vector<8x32xf32> to vector<8x32xbf16>
    %cst_45 = arith.constant dense<0.000000e+00> : vector<16x32xf32>
    %109 = tpu.matmul %107, %108, %cst_45 {dimension_numbers = #tpu.dot_dimension_numbers<[1], [0], [0], [1], [0, 0, 1, 1], [], []>} : vector<16x8xbf16>, vector<8x32xbf16>, vector<16x32xf32> -> vector<16x32xf32>
    %110 = arith.addf %85, %109 : vector<16x32xf32>
    %111 = vector.extract_strided_slice %34 {offsets = [0, 0, 24], sizes = [1, 16, 8], strides = [1, 1, 1]} : vector<1x16x32xf32> to vector<1x16x8xf32>
    %112 = arith.truncf %111 : vector<1x16x8xf32> to vector<1x16x8xbf16>
    %113 = vector.extract_strided_slice %35 {offsets = [0, 0, 24], sizes = [1, 16, 8], strides = [1, 1, 1]} : vector<1x16x32xf32> to vector<1x16x8xf32>
    %114 = arith.truncf %113 : vector<1x16x8xf32> to vector<1x16x8xbf16>
    "tpu.trace_start"() <{level = 10 : i32, message = "bqd,bkd->bqk"}> : () -> ()
    %cst_46 = arith.constant dense<0.000000e+00> : vector<1x16x16xf32>
    %115 = tpu.matmul %112, %114, %cst_46 {dimension_numbers = #tpu.dot_dimension_numbers<[2], [2], [1], [1], [0, 0, 0, 1, 1, 1], [0], [0]>} : vector<1x16x8xbf16>, vector<1x16x8xbf16>, vector<1x16x16xf32> -> vector<1x16x16xf32>
    "tpu.trace_stop"() : () -> ()
    %cst_47 = arith.constant dense<0xFF800000> : vector<1x16xf32>
    %116 = vector.multi_reduction <maximumf>, %115, %cst_47 [2] : vector<1x16x16xf32> to vector<1x16xf32>
    %117 = vector.shape_cast %116 : vector<1x16xf32> to vector<1x16x1xf32>
    %118 = vector.broadcast %117 : vector<1x16x1xf32> to vector<1x16x16xf32>
    %119 = arith.subf %115, %118 : vector<1x16x16xf32>
    %120 = math.exp %119 : vector<1x16x16xf32>
    %cst_48 = arith.constant dense<0.000000e+00> : vector<1x16xf32>
    %121 = vector.multi_reduction <add>, %120, %cst_48 [2] : vector<1x16x16xf32> to vector<1x16xf32>
    %122 = vector.shape_cast %121 : vector<1x16xf32> to vector<1x16x1xf32>
    %123 = tpu.reciprocal %122 {approx = true} : vector<1x16x1xf32> -> vector<1x16x1xf32>
    %124 = vector.broadcast %123 : vector<1x16x1xf32> to vector<1x16x16xf32>
    %125 = arith.mulf %120, %124 : vector<1x16x16xf32>
    %126 = arith.truncf %125 : vector<1x16x16xf32> to vector<1x16x16xbf16>
    %127 = vector.extract_strided_slice %36 {offsets = [0, 0, 24], sizes = [1, 16, 8], strides = [1, 1, 1]} : vector<1x16x32xf32> to vector<1x16x8xf32>
    %128 = arith.truncf %127 : vector<1x16x8xf32> to vector<1x16x8xbf16>
    "tpu.trace_start"() <{level = 10 : i32, message = "bqk,bkd->bqd"}> : () -> ()
    %cst_49 = arith.constant dense<0.000000e+00> : vector<1x16x8xf32>
    %129 = tpu.matmul %126, %128, %cst_49 {dimension_numbers = #tpu.dot_dimension_numbers<[2], [1], [1], [2], [0, 0, 0, 1, 1, 2], [0], [0]>} : vector<1x16x16xbf16>, vector<1x16x8xbf16>, vector<1x16x8xf32> -> vector<1x16x8xf32>
    "tpu.trace_stop"() : () -> ()
    %130 = vector.shape_cast %129 : vector<1x16x8xf32> to vector<16x8xf32>
    %c24 = arith.constant 24 : index
    %c0_50 = arith.constant 0 : index
    %131 = vector.load %arg6[%c24, %c0_50] : memref<32x32xf32, #tpu.memory_space<vmem>>, vector<8x32xf32>
    %132 = arith.truncf %130 : vector<16x8xf32> to vector<16x8xbf16>
    %133 = arith.truncf %131 : vector<8x32xf32> to vector<8x32xbf16>
    %cst_51 = arith.constant dense<0.000000e+00> : vector<16x32xf32>
    %134 = tpu.matmul %132, %133, %cst_51 {dimension_numbers = #tpu.dot_dimension_numbers<[1], [0], [0], [1], [0, 0, 1, 1], [], []>} : vector<16x8xbf16>, vector<8x32xbf16>, vector<16x32xf32> -> vector<16x32xf32>
    %135 = arith.addf %110, %134 : vector<16x32xf32>
    %136 = arith.addf %135, %27 : vector<16x32xf32>
    %cst_52 = arith.constant dense<0.000000e+00> : vector<16xf32>
    %137 = vector.multi_reduction <add>, %136, %cst_52 [1] : vector<16x32xf32> to vector<16xf32>
    %138 = vector.shape_cast %137 : vector<16xf32> to vector<16x1xf32>
    %cst_53 = arith.constant 3.200000e+01 : f32
    %139 = vector.broadcast %cst_53 : f32 to vector<16x1xf32>
    %140 = arith.divf %138, %139 : vector<16x1xf32>
    %141 = vector.broadcast %140 : vector<16x1xf32> to vector<16x32xf32>
    %142 = arith.subf %136, %141 : vector<16x32xf32>
    %143 = arith.mulf %142, %142 : vector<16x32xf32>
    %cst_54 = arith.constant dense<0.000000e+00> : vector<16xf32>
    %144 = vector.multi_reduction <add>, %143, %cst_54 [1] : vector<16x32xf32> to vector<16xf32>
    %145 = vector.shape_cast %144 : vector<16xf32> to vector<16x1xf32>
    %cst_55 = arith.constant 3.200000e+01 : f32
    %146 = vector.broadcast %cst_55 : f32 to vector<16x1xf32>
    %147 = arith.divf %145, %146 : vector<16x1xf32>
    %148 = vector.broadcast %140 : vector<16x1xf32> to vector<16x32xf32>
    %149 = arith.subf %136, %148 : vector<16x32xf32>
    %cst_56 = arith.constant 9.99999997E-7 : f32
    %150 = vector.broadcast %cst_56 : f32 to vector<16x1xf32>
    %151 = arith.addf %147, %150 : vector<16x1xf32>
    %152 = math.rsqrt %151 : vector<16x1xf32>
    %153 = vector.broadcast %152 : vector<16x1xf32> to vector<16x32xf32>
    %154 = arith.mulf %149, %153 : vector<16x32xf32>
    %155 = vector.broadcast %2 : vector<1x32xf32> to vector<16x32xf32>
    %156 = arith.mulf %154, %155 : vector<16x32xf32>
    %157 = vector.broadcast %3 : vector<1x32xf32> to vector<16x32xf32>
    %158 = arith.addf %156, %157 : vector<16x32xf32>
    %c0_57 = arith.constant 0 : index
    %c0_58 = arith.constant 0 : index
    %159 = vector.load %arg7[%c0_57, %c0_58] : memref<32x32xbf16, #tpu.memory_space<vmem>>, vector<32x32xbf16>
    %160 = arith.truncf %158 : vector<16x32xf32> to vector<16x32xbf16>
    %cst_59 = arith.constant dense<0.000000e+00> : vector<16x32xf32>
    %161 = tpu.matmul %160, %159, %cst_59 {dimension_numbers = #tpu.dot_dimension_numbers<[1], [0], [0], [1], [0, 0, 1, 1], [], []>} : vector<16x32xbf16>, vector<32x32xbf16>, vector<16x32xf32> -> vector<16x32xf32>
    %162 = vector.broadcast %4 : vector<1x32xf32> to vector<16x32xf32>
    %163 = arith.addf %161, %162 : vector<16x32xf32>
    %cst_60 = arith.constant 0.000000e+00 : f32
    %164 = vector.broadcast %cst_60 : f32 to vector<16x32xf32>
    %165 = arith.maximumf %163, %164 : vector<16x32xf32>
    %c0_61 = arith.constant 0 : index
    %c0_62 = arith.constant 0 : index
    %166 = vector.load %arg8[%c0_61, %c0_62] : memref<32x32xbf16, #tpu.memory_space<vmem>>, vector<32x32xbf16>
    %167 = arith.truncf %165 : vector<16x32xf32> to vector<16x32xbf16>
    %cst_63 = arith.constant dense<0.000000e+00> : vector<16x32xf32>
    %168 = tpu.matmul %167, %166, %cst_63 {dimension_numbers = #tpu.dot_dimension_numbers<[1], [0], [0], [1], [0, 0, 1, 1], [], []>} : vector<16x32xbf16>, vector<32x32xbf16>, vector<16x32xf32> -> vector<16x32xf32>
    %169 = vector.broadcast %5 : vector<1x32xf32> to vector<16x32xf32>
    %170 = arith.addf %168, %169 : vector<16x32xf32>
    %171 = arith.addf %170, %158 : vector<16x32xf32>
    %cst_64 = arith.constant dense<0.000000e+00> : vector<16xf32>
    %172 = vector.multi_reduction <add>, %171, %cst_64 [1] : vector<16x32xf32> to vector<16xf32>
    %173 = vector.shape_cast %172 : vector<16xf32> to vector<16x1xf32>
    %cst_65 = arith.constant 3.200000e+01 : f32
    %174 = vector.broadcast %cst_65 : f32 to vector<16x1xf32>
    %175 = arith.divf %173, %174 : vector<16x1xf32>
    %176 = vector.broadcast %175 : vector<16x1xf32> to vector<16x32xf32>
    %177 = arith.subf %171, %176 : vector<16x32xf32>
    %178 = arith.mulf %177, %177 : vector<16x32xf32>
    %cst_66 = arith.constant dense<0.000000e+00> : vector<16xf32>
    %179 = vector.multi_reduction <add>, %178, %cst_66 [1] : vector<16x32xf32> to vector<16xf32>
    %180 = vector.shape_cast %179 : vector<16xf32> to vector<16x1xf32>
    %cst_67 = arith.constant 3.200000e+01 : f32
    %181 = vector.broadcast %cst_67 : f32 to vector<16x1xf32>
    %182 = arith.divf %180, %181 : vector<16x1xf32>
    %183 = vector.broadcast %175 : vector<16x1xf32> to vector<16x32xf32>
    %184 = arith.subf %171, %183 : vector<16x32xf32>
    %cst_68 = arith.constant 9.99999997E-7 : f32
    %185 = vector.broadcast %cst_68 : f32 to vector<16x1xf32>
    %186 = arith.addf %182, %185 : vector<16x1xf32>
    %187 = math.rsqrt %186 : vector<16x1xf32>
    %188 = vector.broadcast %187 : vector<16x1xf32> to vector<16x32xf32>
    %189 = arith.mulf %184, %188 : vector<16x32xf32>
    %190 = vector.broadcast %6 : vector<1x32xf32> to vector<16x32xf32>
    %191 = arith.mulf %189, %190 : vector<16x32xf32>
    %192 = vector.broadcast %7 : vector<1x32xf32> to vector<16x32xf32>
    %193 = arith.addf %191, %192 : vector<16x32xf32>
    %194 = vector.shape_cast %193 : vector<16x32xf32> to vector<1x16x32xf32>
    %195 = vector.shape_cast %194 : vector<1x16x32xf32> to vector<16x32xf32>
    %c0_69 = arith.constant 0 : index
    %c0_70 = arith.constant 0 : index
    %196 = vector.load %arg9[%c0_69, %c0_70] : memref<32x32xbf16, #tpu.memory_space<vmem>>, vector<32x32xbf16>
    %197 = arith.truncf %195 : vector<16x32xf32> to vector<16x32xbf16>
    %cst_71 = arith.constant dense<0.000000e+00> : vector<16x32xf32>
    %198 = tpu.matmul %197, %196, %cst_71 {dimension_numbers = #tpu.dot_dimension_numbers<[1], [0], [0], [1], [0, 0, 1, 1], [], []>} : vector<16x32xbf16>, vector<32x32xbf16>, vector<16x32xf32> -> vector<16x32xf32>
    %199 = vector.broadcast %8 : vector<1x32xf32> to vector<16x32xf32>
    %200 = arith.addf %198, %199 : vector<16x32xf32>
    %201 = vector.shape_cast %200 : vector<16x32xf32> to vector<1x16x32xf32>
    %c0_72 = arith.constant 0 : index
    %c0_73 = arith.constant 0 : index
    %c0_74 = arith.constant 0 : index
    %202 = vector.load %arg2[%c0_72, %c0_73, %c0_74] : memref<1x8x32xf32, #tpu.memory_space<vmem>>, vector<1x8x32xf32>
    %203 = vector.shape_cast %202 : vector<1x8x32xf32> to vector<8x32xf32>
    %c0_75 = arith.constant 0 : index
    %c0_76 = arith.constant 0 : index
    %204 = vector.load %arg11[%c0_75, %c0_76] : memref<32x96xbf16, #tpu.memory_space<vmem>>, vector<32x96xbf16>
    %205 = arith.truncf %203 : vector<8x32xf32> to vector<8x32xbf16>
    %cst_77 = arith.constant dense<0.000000e+00> : vector<8x96xf32>
    %206 = tpu.matmul %205, %204, %cst_77 {dimension_numbers = #tpu.dot_dimension_numbers<[1], [0], [0], [1], [0, 0, 1, 1], [], []>} : vector<8x32xbf16>, vector<32x96xbf16>, vector<8x96xf32> -> vector<8x96xf32>
    %207 = vector.shape_cast %206 : vector<8x96xf32> to vector<1x8x96xf32>
    %208 = vector.shape_cast %201 : vector<1x16x32xf32> to vector<16x32xf32>
    %c0_78 = arith.constant 0 : index
    %c0_79 = arith.constant 0 : index
    %209 = vector.load %arg11[%c0_78, %c0_79] : memref<32x96xbf16, #tpu.memory_space<vmem>>, vector<32x96xbf16>
    %210 = arith.truncf %208 : vector<16x32xf32> to vector<16x32xbf16>
    %cst_80 = arith.constant dense<0.000000e+00> : vector<16x96xf32>
    %211 = tpu.matmul %210, %209, %cst_80 {dimension_numbers = #tpu.dot_dimension_numbers<[1], [0], [0], [1], [0, 0, 1, 1], [], []>} : vector<16x32xbf16>, vector<32x96xbf16>, vector<16x96xf32> -> vector<16x96xf32>
    %212 = vector.shape_cast %211 : vector<16x96xf32> to vector<1x16x96xf32>
    %213 = vector.extract_strided_slice %207 {offsets = [0, 0, 0], sizes = [1, 8, 32], strides = [1, 1, 1]} : vector<1x8x96xf32> to vector<1x8x32xf32>
    %cst_81 = arith.constant 0.353553385 : f32
    %214 = vector.broadcast %cst_81 : f32 to vector<1x8x32xf32>
    %215 = arith.mulf %213, %214 : vector<1x8x32xf32>
    %216 = vector.extract_strided_slice %207 {offsets = [0, 0, 32], sizes = [1, 8, 32], strides = [1, 1, 1]} : vector<1x8x96xf32> to vector<1x8x32xf32>
    %217 = vector.extract_strided_slice %207 {offsets = [0, 0, 64], sizes = [1, 8, 32], strides = [1, 1, 1]} : vector<1x8x96xf32> to vector<1x8x32xf32>
    %218 = vector.extract_strided_slice %212 {offsets = [0, 0, 32], sizes = [1, 16, 32], strides = [1, 1, 1]} : vector<1x16x96xf32> to vector<1x16x32xf32>
    %219 = vector.extract_strided_slice %212 {offsets = [0, 0, 64], sizes = [1, 16, 32], strides = [1, 1, 1]} : vector<1x16x96xf32> to vector<1x16x32xf32>
    %220 = vector.extract_strided_slice %215 {offsets = [0, 0, 0], sizes = [1, 8, 8], strides = [1, 1, 1]} : vector<1x8x32xf32> to vector<1x8x8xf32>
    %221 = vector.extract_strided_slice %216 {offsets = [0, 0, 0], sizes = [1, 8, 8], strides = [1, 1, 1]} : vector<1x8x32xf32> to vector<1x8x8xf32>
    %222 = arith.mulf %220, %221 : vector<1x8x8xf32>
    %cst_82 = arith.constant dense<0.000000e+00> : vector<1x8xf32>
    %223 = vector.multi_reduction <add>, %222, %cst_82 [2] : vector<1x8x8xf32> to vector<1x8xf32>
    %224 = vector.shape_cast %223 : vector<1x8xf32> to vector<1x8x1xf32>
    %225 = arith.truncf %220 : vector<1x8x8xf32> to vector<1x8x8xbf16>
    %226 = vector.extract_strided_slice %218 {offsets = [0, 0, 0], sizes = [1, 16, 8], strides = [1, 1, 1]} : vector<1x16x32xf32> to vector<1x16x8xf32>
    %227 = arith.truncf %226 : vector<1x16x8xf32> to vector<1x16x8xbf16>
    "tpu.trace_start"() <{level = 10 : i32, message = "bvd,bgd->bvg"}> : () -> ()
    %cst_83 = arith.constant dense<0.000000e+00> : vector<1x8x16xf32>
    %228 = tpu.matmul %225, %227, %cst_83 {dimension_numbers = #tpu.dot_dimension_numbers<[2], [2], [1], [1], [0, 0, 0, 1, 1, 1], [0], [0]>} : vector<1x8x8xbf16>, vector<1x16x8xbf16>, vector<1x8x16xf32> -> vector<1x8x16xf32>
    "tpu.trace_stop"() : () -> ()
    %cst_84 = arith.constant dense<0xFF800000> : vector<1x8xf32>
    %229 = vector.multi_reduction <maximumf>, %228, %cst_84 [2] : vector<1x8x16xf32> to vector<1x8xf32>
    %230 = vector.shape_cast %229 : vector<1x8xf32> to vector<1x8x1xf32>
    %231 = arith.maximumf %230, %224 : vector<1x8x1xf32>
    %232 = arith.subf %224, %231 : vector<1x8x1xf32>
    %233 = math.exp %232 : vector<1x8x1xf32>
    %234 = vector.broadcast %231 : vector<1x8x1xf32> to vector<1x8x16xf32>
    %235 = arith.subf %228, %234 : vector<1x8x16xf32>
    %236 = math.exp %235 : vector<1x8x16xf32>
    %cst_85 = arith.constant dense<0.000000e+00> : vector<1x8xf32>
    %237 = vector.multi_reduction <add>, %236, %cst_85 [2] : vector<1x8x16xf32> to vector<1x8xf32>
    %238 = vector.shape_cast %237 : vector<1x8xf32> to vector<1x8x1xf32>
    %239 = arith.addf %233, %238 : vector<1x8x1xf32>
    %240 = tpu.reciprocal %239 {approx = true} : vector<1x8x1xf32> -> vector<1x8x1xf32>
    %241 = vector.extract_strided_slice %217 {offsets = [0, 0, 0], sizes = [1, 8, 8], strides = [1, 1, 1]} : vector<1x8x32xf32> to vector<1x8x8xf32>
    %242 = vector.broadcast %233 : vector<1x8x1xf32> to vector<1x8x8xf32>
    %243 = arith.mulf %242, %241 : vector<1x8x8xf32>
    %244 = arith.truncf %236 : vector<1x8x16xf32> to vector<1x8x16xbf16>
    %245 = vector.extract_strided_slice %219 {offsets = [0, 0, 0], sizes = [1, 16, 8], strides = [1, 1, 1]} : vector<1x16x32xf32> to vector<1x16x8xf32>
    %246 = arith.truncf %245 : vector<1x16x8xf32> to vector<1x16x8xbf16>
    "tpu.trace_start"() <{level = 10 : i32, message = "bvg,bgd->bvd"}> : () -> ()
    %cst_86 = arith.constant dense<0.000000e+00> : vector<1x8x8xf32>
    %247 = tpu.matmul %244, %246, %cst_86 {dimension_numbers = #tpu.dot_dimension_numbers<[2], [1], [1], [2], [0, 0, 0, 1, 1, 2], [0], [0]>} : vector<1x8x16xbf16>, vector<1x16x8xbf16>, vector<1x8x8xf32> -> vector<1x8x8xf32>
    "tpu.trace_stop"() : () -> ()
    %248 = arith.addf %243, %247 : vector<1x8x8xf32>
    %249 = vector.broadcast %240 : vector<1x8x1xf32> to vector<1x8x8xf32>
    %250 = arith.mulf %248, %249 : vector<1x8x8xf32>
    %251 = vector.shape_cast %250 : vector<1x8x8xf32> to vector<8x8xf32>
    %c0_87 = arith.constant 0 : index
    %c0_88 = arith.constant 0 : index
    %252 = vector.load %arg12[%c0_87, %c0_88] : memref<32x32xf32, #tpu.memory_space<vmem>>, vector<8x32xf32>
    %253 = arith.truncf %251 : vector<8x8xf32> to vector<8x8xbf16>
    %254 = arith.truncf %252 : vector<8x32xf32> to vector<8x32xbf16>
    %cst_89 = arith.constant dense<0.000000e+00> : vector<8x32xf32>
    %255 = tpu.matmul %253, %254, %cst_89 {dimension_numbers = #tpu.dot_dimension_numbers<[1], [0], [0], [1], [0, 0, 1, 1], [], []>} : vector<8x8xbf16>, vector<8x32xbf16>, vector<8x32xf32> -> vector<8x32xf32>
    %256 = vector.extract_strided_slice %215 {offsets = [0, 0, 8], sizes = [1, 8, 8], strides = [1, 1, 1]} : vector<1x8x32xf32> to vector<1x8x8xf32>
    %257 = vector.extract_strided_slice %216 {offsets = [0, 0, 8], sizes = [1, 8, 8], strides = [1, 1, 1]} : vector<1x8x32xf32> to vector<1x8x8xf32>
    %258 = arith.mulf %256, %257 : vector<1x8x8xf32>
    %cst_90 = arith.constant dense<0.000000e+00> : vector<1x8xf32>
    %259 = vector.multi_reduction <add>, %258, %cst_90 [2] : vector<1x8x8xf32> to vector<1x8xf32>
    %260 = vector.shape_cast %259 : vector<1x8xf32> to vector<1x8x1xf32>
    %261 = arith.truncf %256 : vector<1x8x8xf32> to vector<1x8x8xbf16>
    %262 = vector.extract_strided_slice %218 {offsets = [0, 0, 8], sizes = [1, 16, 8], strides = [1, 1, 1]} : vector<1x16x32xf32> to vector<1x16x8xf32>
    %263 = arith.truncf %262 : vector<1x16x8xf32> to vector<1x16x8xbf16>
    "tpu.trace_start"() <{level = 10 : i32, message = "bvd,bgd->bvg"}> : () -> ()
    %cst_91 = arith.constant dense<0.000000e+00> : vector<1x8x16xf32>
    %264 = tpu.matmul %261, %263, %cst_91 {dimension_numbers = #tpu.dot_dimension_numbers<[2], [2], [1], [1], [0, 0, 0, 1, 1, 1], [0], [0]>} : vector<1x8x8xbf16>, vector<1x16x8xbf16>, vector<1x8x16xf32> -> vector<1x8x16xf32>
    "tpu.trace_stop"() : () -> ()
    %cst_92 = arith.constant dense<0xFF800000> : vector<1x8xf32>
    %265 = vector.multi_reduction <maximumf>, %264, %cst_92 [2] : vector<1x8x16xf32> to vector<1x8xf32>
    %266 = vector.shape_cast %265 : vector<1x8xf32> to vector<1x8x1xf32>
    %267 = arith.maximumf %266, %260 : vector<1x8x1xf32>
    %268 = arith.subf %260, %267 : vector<1x8x1xf32>
    %269 = math.exp %268 : vector<1x8x1xf32>
    %270 = vector.broadcast %267 : vector<1x8x1xf32> to vector<1x8x16xf32>
    %271 = arith.subf %264, %270 : vector<1x8x16xf32>
    %272 = math.exp %271 : vector<1x8x16xf32>
    %cst_93 = arith.constant dense<0.000000e+00> : vector<1x8xf32>
    %273 = vector.multi_reduction <add>, %272, %cst_93 [2] : vector<1x8x16xf32> to vector<1x8xf32>
    %274 = vector.shape_cast %273 : vector<1x8xf32> to vector<1x8x1xf32>
    %275 = arith.addf %269, %274 : vector<1x8x1xf32>
    %276 = tpu.reciprocal %275 {approx = true} : vector<1x8x1xf32> -> vector<1x8x1xf32>
    %277 = vector.extract_strided_slice %217 {offsets = [0, 0, 8], sizes = [1, 8, 8], strides = [1, 1, 1]} : vector<1x8x32xf32> to vector<1x8x8xf32>
    %278 = vector.broadcast %269 : vector<1x8x1xf32> to vector<1x8x8xf32>
    %279 = arith.mulf %278, %277 : vector<1x8x8xf32>
    %280 = arith.truncf %272 : vector<1x8x16xf32> to vector<1x8x16xbf16>
    %281 = vector.extract_strided_slice %219 {offsets = [0, 0, 8], sizes = [1, 16, 8], strides = [1, 1, 1]} : vector<1x16x32xf32> to vector<1x16x8xf32>
    %282 = arith.truncf %281 : vector<1x16x8xf32> to vector<1x16x8xbf16>
    "tpu.trace_start"() <{level = 10 : i32, message = "bvg,bgd->bvd"}> : () -> ()
    %cst_94 = arith.constant dense<0.000000e+00> : vector<1x8x8xf32>
    %283 = tpu.matmul %280, %282, %cst_94 {dimension_numbers = #tpu.dot_dimension_numbers<[2], [1], [1], [2], [0, 0, 0, 1, 1, 2], [0], [0]>} : vector<1x8x16xbf16>, vector<1x16x8xbf16>, vector<1x8x8xf32> -> vector<1x8x8xf32>
    "tpu.trace_stop"() : () -> ()
    %284 = arith.addf %279, %283 : vector<1x8x8xf32>
    %285 = vector.broadcast %276 : vector<1x8x1xf32> to vector<1x8x8xf32>
    %286 = arith.mulf %284, %285 : vector<1x8x8xf32>
    %287 = vector.shape_cast %286 : vector<1x8x8xf32> to vector<8x8xf32>
    %c8_95 = arith.constant 8 : index
    %c0_96 = arith.constant 0 : index
    %288 = vector.load %arg12[%c8_95, %c0_96] : memref<32x32xf32, #tpu.memory_space<vmem>>, vector<8x32xf32>
    %289 = arith.truncf %287 : vector<8x8xf32> to vector<8x8xbf16>
    %290 = arith.truncf %288 : vector<8x32xf32> to vector<8x32xbf16>
    %cst_97 = arith.constant dense<0.000000e+00> : vector<8x32xf32>
    %291 = tpu.matmul %289, %290, %cst_97 {dimension_numbers = #tpu.dot_dimension_numbers<[1], [0], [0], [1], [0, 0, 1, 1], [], []>} : vector<8x8xbf16>, vector<8x32xbf16>, vector<8x32xf32> -> vector<8x32xf32>
    %292 = arith.addf %255, %291 : vector<8x32xf32>
    %293 = vector.extract_strided_slice %215 {offsets = [0, 0, 16], sizes = [1, 8, 8], strides = [1, 1, 1]} : vector<1x8x32xf32> to vector<1x8x8xf32>
    %294 = vector.extract_strided_slice %216 {offsets = [0, 0, 16], sizes = [1, 8, 8], strides = [1, 1, 1]} : vector<1x8x32xf32> to vector<1x8x8xf32>
    %295 = arith.mulf %293, %294 : vector<1x8x8xf32>
    %cst_98 = arith.constant dense<0.000000e+00> : vector<1x8xf32>
    %296 = vector.multi_reduction <add>, %295, %cst_98 [2] : vector<1x8x8xf32> to vector<1x8xf32>
    %297 = vector.shape_cast %296 : vector<1x8xf32> to vector<1x8x1xf32>
    %298 = arith.truncf %293 : vector<1x8x8xf32> to vector<1x8x8xbf16>
    %299 = vector.extract_strided_slice %218 {offsets = [0, 0, 16], sizes = [1, 16, 8], strides = [1, 1, 1]} : vector<1x16x32xf32> to vector<1x16x8xf32>
    %300 = arith.truncf %299 : vector<1x16x8xf32> to vector<1x16x8xbf16>
    "tpu.trace_start"() <{level = 10 : i32, message = "bvd,bgd->bvg"}> : () -> ()
    %cst_99 = arith.constant dense<0.000000e+00> : vector<1x8x16xf32>
    %301 = tpu.matmul %298, %300, %cst_99 {dimension_numbers = #tpu.dot_dimension_numbers<[2], [2], [1], [1], [0, 0, 0, 1, 1, 1], [0], [0]>} : vector<1x8x8xbf16>, vector<1x16x8xbf16>, vector<1x8x16xf32> -> vector<1x8x16xf32>
    "tpu.trace_stop"() : () -> ()
    %cst_100 = arith.constant dense<0xFF800000> : vector<1x8xf32>
    %302 = vector.multi_reduction <maximumf>, %301, %cst_100 [2] : vector<1x8x16xf32> to vector<1x8xf32>
    %303 = vector.shape_cast %302 : vector<1x8xf32> to vector<1x8x1xf32>
    %304 = arith.maximumf %303, %297 : vector<1x8x1xf32>
    %305 = arith.subf %297, %304 : vector<1x8x1xf32>
    %306 = math.exp %305 : vector<1x8x1xf32>
    %307 = vector.broadcast %304 : vector<1x8x1xf32> to vector<1x8x16xf32>
    %308 = arith.subf %301, %307 : vector<1x8x16xf32>
    %309 = math.exp %308 : vector<1x8x16xf32>
    %cst_101 = arith.constant dense<0.000000e+00> : vector<1x8xf32>
    %310 = vector.multi_reduction <add>, %309, %cst_101 [2] : vector<1x8x16xf32> to vector<1x8xf32>
    %311 = vector.shape_cast %310 : vector<1x8xf32> to vector<1x8x1xf32>
    %312 = arith.addf %306, %311 : vector<1x8x1xf32>
    %313 = tpu.reciprocal %312 {approx = true} : vector<1x8x1xf32> -> vector<1x8x1xf32>
    %314 = vector.extract_strided_slice %217 {offsets = [0, 0, 16], sizes = [1, 8, 8], strides = [1, 1, 1]} : vector<1x8x32xf32> to vector<1x8x8xf32>
    %315 = vector.broadcast %306 : vector<1x8x1xf32> to vector<1x8x8xf32>
    %316 = arith.mulf %315, %314 : vector<1x8x8xf32>
    %317 = arith.truncf %309 : vector<1x8x16xf32> to vector<1x8x16xbf16>
    %318 = vector.extract_strided_slice %219 {offsets = [0, 0, 16], sizes = [1, 16, 8], strides = [1, 1, 1]} : vector<1x16x32xf32> to vector<1x16x8xf32>
    %319 = arith.truncf %318 : vector<1x16x8xf32> to vector<1x16x8xbf16>
    "tpu.trace_start"() <{level = 10 : i32, message = "bvg,bgd->bvd"}> : () -> ()
    %cst_102 = arith.constant dense<0.000000e+00> : vector<1x8x8xf32>
    %320 = tpu.matmul %317, %319, %cst_102 {dimension_numbers = #tpu.dot_dimension_numbers<[2], [1], [1], [2], [0, 0, 0, 1, 1, 2], [0], [0]>} : vector<1x8x16xbf16>, vector<1x16x8xbf16>, vector<1x8x8xf32> -> vector<1x8x8xf32>
    "tpu.trace_stop"() : () -> ()
    %321 = arith.addf %316, %320 : vector<1x8x8xf32>
    %322 = vector.broadcast %313 : vector<1x8x1xf32> to vector<1x8x8xf32>
    %323 = arith.mulf %321, %322 : vector<1x8x8xf32>
    %324 = vector.shape_cast %323 : vector<1x8x8xf32> to vector<8x8xf32>
    %c16_103 = arith.constant 16 : index
    %c0_104 = arith.constant 0 : index
    %325 = vector.load %arg12[%c16_103, %c0_104] : memref<32x32xf32, #tpu.memory_space<vmem>>, vector<8x32xf32>
    %326 = arith.truncf %324 : vector<8x8xf32> to vector<8x8xbf16>
    %327 = arith.truncf %325 : vector<8x32xf32> to vector<8x32xbf16>
    %cst_105 = arith.constant dense<0.000000e+00> : vector<8x32xf32>
    %328 = tpu.matmul %326, %327, %cst_105 {dimension_numbers = #tpu.dot_dimension_numbers<[1], [0], [0], [1], [0, 0, 1, 1], [], []>} : vector<8x8xbf16>, vector<8x32xbf16>, vector<8x32xf32> -> vector<8x32xf32>
    %329 = arith.addf %292, %328 : vector<8x32xf32>
    %330 = vector.extract_strided_slice %215 {offsets = [0, 0, 24], sizes = [1, 8, 8], strides = [1, 1, 1]} : vector<1x8x32xf32> to vector<1x8x8xf32>
    %331 = vector.extract_strided_slice %216 {offsets = [0, 0, 24], sizes = [1, 8, 8], strides = [1, 1, 1]} : vector<1x8x32xf32> to vector<1x8x8xf32>
    %332 = arith.mulf %330, %331 : vector<1x8x8xf32>
    %cst_106 = arith.constant dense<0.000000e+00> : vector<1x8xf32>
    %333 = vector.multi_reduction <add>, %332, %cst_106 [2] : vector<1x8x8xf32> to vector<1x8xf32>
    %334 = vector.shape_cast %333 : vector<1x8xf32> to vector<1x8x1xf32>
    %335 = arith.truncf %330 : vector<1x8x8xf32> to vector<1x8x8xbf16>
    %336 = vector.extract_strided_slice %218 {offsets = [0, 0, 24], sizes = [1, 16, 8], strides = [1, 1, 1]} : vector<1x16x32xf32> to vector<1x16x8xf32>
    %337 = arith.truncf %336 : vector<1x16x8xf32> to vector<1x16x8xbf16>
    "tpu.trace_start"() <{level = 10 : i32, message = "bvd,bgd->bvg"}> : () -> ()
    %cst_107 = arith.constant dense<0.000000e+00> : vector<1x8x16xf32>
    %338 = tpu.matmul %335, %337, %cst_107 {dimension_numbers = #tpu.dot_dimension_numbers<[2], [2], [1], [1], [0, 0, 0, 1, 1, 1], [0], [0]>} : vector<1x8x8xbf16>, vector<1x16x8xbf16>, vector<1x8x16xf32> -> vector<1x8x16xf32>
    "tpu.trace_stop"() : () -> ()
    %cst_108 = arith.constant dense<0xFF800000> : vector<1x8xf32>
    %339 = vector.multi_reduction <maximumf>, %338, %cst_108 [2] : vector<1x8x16xf32> to vector<1x8xf32>
    %340 = vector.shape_cast %339 : vector<1x8xf32> to vector<1x8x1xf32>
    %341 = arith.maximumf %340, %334 : vector<1x8x1xf32>
    %342 = arith.subf %334, %341 : vector<1x8x1xf32>
    %343 = math.exp %342 : vector<1x8x1xf32>
    %344 = vector.broadcast %341 : vector<1x8x1xf32> to vector<1x8x16xf32>
    %345 = arith.subf %338, %344 : vector<1x8x16xf32>
    %346 = math.exp %345 : vector<1x8x16xf32>
    %cst_109 = arith.constant dense<0.000000e+00> : vector<1x8xf32>
    %347 = vector.multi_reduction <add>, %346, %cst_109 [2] : vector<1x8x16xf32> to vector<1x8xf32>
    %348 = vector.shape_cast %347 : vector<1x8xf32> to vector<1x8x1xf32>
    %349 = arith.addf %343, %348 : vector<1x8x1xf32>
    %350 = tpu.reciprocal %349 {approx = true} : vector<1x8x1xf32> -> vector<1x8x1xf32>
    %351 = vector.extract_strided_slice %217 {offsets = [0, 0, 24], sizes = [1, 8, 8], strides = [1, 1, 1]} : vector<1x8x32xf32> to vector<1x8x8xf32>
    %352 = vector.broadcast %343 : vector<1x8x1xf32> to vector<1x8x8xf32>
    %353 = arith.mulf %352, %351 : vector<1x8x8xf32>
    %354 = arith.truncf %346 : vector<1x8x16xf32> to vector<1x8x16xbf16>
    %355 = vector.extract_strided_slice %219 {offsets = [0, 0, 24], sizes = [1, 16, 8], strides = [1, 1, 1]} : vector<1x16x32xf32> to vector<1x16x8xf32>
    %356 = arith.truncf %355 : vector<1x16x8xf32> to vector<1x16x8xbf16>
    "tpu.trace_start"() <{level = 10 : i32, message = "bvg,bgd->bvd"}> : () -> ()
    %cst_110 = arith.constant dense<0.000000e+00> : vector<1x8x8xf32>
    %357 = tpu.matmul %354, %356, %cst_110 {dimension_numbers = #tpu.dot_dimension_numbers<[2], [1], [1], [2], [0, 0, 0, 1, 1, 2], [0], [0]>} : vector<1x8x16xbf16>, vector<1x16x8xbf16>, vector<1x8x8xf32> -> vector<1x8x8xf32>
    "tpu.trace_stop"() : () -> ()
    %358 = arith.addf %353, %357 : vector<1x8x8xf32>
    %359 = vector.broadcast %350 : vector<1x8x1xf32> to vector<1x8x8xf32>
    %360 = arith.mulf %358, %359 : vector<1x8x8xf32>
    %361 = vector.shape_cast %360 : vector<1x8x8xf32> to vector<8x8xf32>
    %c24_111 = arith.constant 24 : index
    %c0_112 = arith.constant 0 : index
    %362 = vector.load %arg12[%c24_111, %c0_112] : memref<32x32xf32, #tpu.memory_space<vmem>>, vector<8x32xf32>
    %363 = arith.truncf %361 : vector<8x8xf32> to vector<8x8xbf16>
    %364 = arith.truncf %362 : vector<8x32xf32> to vector<8x32xbf16>
    %cst_113 = arith.constant dense<0.000000e+00> : vector<8x32xf32>
    %365 = tpu.matmul %363, %364, %cst_113 {dimension_numbers = #tpu.dot_dimension_numbers<[1], [0], [0], [1], [0, 0, 1, 1], [], []>} : vector<8x8xbf16>, vector<8x32xbf16>, vector<8x32xf32> -> vector<8x32xf32>
    %366 = arith.addf %329, %365 : vector<8x32xf32>
    %367 = arith.addf %366, %203 : vector<8x32xf32>
    %cst_114 = arith.constant dense<0.000000e+00> : vector<8xf32>
    %368 = vector.multi_reduction <add>, %367, %cst_114 [1] : vector<8x32xf32> to vector<8xf32>
    %369 = vector.shape_cast %368 : vector<8xf32> to vector<8x1xf32>
    %cst_115 = arith.constant 3.200000e+01 : f32
    %370 = vector.broadcast %cst_115 : f32 to vector<8x1xf32>
    %371 = arith.divf %369, %370 : vector<8x1xf32>
    %372 = vector.broadcast %371 : vector<8x1xf32> to vector<8x32xf32>
    %373 = arith.subf %367, %372 : vector<8x32xf32>
    %374 = arith.mulf %373, %373 : vector<8x32xf32>
    %cst_116 = arith.constant dense<0.000000e+00> : vector<8xf32>
    %375 = vector.multi_reduction <add>, %374, %cst_116 [1] : vector<8x32xf32> to vector<8xf32>
    %376 = vector.shape_cast %375 : vector<8xf32> to vector<8x1xf32>
    %cst_117 = arith.constant 3.200000e+01 : f32
    %377 = vector.broadcast %cst_117 : f32 to vector<8x1xf32>
    %378 = arith.divf %376, %377 : vector<8x1xf32>
    %379 = vector.broadcast %371 : vector<8x1xf32> to vector<8x32xf32>
    %380 = arith.subf %367, %379 : vector<8x32xf32>
    %cst_118 = arith.constant 9.99999997E-7 : f32
    %381 = vector.broadcast %cst_118 : f32 to vector<8x1xf32>
    %382 = arith.addf %378, %381 : vector<8x1xf32>
    %383 = math.rsqrt %382 : vector<8x1xf32>
    %384 = vector.broadcast %383 : vector<8x1xf32> to vector<8x32xf32>
    %385 = arith.mulf %380, %384 : vector<8x32xf32>
    %386 = vector.broadcast %9 : vector<1x32xf32> to vector<8x32xf32>
    %387 = arith.mulf %385, %386 : vector<8x32xf32>
    %388 = vector.broadcast %10 : vector<1x32xf32> to vector<8x32xf32>
    %389 = arith.addf %387, %388 : vector<8x32xf32>
    %c0_119 = arith.constant 0 : index
    %c0_120 = arith.constant 0 : index
    %390 = vector.load %arg13[%c0_119, %c0_120] : memref<32x32xbf16, #tpu.memory_space<vmem>>, vector<32x32xbf16>
    %391 = arith.truncf %389 : vector<8x32xf32> to vector<8x32xbf16>
    %cst_121 = arith.constant dense<0.000000e+00> : vector<8x32xf32>
    %392 = tpu.matmul %391, %390, %cst_121 {dimension_numbers = #tpu.dot_dimension_numbers<[1], [0], [0], [1], [0, 0, 1, 1], [], []>} : vector<8x32xbf16>, vector<32x32xbf16>, vector<8x32xf32> -> vector<8x32xf32>
    %393 = vector.broadcast %11 : vector<1x32xf32> to vector<8x32xf32>
    %394 = arith.addf %392, %393 : vector<8x32xf32>
    %cst_122 = arith.constant 0.000000e+00 : f32
    %395 = vector.broadcast %cst_122 : f32 to vector<8x32xf32>
    %396 = arith.maximumf %394, %395 : vector<8x32xf32>
    %c0_123 = arith.constant 0 : index
    %c0_124 = arith.constant 0 : index
    %397 = vector.load %arg14[%c0_123, %c0_124] : memref<32x32xbf16, #tpu.memory_space<vmem>>, vector<32x32xbf16>
    %398 = arith.truncf %396 : vector<8x32xf32> to vector<8x32xbf16>
    %cst_125 = arith.constant dense<0.000000e+00> : vector<8x32xf32>
    %399 = tpu.matmul %398, %397, %cst_125 {dimension_numbers = #tpu.dot_dimension_numbers<[1], [0], [0], [1], [0, 0, 1, 1], [], []>} : vector<8x32xbf16>, vector<32x32xbf16>, vector<8x32xf32> -> vector<8x32xf32>
    %400 = vector.broadcast %12 : vector<1x32xf32> to vector<8x32xf32>
    %401 = arith.addf %399, %400 : vector<8x32xf32>
    %402 = arith.addf %401, %389 : vector<8x32xf32>
    %cst_126 = arith.constant dense<0.000000e+00> : vector<8xf32>
    %403 = vector.multi_reduction <add>, %402, %cst_126 [1] : vector<8x32xf32> to vector<8xf32>
    %404 = vector.shape_cast %403 : vector<8xf32> to vector<8x1xf32>
    %cst_127 = arith.constant 3.200000e+01 : f32
    %405 = vector.broadcast %cst_127 : f32 to vector<8x1xf32>
    %406 = arith.divf %404, %405 : vector<8x1xf32>
    %407 = vector.broadcast %406 : vector<8x1xf32> to vector<8x32xf32>
    %408 = arith.subf %402, %407 : vector<8x32xf32>
    %409 = arith.mulf %408, %408 : vector<8x32xf32>
    %cst_128 = arith.constant dense<0.000000e+00> : vector<8xf32>
    %410 = vector.multi_reduction <add>, %409, %cst_128 [1] : vector<8x32xf32> to vector<8xf32>
    %411 = vector.shape_cast %410 : vector<8xf32> to vector<8x1xf32>
    %cst_129 = arith.constant 3.200000e+01 : f32
    %412 = vector.broadcast %cst_129 : f32 to vector<8x1xf32>
    %413 = arith.divf %411, %412 : vector<8x1xf32>
    %414 = vector.broadcast %406 : vector<8x1xf32> to vector<8x32xf32>
    %415 = arith.subf %402, %414 : vector<8x32xf32>
    %cst_130 = arith.constant 9.99999997E-7 : f32
    %416 = vector.broadcast %cst_130 : f32 to vector<8x1xf32>
    %417 = arith.addf %413, %416 : vector<8x1xf32>
    %418 = math.rsqrt %417 : vector<8x1xf32>
    %419 = vector.broadcast %418 : vector<8x1xf32> to vector<8x32xf32>
    %420 = arith.mulf %415, %419 : vector<8x32xf32>
    %421 = vector.broadcast %13 : vector<1x32xf32> to vector<8x32xf32>
    %422 = arith.mulf %420, %421 : vector<8x32xf32>
    %423 = vector.broadcast %14 : vector<1x32xf32> to vector<8x32xf32>
    %424 = arith.addf %422, %423 : vector<8x32xf32>
    %425 = vector.shape_cast %424 : vector<8x32xf32> to vector<1x8x32xf32>
    %c0_131 = arith.constant 0 : index
    %c0_132 = arith.constant 0 : index
    %c0_133 = arith.constant 0 : index
    %426 = vector.load %arg15[%c0_131, %c0_132, %c0_133] : memref<1x8x32xf32, #tpu.memory_space<vmem>>, vector<1x8x32xf32>
    tpu.vector_store %arg15[%c0_131, %c0_132, %c0_133], %425 {strides = array<i32>} : memref<1x8x32xf32, #tpu.memory_space<vmem>>, vector<1x8x32xf32>,
    return
  }
  func.func @transform_0(%arg0: i32) -> (i32, i32, i32) {
    %c0_i32 = arith.constant 0 : i32
    %c0_i32_0 = arith.constant 0 : i32
    %c0_i32_1 = arith.constant 0 : i32
    return %arg0, %c0_i32, %c0_i32_0 : i32, i32, i32
  }
  func.func @transform_1(%arg0: i32) -> (i32, i32, i32) {
    %c0_i32 = arith.constant 0 : i32
    %c0_i32_0 = arith.constant 0 : i32
    %c0_i32_1 = arith.constant 0 : i32
    return %arg0, %c0_i32, %c0_i32_0 : i32, i32, i32
  }
  func.func @transform_2(%arg0: i32) -> (i32, i32) {
    %c0_i32 = arith.constant 0 : i32
    %c0_i32_0 = arith.constant 0 : i32
    %c0_i32_1 = arith.constant 0 : i32
    return %c0_i32, %c0_i32_0 : i32, i32
  }
  func.func @transform_3(%arg0: i32) -> (i32, i32) {
    %c0_i32 = arith.constant 0 : i32
    %c0_i32_0 = arith.constant 0 : i32
    %c0_i32_1 = arith.constant 0 : i32
    return %c0_i32, %c0_i32_0 : i32, i32
  }
  func.func @transform_4(%arg0: i32) -> (i32, i32) {
    %c0_i32 = arith.constant 0 : i32
    %c0_i32_0 = arith.constant 0 : i32
    %c0_i32_1 = arith.constant 0 : i32
    return %c0_i32, %c0_i32_0 : i32, i32
  }
  func.func @transform_5(%arg0: i32) -> (i32, i32) {
    %c0_i32 = arith.constant 0 : i32
    %c0_i32_0 = arith.constant 0 : i32
    %c0_i32_1 = arith.constant 0 : i32
    return %c0_i32, %c0_i32_0 : i32, i32
  }
  func.func @transform_6(%arg0: i32) -> (i32, i32) {
    %c0_i32 = arith.constant 0 : i32
    %c0_i32_0 = arith.constant 0 : i32
    %c0_i32_1 = arith.constant 0 : i32
    return %c0_i32, %c0_i32_0 : i32, i32
  }
  func.func @transform_7(%arg0: i32) -> (i32, i32) {
    %c0_i32 = arith.constant 0 : i32
    %c0_i32_0 = arith.constant 0 : i32
    %c0_i32_1 = arith.constant 0 : i32
    return %c0_i32, %c0_i32_0 : i32, i32
  }
  func.func @transform_8(%arg0: i32) -> (i32, i32) {
    %c0_i32 = arith.constant 0 : i32
    %c0_i32_0 = arith.constant 0 : i32
    %c0_i32_1 = arith.constant 0 : i32
    return %c0_i32, %c0_i32_0 : i32, i32
  }
  func.func @transform_9(%arg0: i32) -> (i32, i32) {
    %c0_i32 = arith.constant 0 : i32
    %c0_i32_0 = arith.constant 0 : i32
    %c0_i32_1 = arith.constant 0 : i32
    return %c0_i32, %c0_i32_0 : i32, i32
  }
  func.func @transform_10(%arg0: i32) -> (i32, i32) {
    %c0_i32 = arith.constant 0 : i32
    %c0_i32_0 = arith.constant 0 : i32
    %c0_i32_1 = arith.constant 0 : i32
    return %c0_i32, %c0_i32_0 : i32, i32
  }
  func.func @transform_11(%arg0: i32) -> (i32, i32) {
    %c0_i32 = arith.constant 0 : i32
    %c0_i32_0 = arith.constant 0 : i32
    %c0_i32_1 = arith.constant 0 : i32
    return %c0_i32, %c0_i32_0 : i32, i32
  }
  func.func @transform_12(%arg0: i32) -> (i32, i32) {
    %c0_i32 = arith.constant 0 : i32
    %c0_i32_0 = arith.constant 0 : i32
    %c0_i32_1 = arith.constant 0 : i32
    return %c0_i32, %c0_i32_0 : i32, i32
  }
  func.func @transform_13(%arg0: i32) -> (i32, i32) {
    %c0_i32 = arith.constant 0 : i32
    %c0_i32_0 = arith.constant 0 : i32
    %c0_i32_1 = arith.constant 0 : i32
    return %c0_i32, %c0_i32_0 : i32, i32
  }
  func.func @transform_14(%arg0: i32) -> (i32, i32, i32) {
    %c0_i32 = arith.constant 0 : i32
    %c0_i32_0 = arith.constant 0 : i32
    %c0_i32_1 = arith.constant 0 : i32
    return %arg0, %c0_i32, %c0_i32_0 : i32, i32, i32
  }
}

</mosaic_0001>

<llo_original>
// kernel: tpu_custom_call.1
$region0: #{tpu_custom_call.1}
  #allocation0 [shape = 'u32[]', space=smem, size = 0x4, offset = 0x4, fixed_abs, tag = 'smem constant byte address 0x4 - core index']
  #allocation1 [shape = 'u32[72,128]{1,0:T(1,128)}', space=vmem, size = 0x9000, scoped, tag = 'internal scratch']
  %s0 = inlined_call_operand.vmem [shape: f32[2,16,64], index: 0, kind: input, shape index: {}]
  %s1 = inlined_call_operand.vmem [shape: f32[2,8,32], index: 1, kind: input, shape index: {}]
  %s2 = inlined_call_operand.vmem [shape: bf16[64,32], index: 2, kind: input, shape index: {}]
  %s3 = inlined_call_operand.hbm [shape: f32[23,32], index: 3, kind: input, shape index: {}]
  %s4 = inlined_call_operand.hbm [shape: bf16[32,96], index: 4, kind: input, shape index: {}]
  %s5 = inlined_call_operand.hbm [shape: f32[32,32], index: 5, kind: input, shape index: {}]
  %s6 = inlined_call_operand.hbm [shape: bf16[32,32], index: 6, kind: input, shape index: {}]
  %s7 = inlined_call_operand.hbm [shape: bf16[32,32], index: 7, kind: input, shape index: {}]
  %s8 = inlined_call_operand.hbm [shape: bf16[32,32], index: 8, kind: input, shape index: {}]
  %s9 = inlined_call_operand.vmem [shape: f32[7,32], index: 9, kind: input, shape index: {}]
  %s10 = inlined_call_operand.hbm [shape: bf16[32,96], index: 10, kind: input, shape index: {}]
  %s11 = inlined_call_operand.hbm [shape: f32[32,32], index: 11, kind: input, shape index: {}]
  %s12 = inlined_call_operand.hbm [shape: bf16[32,32], index: 12, kind: input, shape index: {}]
  %s13 = inlined_call_operand.hbm [shape: bf16[32,32], index: 13, kind: input, shape index: {}]
  %s14 = inlined_call_operand.hbm [shape: f32[2,8,32], index: 14, kind: output, shape index: {}]
  %s15 = sld [smem:[#allocation0]]
  $region129: #{tpu_custom_call.1} parent=0
    _
  %s17 = ssub.s32 1, %s15
  %s18 = scalar_select 0, %s17, %s15
  $region1: #{tpu_custom_call.1} parent=0
    #allocation2 [shape = 'u8[12288]{0}', space=vmem, size = 0x3000, scoped, tag = 'input window, operand 3, single buffered']
    #allocation3 [shape = 's32[2]{0}', space=sflag, size = 0x8, scoped, tag = 'scoped memory for tpu_custom_call.1']
    #allocation4 [shape = 's32[2]{0}', space=sflag, size = 0x8, scoped, tag = 'scoped memory for tpu_custom_call.1']
    #allocation5 [shape = 'u8[8192]{0}', space=vmem, size = 0x2000, scoped, tag = 'input window, operand 4, single buffered']
    #allocation6 [shape = 's32[1]{0}', space=sflag, size = 0x4, scoped, tag = 'scoped memory for tpu_custom_call.1']
    #allocation7 [shape = 'u8[16384]{0}', space=vmem, size = 0x4000, scoped, tag = 'input window, operand 5, single buffered']
    #allocation8 [shape = 'u8[8192]{0}', space=vmem, size = 0x2000, scoped, tag = 'input window, operand 6, single buffered']
    #allocation9 [shape = 's32[1]{0}', space=sflag, size = 0x4, scoped, tag = 'scoped memory for tpu_custom_call.1']
    #allocation10 [shape = 'u8[8192]{0}', space=vmem, size = 0x2000, scoped, tag = 'input window, operand 7, single buffered']
    #allocation11 [shape = 'u8[8192]{0}', space=vmem, size = 0x2000, scoped, tag = 'input window, operand 8, single buffered']
    #allocation12 [shape = 's32[1]{0}', space=sflag, size = 0x4, scoped, tag = 'scoped memory for tpu_custom_call.1']
    #allocation13 [shape = 'u8[8192]{0}', space=vmem, size = 0x2000, scoped, tag = 'input window, operand 10, single buffered']
    #allocation14 [shape = 'u8[16384]{0}', space=vmem, size = 0x4000, scoped, tag = 'input window, operand 11, single buffered']
    #allocation15 [shape = 's32[1]{0}', space=sflag, size = 0x4, scoped, tag = 'scoped memory for tpu_custom_call.1']
    #allocation16 [shape = 'u8[8192]{0}', space=vmem, size = 0x2000, scoped, tag = 'input window, operand 12, single buffered']
    #allocation17 [shape = 'u8[8192]{0}', space=vmem, size = 0x2000, scoped, tag = 'input window, operand 13, single buffered']
    #allocation18 [shape = 's32[1]{0}', space=sflag, size = 0x4, scoped, tag = 'scoped memory for tpu_custom_call.1']
    #allocation19 [shape = 'u8[8192]{0}', space=vmem, size = 0x2000, scoped, tag = 'output window, operand 0']
    %19 = vsyncpa [#allocation3], 0
    %20 = vsyncpa [#allocation6], 0
    %21 = vsyncpa [#allocation9], 0
    %22 = vsyncpa [#allocation12], 0
    %23 = vsyncpa [#allocation15], 0
    %24 = vsyncpa [#allocation18], 0
    %25 = vsyncpa [#allocation4], 0
    %s26 = scalar_lea.sflag [#allocation4], 1
    %27 = vsyncpa %s26, 0
    loop: start=0, step=1, limit=4
    $region2: #{tpu_custom_call.1} parent=1 // loop_pre_header
      _
    $region3: #{tpu_custom_call.1} parent=1 // loop_header
      %s29 = sphi 0, %s33
      %p30 = scmp.ge.s32.totalorder %s29, 4
      %s39 = sphi 0, %s41
      %s42 = sphi 0, %s39
      %s43 = sphi 0, %s42
      %s59 = sphi 0, %s43
      %s65 = sphi 0, %s67
      %s68 = sphi 0, %s65
      %s69 = sphi 0, %s68
      %s85 = sphi 0, %s69
      %s89 = sphi 0, %s89
      %s91 = sphi 0, %s89
      %s92 = sphi 0, %s91
      %s106 = sphi 0, %s92
      %s110 = sphi 0, %s110
      %s112 = sphi 0, %s110
      %s113 = sphi 0, %s112
      %s127 = sphi 0, %s113
      %s131 = sphi 0, %s131
      %s133 = sphi 0, %s131
      %s134 = sphi 0, %s133
      %s148 = sphi 0, %s134
      %s152 = sphi 0, %s152
      %s154 = sphi 0, %s152
      %s155 = sphi 0, %s154
      %s169 = sphi 0, %s155
      %s173 = sphi 0, %s173
      %s175 = sphi 0, %s173
      %s176 = sphi 0, %s175
      %s190 = sphi 0, %s176
      %s194 = sphi 0, %s194
      %s196 = sphi 0, %s194
      %s197 = sphi 0, %s196
      %s211 = sphi 0, %s197
      %s215 = sphi 0, %s215
      %s217 = sphi 0, %s215
      %s218 = sphi 0, %s217
      %s232 = sphi 0, %s218
      %s236 = sphi 0, %s236
      %s238 = sphi 0, %s236
      %s239 = sphi 0, %s238
      %s253 = sphi 0, %s239
      %s257 = sphi 0, %s257
      %s259 = sphi 0, %s257
      %s260 = sphi 0, %s259
      %s274 = sphi 0, %s260
      %s278 = sphi 0, %s278
      %s280 = sphi 0, %s278
      %s281 = sphi 0, %s280
      %s295 = sphi 0, %s281
      %s299 = sphi 0, %s299
      %s301 = sphi 0, %s299
      %s302 = sphi 0, %s301
      %s316 = sphi 0, %s302
      %s320 = sphi 0, %s320
      %s322 = sphi 0, %s320
      %s323 = sphi 0, %s322
      %s337 = sphi 0, %s323
      %s343 = sphi 0, %s345
      %s346 = sphi 0, %s343
      %s347 = sphi 0, %s346
      %s363 = sphi 0, %s347
    $region4: #{tpu_custom_call.1} parent=1 // loop_header_branch
      %32 = sbr.rel (%p30) target = $region8
    $region5: #{tpu_custom_call.1} parent=1 // loop_body
      %s34 = ssub.s32 %s29, 1
      %s35 = ssub.s32 %s29, 2
      %s36 = sadd.s32 %s29, 1
      %s37 = ssub.s32 %s29, %s36
      %p38 = scmp.eq.s32.totalorder %s37, 0
      %s40 = sadd.s32 %s39, 1
      %s41 = scalar_select %p38, %s39, %s40
      %p44 = pneg %p38
      %p45 = scmp.eq.s32.totalorder %s29, 1
      %p46 = por %p44, %p45
      %p47 = scmp.ne.s32.totalorder %s39, %s42
      %p48 = scmp.eq.s32.totalorder %s29, 0
      %p49 = por %p47, %p48
      %p50 = scmp.ne.s32.totalorder %s39, %s42
      %p51 = scmp.eq.s32.totalorder %s34, 1
      %p52 = por %p50, %p51
      %p53 = scmp.ne.s32.totalorder %s42, %s43
      %p54 = scmp.eq.s32.totalorder %s34, 0
      %p55 = por %p53, %p54
      %p56 = scmp.ne.s32.totalorder %s42, %s43
      %p57 = scmp.eq.s32.totalorder %s35, 1
      %p58 = por %p56, %p57
      %p60 = scmp.ne.s32.totalorder %s43, %s59
      %p61 = scmp.eq.s32.totalorder %s35, 0
      %p62 = por %p60, %p61
      %s63 = ssub.s32 %s29, %s36
      %p64 = scmp.eq.s32.totalorder %s63, 0
      %s66 = sadd.s32 %s65, 1
      %s67 = scalar_select %p64, %s65, %s66
      %p70 = pneg %p64
      %p71 = scmp.eq.s32.totalorder %s29, 1
      %p72 = por %p70, %p71
      %p73 = scmp.ne.s32.totalorder %s65, %s68
      %p74 = scmp.eq.s32.totalorder %s29, 0
      %p75 = por %p73, %p74
      %p76 = scmp.ne.s32.totalorder %s65, %s68
      %p77 = scmp.eq.s32.totalorder %s34, 1
      %p78 = por %p76, %p77
      %p79 = scmp.ne.s32.totalorder %s68, %s69
      %p80 = scmp.eq.s32.totalorder %s34, 0
      %p81 = por %p79, %p80
      %p82 = scmp.ne.s32.totalorder %s68, %s69
      %p83 = scmp.eq.s32.totalorder %s35, 1
      %p84 = por %p82, %p83
      %p86 = scmp.ne.s32.totalorder %s69, %s85
      %p87 = scmp.eq.s32.totalorder %s35, 0
      %p88 = por %p86, %p87
      %s90 = sadd.s32 %s89, 1
      %p93 = scmp.eq.s32.totalorder %s29, 1
      %p94 = scmp.ne.s32.totalorder %s89, %s91
      %p95 = scmp.eq.s32.totalorder %s29, 0
      %p96 = por %p94, %p95
      %p97 = scmp.ne.s32.totalorder %s89, %s91
      %p98 = scmp.eq.s32.totalorder %s34, 1
      %p99 = por %p97, %p98
      %p100 = scmp.ne.s32.totalorder %s91, %s92
      %p101 = scmp.eq.s32.totalorder %s34, 0
      %p102 = por %p100, %p101
      %p103 = scmp.ne.s32.totalorder %s91, %s92
      %p104 = scmp.eq.s32.totalorder %s35, 1
      %p105 = por %p103, %p104
      %p107 = scmp.ne.s32.totalorder %s92, %s106
      %p108 = scmp.eq.s32.totalorder %s35, 0
      %p109 = por %p107, %p108
      %s111 = sadd.s32 %s110, 1
      %p114 = scmp.eq.s32.totalorder %s29, 1
      %p115 = scmp.ne.s32.totalorder %s110, %s112
      %p116 = scmp.eq.s32.totalorder %s29, 0
      %p117 = por %p115, %p116
      %p118 = scmp.ne.s32.totalorder %s110, %s112
      %p119 = scmp.eq.s32.totalorder %s34, 1
      %p120 = por %p118, %p119
      %p121 = scmp.ne.s32.totalorder %s112, %s113
      %p122 = scmp.eq.s32.totalorder %s34, 0
      %p123 = por %p121, %p122
      %p124 = scmp.ne.s32.totalorder %s112, %s113
      %p125 = scmp.eq.s32.totalorder %s35, 1
      %p126 = por %p124, %p125
      %p128 = scmp.ne.s32.totalorder %s113, %s127
      %p129 = scmp.eq.s32.totalorder %s35, 0
      %p130 = por %p128, %p129
      %s132 = sadd.s32 %s131, 1
      %p135 = scmp.eq.s32.totalorder %s29, 1
      %p136 = scmp.ne.s32.totalorder %s131, %s133
      %p137 = scmp.eq.s32.totalorder %s29, 0
      %p138 = por %p136, %p137
      %p139 = scmp.ne.s32.totalorder %s131, %s133
      %p140 = scmp.eq.s32.totalorder %s34, 1
      %p141 = por %p139, %p140
      %p142 = scmp.ne.s32.totalorder %s133, %s134
      %p143 = scmp.eq.s32.totalorder %s34, 0
      %p144 = por %p142, %p143
      %p145 = scmp.ne.s32.totalorder %s133, %s134
      %p146 = scmp.eq.s32.totalorder %s35, 1
      %p147 = por %p145, %p146
      %p149 = scmp.ne.s32.totalorder %s134, %s148
      %p150 = scmp.eq.s32.totalorder %s35, 0
      %p151 = por %p149, %p150
      %s153 = sadd.s32 %s152, 1
      %p156 = scmp.eq.s32.totalorder %s29, 1
      %p157 = scmp.ne.s32.totalorder %s152, %s154
      %p158 = scmp.eq.s32.totalorder %s29, 0
      %p159 = por %p157, %p158
      %p160 = scmp.ne.s32.totalorder %s152, %s154
      %p161 = scmp.eq.s32.totalorder %s34, 1
      %p162 = por %p160, %p161
      %p163 = scmp.ne.s32.totalorder %s154, %s155
      %p164 = scmp.eq.s32.totalorder %s34, 0
      %p165 = por %p163, %p164
      %p166 = scmp.ne.s32.totalorder %s154, %s155
      %p167 = scmp.eq.s32.totalorder %s35, 1
      %p168 = por %p166, %p167
      %p170 = scmp.ne.s32.totalorder %s155, %s169
      %p171 = scmp.eq.s32.totalorder %s35, 0
      %p172 = por %p170, %p171
      %s174 = sadd.s32 %s173, 1
      %p177 = scmp.eq.s32.totalorder %s29, 1
      %p178 = scmp.ne.s32.totalorder %s173, %s175
      %p179 = scmp.eq.s32.totalorder %s29, 0
      %p180 = por %p178, %p179
      %p181 = scmp.ne.s32.totalorder %s173, %s175
      %p182 = scmp.eq.s32.totalorder %s34, 1
      %p183 = por %p181, %p182
      %p184 = scmp.ne.s32.totalorder %s175, %s176
      %p185 = scmp.eq.s32.totalorder %s34, 0
      %p186 = por %p184, %p185
      %p187 = scmp.ne.s32.totalorder %s175, %s176
      %p188 = scmp.eq.s32.totalorder %s35, 1
      %p189 = por %p187, %p188
      %p191 = scmp.ne.s32.totalorder %s176, %s190
      %p192 = scmp.eq.s32.totalorder %s35, 0
      %p193 = por %p191, %p192
      %s195 = sadd.s32 %s194, 1
      %p198 = scmp.eq.s32.totalorder %s29, 1
      %p199 = scmp.ne.s32.totalorder %s194, %s196
      %p200 = scmp.eq.s32.totalorder %s29, 0
      %p201 = por %p199, %p200
      %p202 = scmp.ne.s32.totalorder %s194, %s196
      %p203 = scmp.eq.s32.totalorder %s34, 1
      %p204 = por %p202, %p203
      %p205 = scmp.ne.s32.totalorder %s196, %s197
      %p206 = scmp.eq.s32.totalorder %s34, 0
      %p207 = por %p205, %p206
      %p208 = scmp.ne.s32.totalorder %s196, %s197
      %p209 = scmp.eq.s32.totalorder %s35, 1
      %p210 = por %p208, %p209
      %p212 = scmp.ne.s32.totalorder %s197, %s211
      %p213 = scmp.eq.s32.totalorder %s35, 0
      %p214 = por %p212, %p213
      %s216 = sadd.s32 %s215, 1
      %p219 = scmp.eq.s32.totalorder %s29, 1
      %p220 = scmp.ne.s32.totalorder %s215, %s217
      %p221 = scmp.eq.s32.totalorder %s29, 0
      %p222 = por %p220, %p221
      %p223 = scmp.ne.s32.totalorder %s215, %s217
      %p224 = scmp.eq.s32.totalorder %s34, 1
      %p225 = por %p223, %p224
      %p226 = scmp.ne.s32.totalorder %s217, %s218
      %p227 = scmp.eq.s32.totalorder %s34, 0
      %p228 = por %p226, %p227
      %p229 = scmp.ne.s32.totalorder %s217, %s218
      %p230 = scmp.eq.s32.totalorder %s35, 1
      %p231 = por %p229, %p230
      %p233 = scmp.ne.s32.totalorder %s218, %s232
      %p234 = scmp.eq.s32.totalorder %s35, 0
      %p235 = por %p233, %p234
      %s237 = sadd.s32 %s236, 1
      %p240 = scmp.eq.s32.totalorder %s29, 1
      %p241 = scmp.ne.s32.totalorder %s236, %s238
      %p242 = scmp.eq.s32.totalorder %s29, 0
      %p243 = por %p241, %p242
      %p244 = scmp.ne.s32.totalorder %s236, %s238
      %p245 = scmp.eq.s32.totalorder %s34, 1
      %p246 = por %p244, %p245
      %p247 = scmp.ne.s32.totalorder %s238, %s239
      %p248 = scmp.eq.s32.totalorder %s34, 0
      %p249 = por %p247, %p248
      %p250 = scmp.ne.s32.totalorder %s238, %s239
      %p251 = scmp.eq.s32.totalorder %s35, 1
      %p252 = por %p250, %p251
      %p254 = scmp.ne.s32.totalorder %s239, %s253
      %p255 = scmp.eq.s32.totalorder %s35, 0
      %p256 = por %p254, %p255
      %s258 = sadd.s32 %s257, 1
      %p261 = scmp.eq.s32.totalorder %s29, 1
      %p262 = scmp.ne.s32.totalorder %s257, %s259
      %p263 = scmp.eq.s32.totalorder %s29, 0
      %p264 = por %p262, %p263
      %p265 = scmp.ne.s32.totalorder %s257, %s259
      %p266 = scmp.eq.s32.totalorder %s34, 1
      %p267 = por %p265, %p266
      %p268 = scmp.ne.s32.totalorder %s259, %s260
      %p269 = scmp.eq.s32.totalorder %s34, 0
      %p270 = por %p268, %p269
      %p271 = scmp.ne.s32.totalorder %s259, %s260
      %p272 = scmp.eq.s32.totalorder %s35, 1
      %p273 = por %p271, %p272
      %p275 = scmp.ne.s32.totalorder %s260, %s274
      %p276 = scmp.eq.s32.totalorder %s35, 0
      %p277 = por %p275, %p276
      %s279 = sadd.s32 %s278, 1
      %p282 = scmp.eq.s32.totalorder %s29, 1
      %p283 = scmp.ne.s32.totalorder %s278, %s280
      %p284 = scmp.eq.s32.totalorder %s29, 0
      %p285 = por %p283, %p284
      %p286 = scmp.ne.s32.totalorder %s278, %s280
      %p287 = scmp.eq.s32.totalorder %s34, 1
      %p288 = por %p286, %p287
      %p289 = scmp.ne.s32.totalorder %s280, %s281
      %p290 = scmp.eq.s32.totalorder %s34, 0
      %p291 = por %p289, %p290
      %p292 = scmp.ne.s32.totalorder %s280, %s281
      %p293 = scmp.eq.s32.totalorder %s35, 1
      %p294 = por %p292, %p293
      %p296 = scmp.ne.s32.totalorder %s281, %s295
      %p297 = scmp.eq.s32.totalorder %s35, 0
      %p298 = por %p296, %p297
      %s300 = sadd.s32 %s299, 1
      %p303 = scmp.eq.s32.totalorder %s29, 1
      %p304 = scmp.ne.s32.totalorder %s299, %s301
      %p305 = scmp.eq.s32.totalorder %s29, 0
      %p306 = por %p304, %p305
      %p307 = scmp.ne.s32.totalorder %s299, %s301
      %p308 = scmp.eq.s32.totalorder %s34, 1
      %p309 = por %p307, %p308
      %p310 = scmp.ne.s32.totalorder %s301, %s302
      %p311 = scmp.eq.s32.totalorder %s34, 0
      %p312 = por %p310, %p311
      %p313 = scmp.ne.s32.totalorder %s301, %s302
      %p314 = scmp.eq.s32.totalorder %s35, 1
      %p315 = por %p313, %p314
      %p317 = scmp.ne.s32.totalorder %s302, %s316
      %p318 = scmp.eq.s32.totalorder %s35, 0
      %p319 = por %p317, %p318
      %s321 = sadd.s32 %s320, 1
      %p324 = scmp.eq.s32.totalorder %s29, 1
      %p325 = scmp.ne.s32.totalorder %s320, %s322
      %p326 = scmp.eq.s32.totalorder %s29, 0
      %p327 = por %p325, %p326
      %p328 = scmp.ne.s32.totalorder %s320, %s322
      %p329 = scmp.eq.s32.totalorder %s34, 1
      %p330 = por %p328, %p329
      %p331 = scmp.ne.s32.totalorder %s322, %s323
      %p332 = scmp.eq.s32.totalorder %s34, 0
      %p333 = por %p331, %p332
      %p334 = scmp.ne.s32.totalorder %s322, %s323
      %p335 = scmp.eq.s32.totalorder %s35, 1
      %p336 = por %p334, %p335
      %p338 = scmp.ne.s32.totalorder %s323, %s337
      %p339 = scmp.eq.s32.totalorder %s35, 0
      %p340 = por %p338, %p339
      %s341 = ssub.s32 %s29, %s36
      %p342 = scmp.eq.s32.totalorder %s341, 0
      %s344 = sadd.s32 %s343, 1
      %s345 = scalar_select %p342, %s343, %s344
      %p348 = pneg %p342
      %p349 = scmp.eq.s32.totalorder %s29, 1
      %p350 = por %p348, %p349
      %p351 = scmp.ne.s32.totalorder %s343, %s346
      %p352 = scmp.eq.s32.totalorder %s29, 0
      %p353 = por %p351, %p352
      %p354 = scmp.ne.s32.totalorder %s343, %s346
      %p355 = scmp.eq.s32.totalorder %s34, 1
      %p356 = por %p354, %p355
      %p357 = scmp.ne.s32.totalorder %s346, %s347
      %p358 = scmp.eq.s32.totalorder %s34, 0
      %p359 = por %p357, %p358
      %p360 = scmp.ne.s32.totalorder %s346, %s347
      %p361 = scmp.eq.s32.totalorder %s35, 1
      %p362 = por %p360, %p361
      %p364 = scmp.ne.s32.totalorder %s347, %s363
      %p365 = scmp.eq.s32.totalorder %s35, 0
      %p366 = por %p364, %p365
      %p367 = scmp.le.s32.totalorder 1, %s29
      %p368 = scmp.lt.s32.totalorder %s29, 3
      %p369 = pnand %p367, %p368
      %p370 = pneg %p369
      // Predicated region
      $region9: #{tpu_custom_call.1} parent=5 // pred_check
        _
      $region10: #{tpu_custom_call.1} parent=5 // pred_check_branch
        %372 = sbr.rel (%p369) target = $region12
      $region11: #{tpu_custom_call.1} parent=5 // pred_region
        %s373 = ssub.s32 %s29, 1
        // Predicated region
        $region13: #{tpu_custom_call.1} parent=11 // pred_check
          %p374 = pneg %p102
        $region14: #{tpu_custom_call.1} parent=11 // pred_check_branch
          %376 = sbr.rel (%p374) target = $region16
        $region15: #{tpu_custom_call.1} parent=11 // pred_region
          _
        $region16: #{tpu_custom_call.1} parent=11 // pred_fallthru
          _
        // Predicated region
        $region17: #{tpu_custom_call.1} parent=11 // pred_check
          %p377 = pneg %p123
        $region18: #{tpu_custom_call.1} parent=11 // pred_check_branch
          %379 = sbr.rel (%p377) target = $region20
        $region19: #{tpu_custom_call.1} parent=11 // pred_region
          %381 = vsyncadd [#allocation3], 0
          %s382 = sshll.u32 %s3, 4
          %s383 = int_to_ptr.hbm [resolvable:$true] %s382
          %s384 = sshll.u32 [#allocation2], 4
          %s385 = int_to_ptr.vmem [resolvable:$true] %s384
          %390 = dma.hbm_to_vmem [thread:$0]  %s383, 384, %s385, [#allocation3], 128, 128, 8
        $region20: #{tpu_custom_call.1} parent=11 // pred_fallthru
          _
        // Predicated region
        $region21: #{tpu_custom_call.1} parent=11 // pred_check
          %p391 = pneg %p144
        $region22: #{tpu_custom_call.1} parent=11 // pred_check_branch
          %393 = sbr.rel (%p391) target = $region24
        $region23: #{tpu_custom_call.1} parent=11 // pred_region
          %395 = vsyncadd [#allocation6], 0
          %s396 = sshll.u32 %s4, 4
          %s397 = int_to_ptr.hbm [resolvable:$true] %s396
          %s398 = sshll.u32 [#allocation5], 4
          %s399 = int_to_ptr.vmem [resolvable:$true] %s398
          %404 = dma.hbm_to_vmem [thread:$0]  %s397, 256, %s399, [#allocation6], 64, 64, 4
        $region24: #{tpu_custom_call.1} parent=11 // pred_fallthru
          _
        // Predicated region
        $region25: #{tpu_custom_call.1} parent=11 // pred_check
          %p405 = pneg %p165
        $region26: #{tpu_custom_call.1} parent=11 // pred_check_branch
          %407 = sbr.rel (%p405) target = $region28
        $region27: #{tpu_custom_call.1} parent=11 // pred_region
          %409 = vsyncadd [#allocation6], 0
          %s410 = sshll.u32 %s5, 4
          %s411 = int_to_ptr.hbm [resolvable:$true] %s410
          %s412 = sshll.u32 [#allocation7], 4
          %s413 = int_to_ptr.vmem [resolvable:$true] %s412
          %418 = dma.hbm_to_vmem [thread:$0]  %s411, 512, %s413, [#allocation6], 128, 128, 8
        $region28: #{tpu_custom_call.1} parent=11 // pred_fallthru
          _
        // Predicated region
        $region29: #{tpu_custom_call.1} parent=11 // pred_check
          %p419 = pneg %p186
        $region30: #{tpu_custom_call.1} parent=11 // pred_check_branch
          %421 = sbr.rel (%p419) target = $region32
        $region31: #{tpu_custom_call.1} parent=11 // pred_region
          %423 = vsyncadd [#allocation9], 0
          %s424 = sshll.u32 %s6, 4
          %s425 = int_to_ptr.hbm [resolvable:$true] %s424
          %s426 = sshll.u32 [#allocation8], 4
          %s427 = int_to_ptr.vmem [resolvable:$true] %s426
          %432 = dma.hbm_to_vmem [thread:$0]  %s425, 256, %s427, [#allocation9], 64, 64, 4
        $region32: #{tpu_custom_call.1} parent=11 // pred_fallthru
          _
        // Predicated region
        $region33: #{tpu_custom_call.1} parent=11 // pred_check
          %p433 = pneg %p207
        $region34: #{tpu_custom_call.1} parent=11 // pred_check_branch
          %435 = sbr.rel (%p433) target = $region36
        $region35: #{tpu_custom_call.1} parent=11 // pred_region
          %437 = vsyncadd [#allocation9], 0
          %s438 = sshll.u32 %s7, 4
          %s439 = int_to_ptr.hbm [resolvable:$true] %s438
          %s440 = sshll.u32 [#allocation10], 4
          %s441 = int_to_ptr.vmem [resolvable:$true] %s440
          %446 = dma.hbm_to_vmem [thread:$0]  %s439, 256, %s441, [#allocation9], 64, 64, 4
        $region36: #{tpu_custom_call.1} parent=11 // pred_fallthru
          _
        // Predicated region
        $region37: #{tpu_custom_call.1} parent=11 // pred_check
          %p447 = pneg %p228
        $region38: #{tpu_custom_call.1} parent=11 // pred_check_branch
          %449 = sbr.rel (%p447) target = $region40
        $region39: #{tpu_custom_call.1} parent=11 // pred_region
          %451 = vsyncadd [#allocation12], 0
          %s452 = sshll.u32 %s8, 4
          %s453 = int_to_ptr.hbm [resolvable:$true] %s452
          %s454 = sshll.u32 [#allocation11], 4
          %s455 = int_to_ptr.vmem [resolvable:$true] %s454
          %460 = dma.hbm_to_vmem [thread:$0]  %s453, 256, %s455, [#allocation12], 64, 64, 4
        $region40: #{tpu_custom_call.1} parent=11 // pred_fallthru
          _
        // Predicated region
        $region41: #{tpu_custom_call.1} parent=11 // pred_check
          %p461 = pneg %p249
        $region42: #{tpu_custom_call.1} parent=11 // pred_check_branch
          %463 = sbr.rel (%p461) target = $region44
        $region43: #{tpu_custom_call.1} parent=11 // pred_region
          _
        $region44: #{tpu_custom_call.1} parent=11 // pred_fallthru
          _
        // Predicated region
        $region45: #{tpu_custom_call.1} parent=11 // pred_check
          %p464 = pneg %p270
        $region46: #{tpu_custom_call.1} parent=11 // pred_check_branch
          %466 = sbr.rel (%p464) target = $region48
        $region47: #{tpu_custom_call.1} parent=11 // pred_region
          %468 = vsyncadd [#allocation12], 0
          %s469 = sshll.u32 %s10, 4
          %s470 = int_to_ptr.hbm [resolvable:$true] %s469
          %s471 = sshll.u32 [#allocation13], 4
          %s472 = int_to_ptr.vmem [resolvable:$true] %s471
          %477 = dma.hbm_to_vmem [thread:$0]  %s470, 256, %s472, [#allocation12], 64, 64, 4
        $region48: #{tpu_custom_call.1} parent=11 // pred_fallthru
          _
        // Predicated region
        $region49: #{tpu_custom_call.1} parent=11 // pred_check
          %p478 = pneg %p291
        $region50: #{tpu_custom_call.1} parent=11 // pred_check_branch
          %480 = sbr.rel (%p478) target = $region52
        $region51: #{tpu_custom_call.1} parent=11 // pred_region
          %482 = vsyncadd [#allocation15], 0
          %s483 = sshll.u32 %s11, 4
          %s484 = int_to_ptr.hbm [resolvable:$true] %s483
          %s485 = sshll.u32 [#allocation14], 4
          %s486 = int_to_ptr.vmem [resolvable:$true] %s485
          %491 = dma.hbm_to_vmem [thread:$0]  %s484, 512, %s486, [#allocation15], 128, 128, 8
        $region52: #{tpu_custom_call.1} parent=11 // pred_fallthru
          _
        // Predicated region
        $region53: #{tpu_custom_call.1} parent=11 // pred_check
          %p492 = pneg %p312
        $region54: #{tpu_custom_call.1} parent=11 // pred_check_branch
          %494 = sbr.rel (%p492) target = $region56
        $region55: #{tpu_custom_call.1} parent=11 // pred_region
          %496 = vsyncadd [#allocation15], 0
          %s497 = sshll.u32 %s12, 4
          %s498 = int_to_ptr.hbm [resolvable:$true] %s497
          %s499 = sshll.u32 [#allocation16], 4
          %s500 = int_to_ptr.vmem [resolvable:$true] %s499
          %505 = dma.hbm_to_vmem [thread:$0]  %s498, 256, %s500, [#allocation15], 64, 64, 4
        $region56: #{tpu_custom_call.1} parent=11 // pred_fallthru
          _
        // Predicated region
        $region57: #{tpu_custom_call.1} parent=11 // pred_check
          %p506 = pneg %p333
        $region58: #{tpu_custom_call.1} parent=11 // pred_check_branch
          %508 = sbr.rel (%p506) target = $region60
        $region59: #{tpu_custom_call.1} parent=11 // pred_region
          %510 = vsyncadd [#allocation18], 0
          %s511 = sshll.u32 %s13, 4
          %s512 = int_to_ptr.hbm [resolvable:$true] %s511
          %s513 = sshll.u32 [#allocation17], 4
          %s514 = int_to_ptr.vmem [resolvable:$true] %s513
          %519 = dma.hbm_to_vmem [thread:$0]  %s512, 256, %s514, [#allocation18], 64, 64, 4
        $region60: #{tpu_custom_call.1} parent=11 // pred_fallthru
          _
      $region12: #{tpu_custom_call.1} parent=5 // pred_fallthru
        _
      %p520 = scmp.lt.s32.totalorder %s29, 2
      // Predicated region
      $region61: #{tpu_custom_call.1} parent=5 // pred_check
        %p521 = pneg %p520
      $region62: #{tpu_custom_call.1} parent=5 // pred_check_branch
        %523 = sbr.rel (%p521) target = $region64
      $region63: #{tpu_custom_call.1} parent=5 // pred_region
        // Predicated region
        $region65: #{tpu_custom_call.1} parent=63 // pred_check
          %p524 = pneg %p49
        $region66: #{tpu_custom_call.1} parent=63 // pred_check_branch
          %526 = sbr.rel (%p524) target = $region68
        $region67: #{tpu_custom_call.1} parent=63 // pred_region
          %p527 = scmp.lt.s32.totalorder %s29, 1
          %s528 = scalar_select %p527, %s29, 1
          %s529 = smul.addr %s528, 2
          %s530 = smul.addr %s529, 8
          %s531 = scalar_lea.vmem %s0, %s530
        $region68: #{tpu_custom_call.1} parent=63 // pred_fallthru
          _
        // Predicated region
        $region69: #{tpu_custom_call.1} parent=63 // pred_check
          %p532 = pneg %p75
        $region70: #{tpu_custom_call.1} parent=63 // pred_check_branch
          %534 = sbr.rel (%p532) target = $region72
        $region71: #{tpu_custom_call.1} parent=63 // pred_region
          %p535 = scmp.lt.s32.totalorder %s29, 1
          %s536 = scalar_select %p535, %s29, 1
          %s537 = smul.addr %s536, 8
          %s538 = scalar_lea.vmem %s1, %s537
        $region72: #{tpu_custom_call.1} parent=63 // pred_fallthru
          _
      $region64: #{tpu_custom_call.1} parent=5 // pred_fallthru
        _
      %p539 = scmp.le.s32.totalorder 1, %s29
      %p540 = scmp.lt.s32.totalorder %s29, 3
      %p541 = pnand %p539, %p540
      %p542 = pneg %p541
      // Predicated region
      $region73: #{tpu_custom_call.1} parent=5 // pred_check
        _
      $region74: #{tpu_custom_call.1} parent=5 // pred_check_branch
        %544 = sbr.rel (%p541) target = $region76
      $region75: #{tpu_custom_call.1} parent=5 // pred_region
        %s545 = ssub.s32 %s29, 1
        // Predicated region
        $region77: #{tpu_custom_call.1} parent=75 // pred_check
          %p546 = pneg %p123
        $region78: #{tpu_custom_call.1} parent=75 // pred_check_branch
          %548 = sbr.rel (%p546) target = $region80
        $region79: #{tpu_custom_call.1} parent=75 // pred_region
          %550 = dma.done [#allocation3], 384
        $region80: #{tpu_custom_call.1} parent=75 // pred_fallthru
          _
        // Predicated region
        $region81: #{tpu_custom_call.1} parent=75 // pred_check
          %p551 = pneg %p144
        $region82: #{tpu_custom_call.1} parent=75 // pred_check_branch
          %553 = sbr.rel (%p551) target = $region84
        $region83: #{tpu_custom_call.1} parent=75 // pred_region
          %555 = dma.done [#allocation6], 256
        $region84: #{tpu_custom_call.1} parent=75 // pred_fallthru
          _
        // Predicated region
        $region85: #{tpu_custom_call.1} parent=75 // pred_check
          %p556 = pneg %p165
        $region86: #{tpu_custom_call.1} parent=75 // pred_check_branch
          %558 = sbr.rel (%p556) target = $region88
        $region87: #{tpu_custom_call.1} parent=75 // pred_region
          %560 = dma.done [#allocation6], 512
        $region88: #{tpu_custom_call.1} parent=75 // pred_fallthru
          _
        // Predicated region
        $region89: #{tpu_custom_call.1} parent=75 // pred_check
          %p561 = pneg %p186
        $region90: #{tpu_custom_call.1} parent=75 // pred_check_branch
          %563 = sbr.rel (%p561) target = $region92
        $region91: #{tpu_custom_call.1} parent=75 // pred_region
          %565 = dma.done [#allocation9], 256
        $region92: #{tpu_custom_call.1} parent=75 // pred_fallthru
          _
        // Predicated region
        $region93: #{tpu_custom_call.1} parent=75 // pred_check
          %p566 = pneg %p207
        $region94: #{tpu_custom_call.1} parent=75 // pred_check_branch
          %568 = sbr.rel (%p566) target = $region96
        $region95: #{tpu_custom_call.1} parent=75 // pred_region
          %570 = dma.done [#allocation9], 256
        $region96: #{tpu_custom_call.1} parent=75 // pred_fallthru
          _
        // Predicated region
        $region97: #{tpu_custom_call.1} parent=75 // pred_check
          %p571 = pneg %p228
        $region98: #{tpu_custom_call.1} parent=75 // pred_check_branch
          %573 = sbr.rel (%p571) target = $region100
        $region99: #{tpu_custom_call.1} parent=75 // pred_region
          %575 = dma.done [#allocation12], 256
        $region100: #{tpu_custom_call.1} parent=75 // pred_fallthru
          _
        // Predicated region
        $region101: #{tpu_custom_call.1} parent=75 // pred_check
          %p576 = pneg %p270
        $region102: #{tpu_custom_call.1} parent=75 // pred_check_branch
          %578 = sbr.rel (%p576) target = $region104
        $region103: #{tpu_custom_call.1} parent=75 // pred_region
          %580 = dma.done [#allocation12], 256
        $region104: #{tpu_custom_call.1} parent=75 // pred_fallthru
          _
        // Predicated region
        $region105: #{tpu_custom_call.1} parent=75 // pred_check
          %p581 = pneg %p291
        $region106: #{tpu_custom_call.1} parent=75 // pred_check_branch
          %583 = sbr.rel (%p581) target = $region108
        $region107: #{tpu_custom_call.1} parent=75 // pred_region
          %585 = dma.done [#allocation15], 512
        $region108: #{tpu_custom_call.1} parent=75 // pred_fallthru
          _
        // Predicated region
        $region109: #{tpu_custom_call.1} parent=75 // pred_check
          %p586 = pneg %p312
        $region110: #{tpu_custom_call.1} parent=75 // pred_check_branch
          %588 = sbr.rel (%p586) target = $region112
        $region111: #{tpu_custom_call.1} parent=75 // pred_region
          %590 = dma.done [#allocation15], 256
        $region112: #{tpu_custom_call.1} parent=75 // pred_fallthru
          _
        // Predicated region
        $region113: #{tpu_custom_call.1} parent=75 // pred_check
          %p591 = pneg %p333
        $region114: #{tpu_custom_call.1} parent=75 // pred_check_branch
          %593 = sbr.rel (%p591) target = $region116
        $region115: #{tpu_custom_call.1} parent=75 // pred_region
          %595 = dma.done [#allocation18], 256
        $region116: #{tpu_custom_call.1} parent=75 // pred_fallthru
          _
        %p596 = scmp.lt.s32.totalorder %s34, 1
        %s597 = scalar_select %p596, %s34, 1
        %s598 = smul.addr %s597, 2
        %s599 = smul.addr %s598, 8
        %s600 = scalar_lea.vmem %s0, %s599
        %p601 = pneg %p55
        %p602 = pneg %p52
        %p603 = scmp.lt.s32.totalorder %s34, 1
        %s604 = scalar_select %p603, %s34, 1
        %s605 = smul.addr %s604, 8
        %s606 = scalar_lea.vmem %s1, %s605
        %p607 = pneg %p81
        %p608 = pneg %p78
        %p609 = pneg %p102
        %p610 = pneg %p99
        %p611 = pneg %p123
        %p612 = pneg %p120
        %p613 = pneg %p144
        %p614 = pneg %p141
        %p615 = pneg %p165
        %p616 = pneg %p162
        %p617 = pneg %p186
        %p618 = pneg %p183
        %p619 = pneg %p207
        %p620 = pneg %p204
        %p621 = pneg %p228
        %p622 = pneg %p225
        %p623 = pneg %p249
        %p624 = pneg %p246
        %p625 = pneg %p270
        %p626 = pneg %p267
        %p627 = pneg %p291
        %p628 = pneg %p288
        %p629 = pneg %p312
        %p630 = pneg %p309
        %p631 = pneg %p333
        %p632 = pneg %p330
        %p633 = pneg %p359
        %p634 = pneg %p356
        %s635 = sand.u32 %s346, 1
        %s636 = scalar_lea.sflag [#allocation4], %s635
        %s637 = sand.u32 %s346, 1
        %s638 = smul.addr %s637, 8
        %s639 = scalar_lea.vmem [#allocation19], %s638
        %p640 = scmp.lt.s32.totalorder %s34, 1
        %s641 = scalar_select %p640, %s34, 1
        %s642 = smul.addr %s641, 2
        %s643 = smul.addr %s642, 8
        %s644 = scalar_lea.vmem %s0, %s643
        %p645 = scmp.lt.s32.totalorder %s34, 1
        %s646 = scalar_select %p645, %s34, 1
        %s647 = smul.addr %s646, 8
        %s648 = scalar_lea.vmem %s1, %s647
        %v650 = vld [vmem:[#allocation2] sm:$0xff]
        %v651 = vld [vmem:[#allocation2 + $0x8] sm:$0xff]
        %v652 = vld [vmem:[#allocation2 + $0x10] sm:$0x1]
        %v653 = vld [vmem:[#allocation2 + $0x11] sm:$0x1]
        %v654 = vld [vmem:[#allocation2 + $0x12] sm:$0x1]
        %v655 = vld [vmem:[#allocation2 + $0x13] sm:$0x1]
        %v656 = vld [vmem:[#allocation2 + $0x14] sm:$0x1]
        %v657 = vld [vmem:[#allocation2 + $0x15] sm:$0x1]
        %v658 = vld [vmem:[#allocation2 + $0x16] sm:$0x1]
        %v659 = vld [vmem:[%s9] sm:$0x1]
        %v660 = vld [vmem:[%s9 + $0x1] sm:$0x1]
        %v661 = vld [vmem:[%s9 + $0x2] sm:$0x1]
        %v662 = vld [vmem:[%s9 + $0x3] sm:$0x1]
        %v663 = vld [vmem:[%s9 + $0x4] sm:$0x1]
        %v664 = vld [vmem:[%s9 + $0x5] sm:$0x1]
        %v665 = vld [vmem:[%s9 + $0x6] sm:$0x1]
        %v666 = vld [vmem:[%s644] sm:$0xff]
        %v667 = vld [vmem:[%s644 + $0x8] sm:$0xff]
        %v668 = vld [vmem:[%s2] sm:$0xf]
        %v669 = vld [vmem:[%s2 + $0x4] sm:$0xf]
        %v670 = vld [vmem:[%s2 + $0x8] sm:$0xf]
        %v671 = vld [vmem:[%s2 + $0xc] sm:$0xf]
        %v672 = vld [vmem:[%s2 + $0x10] sm:$0xf]
        %v673 = vld [vmem:[%s2 + $0x14] sm:$0xf]
        %v674 = vld [vmem:[%s2 + $0x18] sm:$0xf]
        %v675 = vld [vmem:[%s2 + $0x1c] sm:$0xf]
        %v676 = vpack.c.bf16 %v667, %v666
        %v677 = vperm.slane %v652, 0
        %v686 = vunpack.c.l.b16 %v668
        %v687 = vunpack.c.l.b16 %v669
        %v688 = vunpack.c.l.b16 %v670
        %v689 = vunpack.c.l.b16 %v671
        %v690 = vunpack.c.l.b16 %v672
        %v691 = vunpack.c.l.b16 %v673
        %v692 = vunpack.c.l.b16 %v674
        %v693 = vunpack.c.l.b16 %v675
        %v694 = vpack.c.b16 %v687, %v686
        %v695 = vpack.c.b16 %v689, %v688
        %v696 = vpack.c.b16 %v691, %v690
        %v697 = vpack.c.b16 %v693, %v692
        %vm702 = vcmask 523264
        %v704 = vsel %vm702, %v676, 0
        %706 = vmatpush.bf16.msra.mxu0 0
        %707 = vmatpush.bf16.msra.mxu0 0
        %708 = vmatpush.bf16.msra.mxu0 0
        %709 = vmatpush.bf16.msra.mxu0 0
        %710 = vmatpush.bf16.msra.mxu0 %v697
        %711 = vmatpush.bf16.msra.mxu0 %v696
        %712 = vmatpush.bf16.msra.mxu0 %v695
        %713 = vmatpush.bf16.msra.mxu0 %v694
        %714 = vmatmul.bf16.gmra.mxu0 %v704
        %v715 = vpop.f32.mrf.mxu0
        %v716 = vadd.f32 %v677, %v715
        %v717 = vpop.f32.mrf.mxu0
        %v718 = vadd.f32 %v677, %v717
        %719 = vdwg.mxu0
        %v720 = vmax.f32 %v716, 0.0
        %v721 = vmax.f32 %v718, 0.0
        %v722 = vadd.f32 %v720, %v650
        %v723 = vadd.f32 %v721, %v651
        %v724 = vld [vmem:[#allocation5] sm:$0xf]
        %v725 = vld [vmem:[#allocation5 + $0x4] sm:$0xf]
        %v726 = vld [vmem:[#allocation5 + $0x8] sm:$0xf]
        %v727 = vld [vmem:[#allocation5 + $0xc] sm:$0xf]
        %v728 = vpack.c.bf16 %v723, %v722
        %v733 = vunpack.c.l.b16 %v724
        %v734 = vunpack.c.l.b16 %v725
        %v735 = vunpack.c.l.b16 %v726
        %v736 = vunpack.c.l.b16 %v727
        %v737 = vpack.c.b16 %v734, %v733
        %v738 = vpack.c.b16 %v736, %v735
        %vm741 = vcmask 261120
        %v743 = vsel %vm741, %v728, 0
        %745 = vmatpush.bf16.msra.mxu0 0
        %746 = vmatpush.bf16.msra.mxu0 0
        %747 = vmatpush.bf16.msra.mxu0 0
        %748 = vmatpush.bf16.msra.mxu0 0
        %749 = vmatpush.bf16.msra.mxu0 0
        %750 = vmatpush.bf16.msra.mxu0 0
        %751 = vmatpush.bf16.msra.mxu0 %v738
        %752 = vmatpush.bf16.msra.mxu0 %v737
        %753 = vmatmul.bf16.gmra.mxu0 %v743
        %v754 = vpop.f32.mrf.mxu0
        %v755 = vadd.f32 0.0, %v754
        %v756 = vpop.f32.mrf.mxu0
        %v757 = vadd.f32 0.0, %v756
        %758 = vdwg.mxu0
        %v759 = vmul.f32 %v755, 0.35355338
        %v760 = vmul.f32 %v757, 0.35355338
        %v761 = vpack.c.bf16 %v759, %v759
        %v762 = vpack.c.bf16 %v760, %v760
        %v763 = vpack.c.bf16 %v755, %v755
        %v764 = vpack.c.bf16 %v757, %v757
        %v767 = vunpack.c.l.b16 %v761
        %v768 = vunpack.c.l.b16 %v762
        %v769 = vpack.c.b16 %v768, %v767
        %v772 = vunpack.c.l.b16 %v763
        %v773 = vunpack.c.l.b16 %v764
        %v774 = vpack.c.b16 %v773, %v772
        %775 = vrot.lane.b32.xlu0 %v774, 96
        %v776 = vpop.permute.xlu0 %775
        %vm777 = vcmask 64512
        %v779 = vsel %vm777, %v769, 0
        %v782 = vsel %vm777, %v776, 0
        %784 = vmatpush.bf16.xpose.msra.mxu0 0
        %785 = vmatpush.bf16.xpose.msra.mxu0 0
        %786 = vmatpush.bf16.xpose.msra.mxu0 0
        %787 = vmatpush.bf16.xpose.msra.mxu0 0
        %788 = vmatpush.bf16.xpose.msra.mxu0 0
        %789 = vmatpush.bf16.xpose.msra.mxu0 0
        %790 = vmatpush.bf16.xpose.msra.mxu0 0
        %791 = vmatpush.bf16.xpose.msra.mxu0 %v782
        %792 = vmatmul.bf16.gmra.mxu0 %v779
        %v793 = vpop.f32.mrf.mxu0
        %v794 = vadd.f32 0.0, %v793
        %v795 = vpop.f32.mrf.mxu0
        %v796 = vadd.f32 0.0, %v795
        %797 = vdwg.mxu0
        %vm798 = vcmask 130048
        %v799 = vsel %vm798, %v794, -inf
        %800 = vmax.xlane.f32.xlu0 %v799
        %v801 = vpop.xlane.xlu0 %800
        %v802 = vsel %vm798, %v796, -inf
        %803 = vmax.xlane.f32.xlu0 %v802
        %v804 = vpop.xlane.xlu0 %803
        %v805 = vsub.f32 %v794, %v801
        %v806 = vsub.f32 %v796, %v804
        %v807 = vmul.f32 %v805, 1.442695
        %v808 = vpow.pop %v807
        %v809 = vmul.f32 %v806, 1.442695
        %v810 = vpow.pop %v809
        %v811 = vsel %vm798, %v808, 0.0
        %812 = vadd.xlane.f32.xlu0 %v811
        %v813 = vpop.xlane.xlu0 %812
        %v814 = vsel %vm798, %v810, 0.0
        %815 = vadd.xlane.f32.xlu0 %v814
        %v816 = vpop.xlane.xlu0 %815
        %v817 = vrcp.pop %v813
        %v818 = vrcp.pop %v816
        %v819 = vmul.f32 %v808, %v817
        %v820 = vmul.f32 %v810, %v818
        %v821 = vpack.c.bf16 %v819, %v819
        %v822 = vpack.c.bf16 %v820, %v820
        %v825 = vunpack.c.l.b16 %v821
        %v826 = vunpack.c.l.b16 %v822
        %v827 = vpack.c.b16 %v826, %v825
        %828 = vrot.lane.b32.xlu0 %v774, 64
        %v829 = vpop.permute.xlu0 %828
        %v832 = vsel %vm798, %v827, 0
        %834 = vmatpush.bf16.msra.mxu0 0
        %835 = vmatpush.bf16.msra.mxu0 0
        %836 = vmatpush.bf16.msra.mxu0 0
        %837 = vmatpush.bf16.msra.mxu0 0
        %838 = vmatpush.bf16.msra.mxu0 0
        %839 = vmatpush.bf16.msra.mxu0 0
        %840 = vmatpush.bf16.msra.mxu0 0
        %841 = vmatpush.bf16.msra.mxu0 %v829
        %842 = vmatmul.bf16.gmra.mxu0 %v832
        %v843 = vpop.f32.mrf.mxu0
        %v844 = vadd.f32 0.0, %v843
        %v845 = vpop.f32.mrf.mxu0
        %v846 = vadd.f32 0.0, %v845
        %847 = vdwg.mxu0
        %v848 = vld [vmem:[#allocation7] sm:$0xff]
        %v849 = vpack.c.bf16 %v846, %v844
        %v850 = vpack.c.bf16 %v848, %v848
        %851 = vrot.lane.b32.xlu0 %v769, 120
        %v852 = vpop.permute.xlu0 %851
        %853 = vrot.lane.b32.xlu0 %v774, 88
        %v854 = vpop.permute.xlu0 %853
        %v856 = vsel %vm777, %v852, 0
        %v859 = vsel %vm777, %v854, 0
        %861 = vmatpush.bf16.xpose.msra.mxu0 0
        %862 = vmatpush.bf16.xpose.msra.mxu0 0
        %863 = vmatpush.bf16.xpose.msra.mxu0 0
        %864 = vmatpush.bf16.xpose.msra.mxu0 0
        %865 = vmatpush.bf16.xpose.msra.mxu0 0
        %866 = vmatpush.bf16.xpose.msra.mxu0 0
        %867 = vmatpush.bf16.xpose.msra.mxu0 0
        %868 = vmatpush.bf16.xpose.msra.mxu0 %v859
        %869 = vmatmul.bf16.gmra.mxu0 %v856
        %v870 = vpop.f32.mrf.mxu0
        %v871 = vadd.f32 0.0, %v870
        %v872 = vpop.f32.mrf.mxu0
        %v873 = vadd.f32 0.0, %v872
        %874 = vdwg.mxu0
        %v875 = vsel %vm798, %v871, -inf
        %876 = vmax.xlane.f32.xlu0 %v875
        %v877 = vpop.xlane.xlu0 %876
        %v878 = vsel %vm798, %v873, -inf
        %879 = vmax.xlane.f32.xlu0 %v878
        %v880 = vpop.xlane.xlu0 %879
        %v881 = vsub.f32 %v871, %v877
        %v882 = vsub.f32 %v873, %v880
        %v883 = vmul.f32 %v881, 1.442695
        %v884 = vpow.pop %v883
        %v885 = vmul.f32 %v882, 1.442695
        %v886 = vpow.pop %v885
        %v887 = vsel %vm798, %v884, 0.0
        %888 = vadd.xlane.f32.xlu0 %v887
        %v889 = vpop.xlane.xlu0 %888
        %v890 = vsel %vm798, %v886, 0.0
        %891 = vadd.xlane.f32.xlu0 %v890
        %v892 = vpop.xlane.xlu0 %891
        %v893 = vrcp.pop %v889
        %v894 = vrcp.pop %v892
        %v895 = vmul.f32 %v884, %v893
        %v896 = vmul.f32 %v886, %v894
        %v897 = vpack.c.bf16 %v895, %v895
        %v898 = vpack.c.bf16 %v896, %v896
        %v901 = vunpack.c.l.b16 %v897
        %v902 = vunpack.c.l.b16 %v898
        %v903 = vpack.c.b16 %v902, %v901
        %904 = vrot.lane.b32.xlu0 %v774, 56
        %v905 = vpop.permute.xlu0 %904
        %v908 = vsel %vm798, %v903, 0
        %910 = vmatpush.bf16.msra.mxu0 0
        %911 = vmatpush.bf16.msra.mxu0 0
        %912 = vmatpush.bf16.msra.mxu0 0
        %913 = vmatpush.bf16.msra.mxu0 0
        %914 = vmatpush.bf16.msra.mxu0 0
        %915 = vmatpush.bf16.msra.mxu0 0
        %916 = vmatpush.bf16.msra.mxu0 0
        %917 = vmatpush.bf16.msra.mxu0 %v905
        %918 = vmatmul.bf16.gmra.mxu0 %v908
        %v919 = vpop.f32.mrf.mxu0
        %v920 = vadd.f32 0.0, %v919
        %v921 = vpop.f32.mrf.mxu0
        %v922 = vadd.f32 0.0, %v921
        %923 = vdwg.mxu0
        %v924 = vld [vmem:[#allocation7 + $0x8] sm:$0xff]
        %v925 = vpack.c.bf16 %v922, %v920
        %v926 = vpack.c.bf16 %v924, %v924
        %v928 = vsel %vm777, %v925, 0
        %vm930 = vcmask 1043456
        %v932 = vsel %vm930, %v926, 0
        %934 = vmatpush.bf16.msra.mxu0 0
        %935 = vmatpush.bf16.msra.mxu0 0
        %936 = vmatpush.bf16.msra.mxu0 0
        %937 = vmatpush.bf16.msra.mxu0 0
        %938 = vmatpush.bf16.msra.mxu0 0
        %939 = vmatpush.bf16.msra.mxu0 0
        %940 = vmatpush.bf16.msra.mxu0 0
        %941 = vmatpush.bf16.msra.mxu0 %v932
        %942 = vmatmul.bf16.gmra.mxu0 %v928
        %v943 = vpop.f32.mrf.mxu0
        %v944 = vadd.f32 0.0, %v943
        %v945 = vpop.f32.mrf.mxu0
        %v946 = vadd.f32 0.0, %v945
        %947 = vdwg.mxu0
        %v949 = vsel %vm777, %v849, 0
        %v952 = vsel %vm930, %v850, 0
        %954 = vmatpush.bf16.msra.mxu0 0
        %955 = vmatpush.bf16.msra.mxu0 0
        %956 = vmatpush.bf16.msra.mxu0 0
        %957 = vmatpush.bf16.msra.mxu0 0
        %958 = vmatpush.bf16.msra.mxu0 0
        %959 = vmatpush.bf16.msra.mxu0 0
        %960 = vmatpush.bf16.msra.mxu0 0
        %961 = vmatpush.bf16.msra.mxu0 %v952
        %962 = vmatmul.bf16.gmra.mxu0 %v949
        %v963 = vpop.f32.mrf.mxu0
        %v964 = vadd.f32 %v944, %v963
        %v965 = vpop.f32.mrf.mxu0
        %v966 = vadd.f32 %v946, %v965
        %967 = vdwg.mxu0
        %968 = vrot.lane.b32.xlu0 %v769, 112
        %v969 = vpop.permute.xlu0 %968
        %970 = vrot.lane.b32.xlu0 %v774, 80
        %v971 = vpop.permute.xlu0 %970
        %v973 = vsel %vm777, %v969, 0
        %v976 = vsel %vm777, %v971, 0
        %978 = vmatpush.bf16.xpose.msra.mxu0 0
        %979 = vmatpush.bf16.xpose.msra.mxu0 0
        %980 = vmatpush.bf16.xpose.msra.mxu0 0
        %981 = vmatpush.bf16.xpose.msra.mxu0 0
        %982 = vmatpush.bf16.xpose.msra.mxu0 0
        %983 = vmatpush.bf16.xpose.msra.mxu0 0
        %984 = vmatpush.bf16.xpose.msra.mxu0 0
        %985 = vmatpush.bf16.xpose.msra.mxu0 %v976
        %986 = vmatmul.bf16.gmra.mxu0 %v973
        %v987 = vpop.f32.mrf.mxu0
        %v988 = vadd.f32 0.0, %v987
        %v989 = vpop.f32.mrf.mxu0
        %v990 = vadd.f32 0.0, %v989
        %991 = vdwg.mxu0
        %v992 = vsel %vm798, %v988, -inf
        %993 = vmax.xlane.f32.xlu0 %v992
        %v994 = vpop.xlane.xlu0 %993
        %v995 = vsel %vm798, %v990, -inf
        %996 = vmax.xlane.f32.xlu0 %v995
        %v997 = vpop.xlane.xlu0 %996
        %v998 = vsub.f32 %v988, %v994
        %v999 = vsub.f32 %v990, %v997
        %v1000 = vmul.f32 %v998, 1.442695
        %v1001 = vpow.pop %v1000
        %v1002 = vmul.f32 %v999, 1.442695
        %v1003 = vpow.pop %v1002
        %v1004 = vsel %vm798, %v1001, 0.0
        %1005 = vadd.xlane.f32.xlu0 %v1004
        %v1006 = vpop.xlane.xlu0 %1005
        %v1007 = vsel %vm798, %v1003, 0.0
        %1008 = vadd.xlane.f32.xlu0 %v1007
        %v1009 = vpop.xlane.xlu0 %1008
        %v1010 = vrcp.pop %v1006
        %v1011 = vrcp.pop %v1009
        %v1012 = vmul.f32 %v1001, %v1010
        %v1013 = vmul.f32 %v1003, %v1011
        %v1014 = vpack.c.bf16 %v1012, %v1012
        %v1015 = vpack.c.bf16 %v1013, %v1013
        %v1018 = vunpack.c.l.b16 %v1014
        %v1019 = vunpack.c.l.b16 %v1015
        %v1020 = vpack.c.b16 %v1019, %v1018
        %1021 = vrot.lane.b32.xlu0 %v774, 48
        %v1022 = vpop.permute.xlu0 %1021
        %v1025 = vsel %vm798, %v1020, 0
        %1027 = vmatpush.bf16.msra.mxu0 0
        %1028 = vmatpush.bf16.msra.mxu0 0
        %1029 = vmatpush.bf16.msra.mxu0 0
        %1030 = vmatpush.bf16.msra.mxu0 0
        %1031 = vmatpush.bf16.msra.mxu0 0
        %1032 = vmatpush.bf16.msra.mxu0 0
        %1033 = vmatpush.bf16.msra.mxu0 0
        %1034 = vmatpush.bf16.msra.mxu0 %v1022
        %1035 = vmatmul.bf16.gmra.mxu0 %v1025
        %v1036 = vpop.f32.mrf.mxu0
        %v1037 = vadd.f32 0.0, %v1036
        %v1038 = vpop.f32.mrf.mxu0
        %v1039 = vadd.f32 0.0, %v1038
        %1040 = vdwg.mxu0
        %v1041 = vld [vmem:[#allocation7 + $0x10] sm:$0xff]
        %v1042 = vpack.c.bf16 %v1039, %v1037
        %v1043 = vpack.c.bf16 %v1041, %v1041
        %v1045 = vsel %vm777, %v1042, 0
        %v1048 = vsel %vm930, %v1043, 0
        %1050 = vmatpush.bf16.msra.mxu0 0
        %1051 = vmatpush.bf16.msra.mxu0 0
        %1052 = vmatpush.bf16.msra.mxu0 0
        %1053 = vmatpush.bf16.msra.mxu0 0
        %1054 = vmatpush.bf16.msra.mxu0 0
        %1055 = vmatpush.bf16.msra.mxu0 0
        %1056 = vmatpush.bf16.msra.mxu0 0
        %1057 = vmatpush.bf16.msra.mxu0 %v1048
        %1058 = vmatmul.bf16.gmra.mxu0 %v1045
        %v1059 = vpop.f32.mrf.mxu0
        %v1060 = vadd.f32 0.0, %v1059
        %v1061 = vpop.f32.mrf.mxu0
        %v1062 = vadd.f32 0.0, %v1061
        %1063 = vdwg.mxu0
        %v1064 = vadd.f32 %v964, %v1060
        %v1065 = vadd.f32 %v966, %v1062
        %1066 = vrot.lane.b32.xlu0 %v769, 104
        %v1067 = vpop.permute.xlu0 %1066
        %1068 = vrot.lane.b32.xlu0 %v774, 72
        %v1069 = vpop.permute.xlu0 %1068
        %v1071 = vsel %vm777, %v1067, 0
        %v1074 = vsel %vm777, %v1069, 0
        %1076 = vmatpush.bf16.xpose.msra.mxu0 0
        %1077 = vmatpush.bf16.xpose.msra.mxu0 0
        %1078 = vmatpush.bf16.xpose.msra.mxu0 0
        %1079 = vmatpush.bf16.xpose.msra.mxu0 0
        %1080 = vmatpush.bf16.xpose.msra.mxu0 0
        %1081 = vmatpush.bf16.xpose.msra.mxu0 0
        %1082 = vmatpush.bf16.xpose.msra.mxu0 0
        %1083 = vmatpush.bf16.xpose.msra.mxu0 %v1074
        %1084 = vmatmul.bf16.gmra.mxu0 %v1071
        %v1085 = vpop.f32.mrf.mxu0
        %v1086 = vadd.f32 0.0, %v1085
        %v1087 = vpop.f32.mrf.mxu0
        %v1088 = vadd.f32 0.0, %v1087
        %1089 = vdwg.mxu0
        %v1090 = vsel %vm798, %v1086, -inf
        %1091 = vmax.xlane.f32.xlu0 %v1090
        %v1092 = vpop.xlane.xlu0 %1091
        %v1093 = vsel %vm798, %v1088, -inf
        %1094 = vmax.xlane.f32.xlu0 %v1093
        %v1095 = vpop.xlane.xlu0 %1094
        %v1096 = vsub.f32 %v1086, %v1092
        %v1097 = vsub.f32 %v1088, %v1095
        %v1098 = vmul.f32 %v1096, 1.442695
        %v1099 = vpow.pop %v1098
        %v1100 = vmul.f32 %v1097, 1.442695
        %v1101 = vpow.pop %v1100
        %v1102 = vsel %vm798, %v1099, 0.0
        %1103 = vadd.xlane.f32.xlu0 %v1102
        %v1104 = vpop.xlane.xlu0 %1103
        %v1105 = vsel %vm798, %v1101, 0.0
        %1106 = vadd.xlane.f32.xlu0 %v1105
        %v1107 = vpop.xlane.xlu0 %1106
        %v1108 = vrcp.pop %v1104
        %v1109 = vrcp.pop %v1107
        %v1110 = vmul.f32 %v1099, %v1108
        %v1111 = vmul.f32 %v1101, %v1109
        %v1112 = vpack.c.bf16 %v1110, %v1110
        %v1113 = vpack.c.bf16 %v1111, %v1111
        %v1116 = vunpack.c.l.b16 %v1112
        %v1117 = vunpack.c.l.b16 %v1113
        %v1118 = vpack.c.b16 %v1117, %v1116
        %1119 = vrot.lane.b32.xlu0 %v774, 40
        %v1120 = vpop.permute.xlu0 %1119
        %v1123 = vsel %vm798, %v1118, 0
        %1125 = vmatpush.bf16.msra.mxu0 0
        %1126 = vmatpush.bf16.msra.mxu0 0
        %1127 = vmatpush.bf16.msra.mxu0 0
        %1128 = vmatpush.bf16.msra.mxu0 0
        %1129 = vmatpush.bf16.msra.mxu0 0
        %1130 = vmatpush.bf16.msra.mxu0 0
        %1131 = vmatpush.bf16.msra.mxu0 0
        %1132 = vmatpush.bf16.msra.mxu0 %v1120
        %1133 = vmatmul.bf16.gmra.mxu0 %v1123
        %v1134 = vpop.f32.mrf.mxu0
        %v1135 = vadd.f32 0.0, %v1134
        %v1136 = vpop.f32.mrf.mxu0
        %v1137 = vadd.f32 0.0, %v1136
        %1138 = vdwg.mxu0
        %v1139 = vld [vmem:[#allocation7 + $0x18] sm:$0xff]
        %v1140 = vpack.c.bf16 %v1137, %v1135
        %v1141 = vpack.c.bf16 %v1139, %v1139
        %v1143 = vsel %vm777, %v1140, 0
        %v1146 = vsel %vm930, %v1141, 0
        %1148 = vmatpush.bf16.msra.mxu0 0
        %1149 = vmatpush.bf16.msra.mxu0 0
        %1150 = vmatpush.bf16.msra.mxu0 0
        %1151 = vmatpush.bf16.msra.mxu0 0
        %1152 = vmatpush.bf16.msra.mxu0 0
        %1153 = vmatpush.bf16.msra.mxu0 0
        %1154 = vmatpush.bf16.msra.mxu0 0
        %1155 = vmatpush.bf16.msra.mxu0 %v1146
        %1156 = vmatmul.bf16.gmra.mxu0 %v1143
        %v1157 = vpop.f32.mrf.mxu0
        %v1158 = vadd.f32 0.0, %v1157
        %v1159 = vpop.f32.mrf.mxu0
        %v1160 = vadd.f32 0.0, %v1159
        %1161 = vdwg.mxu0
        %v1162 = vadd.f32 %v1064, %v1158
        %v1163 = vadd.f32 %v1065, %v1160
        %v1164 = vadd.f32 %v1162, %v722
        %v1165 = vadd.f32 %v1163, %v723
        %v1166 = vsel %vm741, %v1164, 0.0
        %1167 = vadd.xlane.f32.xlu0 %v1166
        %v1168 = vpop.xlane.xlu0 %1167
        %v1169 = vsel %vm741, %v1165, 0.0
        %1170 = vadd.xlane.f32.xlu0 %v1169
        %v1171 = vpop.xlane.xlu0 %1170
        %v1172 = vrcp.pop 32.0
        %v1173 = vmul.f32 32.0, %v1172
        %v1174 = vsub.f32 1.0, %v1173
        %v1175 = vmul.f32 %v1172, %v1174
        %v1176 = vadd.f32 %v1172, %v1175
        %vm1177 = vweird.f32 %v1172
        %v1178 = vsel %vm1177, %v1172, %v1176
        %v1179 = vmul.f32 %v1168, %v1178
        %v1180 = vmul.f32 %v1171, %v1178
        %v1181 = vsub.f32 %v1164, %v1179
        %v1182 = vsub.f32 %v1165, %v1180
        %v1183 = vmul.f32 %v1181, %v1181
        %v1184 = vmul.f32 %v1182, %v1182
        %v1185 = vsel %vm741, %v1183, 0.0
        %1186 = vadd.xlane.f32.xlu0 %v1185
        %v1187 = vpop.xlane.xlu0 %1186
        %v1188 = vsel %vm741, %v1184, 0.0
        %1189 = vadd.xlane.f32.xlu0 %v1188
        %v1190 = vpop.xlane.xlu0 %1189
        %v1191 = vmul.f32 %v1187, %v1178
        %v1192 = vmul.f32 %v1190, %v1178
        %v1193 = vadd.f32 %v1191, 1e-06
        %v1194 = vadd.f32 %v1192, 1e-06
        %v1195 = vrsqrt.pop %v1193
        %v1196 = vmul.f32 %v1195, %v1193
        %v1197 = vmul.f32 %v1196, %v1195
        %v1198 = vmul.f32 0.5, %v1197
        %v1199 = vsub.f32 1.5, %v1198
        %v1200 = vmul.f32 %v1195, %v1199
        %vm1201 = vweird.f32 %v1193
        %vm1202 = vweird.f32 %v1195
        %vm1203 = vmor %vm1201, %vm1202
        %v1204 = vsel %vm1203, %v1195, %v1200
        %v1205 = vrsqrt.pop %v1194
        %v1206 = vmul.f32 %v1205, %v1194
        %v1207 = vmul.f32 %v1206, %v1205
        %v1208 = vmul.f32 0.5, %v1207
        %v1209 = vsub.f32 1.5, %v1208
        %v1210 = vmul.f32 %v1205, %v1209
        %vm1211 = vweird.f32 %v1194
        %vm1212 = vweird.f32 %v1205
        %vm1213 = vmor %vm1211, %vm1212
        %v1214 = vsel %vm1213, %v1205, %v1210
        %v1215 = vmul.f32 %v1181, %v1204
        %v1216 = vmul.f32 %v1182, %v1214
        %v1217 = vperm.slane %v653, 0
        %v1218 = vmul.f32 %v1215, %v1217
        %v1219 = vmul.f32 %v1216, %v1217
        %v1220 = vperm.slane %v654, 0
        %v1221 = vadd.f32 %v1218, %v1220
        %v1222 = vadd.f32 %v1219, %v1220
        %v1223 = vld [vmem:[#allocation8] sm:$0xf]
        %v1224 = vld [vmem:[#allocation8 + $0x4] sm:$0xf]
        %v1225 = vld [vmem:[#allocation8 + $0x8] sm:$0xf]
        %v1226 = vld [vmem:[#allocation8 + $0xc] sm:$0xf]
        %v1227 = vpack.c.bf16 %v1222, %v1221
        %v1228 = vperm.slane %v655, 0
        %v1233 = vunpack.c.l.b16 %v1223
        %v1234 = vunpack.c.l.b16 %v1224
        %v1235 = vunpack.c.l.b16 %v1225
        %v1236 = vunpack.c.l.b16 %v1226
        %v1237 = vpack.c.b16 %v1234, %v1233
        %v1238 = vpack.c.b16 %v1236, %v1235
        %v1242 = vsel %vm741, %v1227, 0
        %1244 = vmatpush.bf16.msra.mxu0 0
        %1245 = vmatpush.bf16.msra.mxu0 0
        %1246 = vmatpush.bf16.msra.mxu0 0
        %1247 = vmatpush.bf16.msra.mxu0 0
        %1248 = vmatpush.bf16.msra.mxu0 0
        %1249 = vmatpush.bf16.msra.mxu0 0
        %1250 = vmatpush.bf16.msra.mxu0 %v1238
        %1251 = vmatpush.bf16.msra.mxu0 %v1237
        %1252 = vmatmul.bf16.gmra.mxu0 %v1242
        %v1253 = vpop.f32.mrf.mxu0
        %v1254 = vadd.f32 %v1228, %v1253
        %v1255 = vpop.f32.mrf.mxu0
        %v1256 = vadd.f32 %v1228, %v1255
        %1257 = vdwg.mxu0
        %v1258 = vmax.f32 %v1254, 0.0
        %v1259 = vmax.f32 %v1256, 0.0
        %v1260 = vld [vmem:[#allocation10] sm:$0xf]
        %v1261 = vld [vmem:[#allocation10 + $0x4] sm:$0xf]
        %v1262 = vld [vmem:[#allocation10 + $0x8] sm:$0xf]
        %v1263 = vld [vmem:[#allocation10 + $0xc] sm:$0xf]
        %v1264 = vpack.c.bf16 %v1259, %v1258
        %v1265 = vperm.slane %v656, 0
        %v1270 = vunpack.c.l.b16 %v1260
        %v1271 = vunpack.c.l.b16 %v1261
        %v1272 = vunpack.c.l.b16 %v1262
        %v1273 = vunpack.c.l.b16 %v1263
        %v1274 = vpack.c.b16 %v1271, %v1270
        %v1275 = vpack.c.b16 %v1273, %v1272
        %v1279 = vsel %vm741, %v1264, 0
        %1281 = vmatpush.bf16.msra.mxu0 0
        %1282 = vmatpush.bf16.msra.mxu0 0
        %1283 = vmatpush.bf16.msra.mxu0 0
        %1284 = vmatpush.bf16.msra.mxu0 0
        %1285 = vmatpush.bf16.msra.mxu0 0
        %1286 = vmatpush.bf16.msra.mxu0 0
        %1287 = vmatpush.bf16.msra.mxu0 %v1275
        %1288 = vmatpush.bf16.msra.mxu0 %v1274
        %1289 = vmatmul.bf16.gmra.mxu0 %v1279
        %v1290 = vpop.f32.mrf.mxu0
        %v1291 = vadd.f32 %v1265, %v1290
        %v1292 = vpop.f32.mrf.mxu0
        %v1293 = vadd.f32 %v1265, %v1292
        %1294 = vdwg.mxu0
        %v1295 = vadd.f32 %v1291, %v1221
        %v1296 = vadd.f32 %v1293, %v1222
        %v1297 = vsel %vm741, %v1295, 0.0
        %1298 = vadd.xlane.f32.xlu0 %v1297
        %v1299 = vpop.xlane.xlu0 %1298
        %v1300 = vsel %vm741, %v1296, 0.0
        %1301 = vadd.xlane.f32.xlu0 %v1300
        %v1302 = vpop.xlane.xlu0 %1301
        %v1303 = vmul.f32 %v1299, %v1178
        %v1304 = vmul.f32 %v1302, %v1178
        %v1305 = vsub.f32 %v1295, %v1303
        %v1306 = vsub.f32 %v1296, %v1304
        %v1307 = vmul.f32 %v1305, %v1305
        %v1308 = vmul.f32 %v1306, %v1306
        %v1309 = vsel %vm741, %v1307, 0.0
        %1310 = vadd.xlane.f32.xlu0 %v1309
        %v1311 = vpop.xlane.xlu0 %1310
        %v1312 = vsel %vm741, %v1308, 0.0
        %1313 = vadd.xlane.f32.xlu0 %v1312
        %v1314 = vpop.xlane.xlu0 %1313
        %v1315 = vmul.f32 %v1311, %v1178
        %v1316 = vmul.f32 %v1314, %v1178
        %v1317 = vadd.f32 %v1315, 1e-06
        %v1318 = vadd.f32 %v1316, 1e-06
        %v1319 = vrsqrt.pop %v1317
        %v1320 = vmul.f32 %v1319, %v1317
        %v1321 = vmul.f32 %v1320, %v1319
        %v1322 = vmul.f32 0.5, %v1321
        %v1323 = vsub.f32 1.5, %v1322
        %v1324 = vmul.f32 %v1319, %v1323
        %vm1325 = vweird.f32 %v1317
        %vm1326 = vweird.f32 %v1319
        %vm1327 = vmor %vm1325, %vm1326
        %v1328 = vsel %vm1327, %v1319, %v1324
        %v1329 = vrsqrt.pop %v1318
        %v1330 = vmul.f32 %v1329, %v1318
        %v1331 = vmul.f32 %v1330, %v1329
        %v1332 = vmul.f32 0.5, %v1331
        %v1333 = vsub.f32 1.5, %v1332
        %v1334 = vmul.f32 %v1329, %v1333
        %vm1335 = vweird.f32 %v1318
        %vm1336 = vweird.f32 %v1329
        %vm1337 = vmor %vm1335, %vm1336
        %v1338 = vsel %vm1337, %v1329, %v1334
        %v1339 = vmul.f32 %v1305, %v1328
        %v1340 = vmul.f32 %v1306, %v1338
        %v1341 = vperm.slane %v657, 0
        %v1342 = vmul.f32 %v1339, %v1341
        %v1343 = vmul.f32 %v1340, %v1341
        %v1344 = vperm.slane %v658, 0
        %v1345 = vadd.f32 %v1342, %v1344
        %v1346 = vadd.f32 %v1343, %v1344
        %v1347 = vld [vmem:[#allocation11] sm:$0xf]
        %v1348 = vld [vmem:[#allocation11 + $0x4] sm:$0xf]
        %v1349 = vld [vmem:[#allocation11 + $0x8] sm:$0xf]
        %v1350 = vld [vmem:[#allocation11 + $0xc] sm:$0xf]
        %v1351 = vpack.c.bf16 %v1346, %v1345
        %v1352 = vperm.slane %v659, 0
        %v1357 = vunpack.c.l.b16 %v1347
        %v1358 = vunpack.c.l.b16 %v1348
        %v1359 = vunpack.c.l.b16 %v1349
        %v1360 = vunpack.c.l.b16 %v1350
        %v1361 = vpack.c.b16 %v1358, %v1357
        %v1362 = vpack.c.b16 %v1360, %v1359
        %v1366 = vsel %vm741, %v1351, 0
        %1368 = vmatpush.bf16.msra.mxu0 0
        %1369 = vmatpush.bf16.msra.mxu0 0
        %1370 = vmatpush.bf16.msra.mxu0 0
        %1371 = vmatpush.bf16.msra.mxu0 0
        %1372 = vmatpush.bf16.msra.mxu0 0
        %1373 = vmatpush.bf16.msra.mxu0 0
        %1374 = vmatpush.bf16.msra.mxu0 %v1362
        %1375 = vmatpush.bf16.msra.mxu0 %v1361
        %1376 = vmatmul.bf16.gmra.mxu0 %v1366
        %v1377 = vpop.f32.mrf.mxu0
        %v1378 = vadd.f32 %v1352, %v1377
        %v1379 = vpop.f32.mrf.mxu0
        %v1380 = vadd.f32 %v1352, %v1379
        %1381 = vdwg.mxu0
        %v1382 = vld [vmem:[%s648] sm:$0xff]
        %v1383 = vld [vmem:[#allocation13] sm:$0xf]
        %v1384 = vld [vmem:[#allocation13 + $0x4] sm:$0xf]
        %v1385 = vld [vmem:[#allocation13 + $0x8] sm:$0xf]
        %v1386 = vld [vmem:[#allocation13 + $0xc] sm:$0xf]
        %v1387 = vpack.c.bf16 %v1382, %v1382
        %v1392 = vunpack.c.l.b16 %v1383
        %v1393 = vunpack.c.l.b16 %v1384
        %v1394 = vunpack.c.l.b16 %v1385
        %v1395 = vunpack.c.l.b16 %v1386
        %v1396 = vpack.c.b16 %v1393, %v1392
        %v1397 = vpack.c.b16 %v1395, %v1394
        %v1401 = vsel %vm741, %v1387, 0
        %1403 = vmatpush.bf16.msra.mxu0 0
        %1404 = vmatpush.bf16.msra.mxu0 0
        %1405 = vmatpush.bf16.msra.mxu0 0
        %1406 = vmatpush.bf16.msra.mxu0 0
        %1407 = vmatpush.bf16.msra.mxu0 0
        %1408 = vmatpush.bf16.msra.mxu0 0
        %1409 = vmatpush.bf16.msra.mxu0 %v1397
        %1410 = vmatpush.bf16.msra.mxu0 %v1396
        %1411 = vmatmul.bf16.gmra.mxu0 %v1401
        %v1412 = vpop.f32.mrf.mxu0
        %v1413 = vadd.f32 0.0, %v1412
        %v1414 = vpop.f32.mrf.mxu0
        %1415 = vdwg.mxu0
        %v1416 = vpack.c.bf16 %v1380, %v1378
        %v1418 = vsel %vm741, %v1416, 0
        %1420 = vmatpush.bf16.msra.mxu0 0
        %1421 = vmatpush.bf16.msra.mxu0 0
        %1422 = vmatpush.bf16.msra.mxu0 0
        %1423 = vmatpush.bf16.msra.mxu0 0
        %1424 = vmatpush.bf16.msra.mxu0 0
        %1425 = vmatpush.bf16.msra.mxu0 0
        %1426 = vmatpush.bf16.msra.mxu0 %v1397
        %1427 = vmatpush.bf16.msra.mxu0 %v1396
        %1428 = vmatmul.bf16.gmra.mxu0 %v1418
        %v1429 = vpop.f32.mrf.mxu0
        %v1430 = vadd.f32 0.0, %v1429
        %v1431 = vpop.f32.mrf.mxu0
        %v1432 = vadd.f32 0.0, %v1431
        %1433 = vdwg.mxu0
        %v1434 = vmul.f32 %v1413, 0.35355338
        %1436 = vrot.lane.b32.xlu0 %v1413, 96
        %v1437 = vpop.permute.xlu0 %1436
        %v1439 = vmul.f32 %v1434, %v1437
        %v1440 = vsel %vm777, %v1439, 0.0
        %1441 = vadd.xlane.f32.xlu0 %v1440
        %v1442 = vpop.xlane.xlu0 %1441
        %v1443 = vpack.c.bf16 %v1434, %v1434
        %v1444 = vpack.c.bf16 %v1430, %v1430
        %v1445 = vpack.c.bf16 %v1432, %v1432
        %v1448 = vunpack.c.l.b16 %v1444
        %v1449 = vunpack.c.l.b16 %v1445
        %v1450 = vpack.c.b16 %v1449, %v1448
        %1451 = vrot.lane.b32.xlu0 %v1450, 96
        %v1452 = vpop.permute.xlu0 %1451
        %v1454 = vsel %vm777, %v1443, 0
        %v1457 = vsel %vm777, %v1452, 0
        %1459 = vmatpush.bf16.xpose.msra.mxu0 0
        %1460 = vmatpush.bf16.xpose.msra.mxu0 0
        %1461 = vmatpush.bf16.xpose.msra.mxu0 0
        %1462 = vmatpush.bf16.xpose.msra.mxu0 0
        %1463 = vmatpush.bf16.xpose.msra.mxu0 0
        %1464 = vmatpush.bf16.xpose.msra.mxu0 0
        %1465 = vmatpush.bf16.xpose.msra.mxu0 0
        %1466 = vmatpush.bf16.xpose.msra.mxu0 %v1457
        %1467 = vmatmul.bf16.gmra.mxu0 %v1454
        %v1468 = vpop.f32.mrf.mxu0
        %v1469 = vadd.f32 0.0, %v1468
        %v1470 = vpop.f32.mrf.mxu0
        %1471 = vdwg.mxu0
        %v1472 = vsel %vm798, %v1469, -inf
        %1473 = vmax.xlane.f32.xlu0 %v1472
        %v1474 = vpop.xlane.xlu0 %1473
        %v1475 = vmax.f32 %v1474, %v1442
        %v1476 = vsub.f32 %v1442, %v1475
        %v1477 = vmul.f32 %v1476, 1.442695
        %v1478 = vpow.pop %v1477
        %v1479 = vsub.f32 %v1469, %v1475
        %v1480 = vmul.f32 %v1479, 1.442695
        %v1481 = vpow.pop %v1480
        %v1482 = vsel %vm798, %v1481, 0.0
        %1483 = vadd.xlane.f32.xlu0 %v1482
        %v1484 = vpop.xlane.xlu0 %1483
        %v1485 = vadd.f32 %v1478, %v1484
        %v1486 = vrcp.pop %v1485
        %v1487 = vmul.f32 %v1478, %v1413
        %v1488 = vpack.c.bf16 %v1481, %v1481
        %1489 = vrot.lane.b32.xlu0 %v1450, 64
        %v1490 = vpop.permute.xlu0 %1489
        %v1493 = vsel %vm798, %v1488, 0
        %1495 = vmatpush.bf16.msra.mxu0 0
        %1496 = vmatpush.bf16.msra.mxu0 0
        %1497 = vmatpush.bf16.msra.mxu0 0
        %1498 = vmatpush.bf16.msra.mxu0 0
        %1499 = vmatpush.bf16.msra.mxu0 0
        %1500 = vmatpush.bf16.msra.mxu0 0
        %1501 = vmatpush.bf16.msra.mxu0 0
        %1502 = vmatpush.bf16.msra.mxu0 %v1490
        %1503 = vmatmul.bf16.gmra.mxu0 %v1493
        %v1504 = vpop.f32.mrf.mxu0
        %v1505 = vadd.f32 0.0, %v1504
        %v1506 = vpop.f32.mrf.mxu0
        %1507 = vdwg.mxu0
        %1509 = vrot.lane.b32.xlu0 %v1505, 64
        %v1510 = vpop.permute.xlu0 %1509
        %v1512 = vadd.f32 %v1487, %v1510
        %v1513 = vmul.f32 %v1512, %v1486
        %v1514 = vld [vmem:[#allocation14] sm:$0xff]
        %v1515 = vpack.c.bf16 %v1513, %v1513
        %v1516 = vpack.c.bf16 %v1514, %v1514
        %1518 = vrot.lane.b32.xlu0 %v1439, 120
        %v1519 = vpop.permute.xlu0 %1518
        %v1521 = vsel %vm777, %v1519, 0.0
        %1522 = vadd.xlane.f32.xlu0 %v1521
        %v1523 = vpop.xlane.xlu0 %1522
        %v1525 = vunpack.c.l.b16 %v1443
        %v1526 = vpack.c.b16 %v1525, %v1525
        %1527 = vrot.lane.b32.xlu0 %v1526, 120
        %v1528 = vpop.permute.xlu0 %1527
        %1529 = vrot.lane.b32.xlu0 %v1450, 88
        %v1530 = vpop.permute.xlu0 %1529
        %v1532 = vsel %vm777, %v1528, 0
        %v1535 = vsel %vm777, %v1530, 0
        %1537 = vmatpush.bf16.xpose.msra.mxu0 0
        %1538 = vmatpush.bf16.xpose.msra.mxu0 0
        %1539 = vmatpush.bf16.xpose.msra.mxu0 0
        %1540 = vmatpush.bf16.xpose.msra.mxu0 0
        %1541 = vmatpush.bf16.xpose.msra.mxu0 0
        %1542 = vmatpush.bf16.xpose.msra.mxu0 0
        %1543 = vmatpush.bf16.xpose.msra.mxu0 0
        %1544 = vmatpush.bf16.xpose.msra.mxu0 %v1535
        %1545 = vmatmul.bf16.gmra.mxu0 %v1532
        %v1546 = vpop.f32.mrf.mxu0
        %v1547 = vadd.f32 0.0, %v1546
        %v1548 = vpop.f32.mrf.mxu0
        %1549 = vdwg.mxu0
        %v1550 = vsel %vm798, %v1547, -inf
        %1551 = vmax.xlane.f32.xlu0 %v1550
        %v1552 = vpop.xlane.xlu0 %1551
        %v1553 = vmax.f32 %v1552, %v1523
        %v1554 = vsub.f32 %v1523, %v1553
        %v1555 = vmul.f32 %v1554, 1.442695
        %v1556 = vpow.pop %v1555
        %v1557 = vsub.f32 %v1547, %v1553
        %v1558 = vmul.f32 %v1557, 1.442695
        %v1559 = vpow.pop %v1558
        %v1560 = vsel %vm798, %v1559, 0.0
        %1561 = vadd.xlane.f32.xlu0 %v1560
        %v1562 = vpop.xlane.xlu0 %1561
        %v1563 = vadd.f32 %v1556, %v1562
        %v1564 = vrcp.pop %v1563
        %v1565 = vmul.f32 %v1556, %v1413
        %v1566 = vpack.c.bf16 %v1559, %v1559
        %1567 = vrot.lane.b32.xlu0 %v1450, 56
        %v1568 = vpop.permute.xlu0 %1567
        %v1571 = vsel %vm798, %v1566, 0
        %1573 = vmatpush.bf16.msra.mxu0 0
        %1574 = vmatpush.bf16.msra.mxu0 0
        %1575 = vmatpush.bf16.msra.mxu0 0
        %1576 = vmatpush.bf16.msra.mxu0 0
        %1577 = vmatpush.bf16.msra.mxu0 0
        %1578 = vmatpush.bf16.msra.mxu0 0
        %1579 = vmatpush.bf16.msra.mxu0 0
        %1580 = vmatpush.bf16.msra.mxu0 %v1568
        %1581 = vmatmul.bf16.gmra.mxu0 %v1571
        %v1582 = vpop.f32.mrf.mxu0
        %v1583 = vadd.f32 0.0, %v1582
        %v1584 = vpop.f32.mrf.mxu0
        %1585 = vdwg.mxu0
        %1587 = vrot.lane.b32.xlu0 %v1583, 72
        %v1588 = vpop.permute.xlu0 %1587
        %v1590 = vadd.f32 %v1565, %v1588
        %v1591 = vmul.f32 %v1590, %v1564
        %v1592 = vld [vmem:[#allocation14 + $0x8] sm:$0xff]
        %v1593 = vpack.c.bf16 %v1591, %v1591
        %v1594 = vpack.c.bf16 %v1592, %v1592
        %1596 = vrot.lane.b32.xlu0 %v1593, 56
        %v1597 = vpop.permute.xlu0 %1596
        %v1599 = vsel %vm777, %v1597, 0
        %v1602 = vsel %vm930, %v1594, 0
        %1604 = vmatpush.bf16.msra.mxu0 0
        %1605 = vmatpush.bf16.msra.mxu0 0
        %1606 = vmatpush.bf16.msra.mxu0 0
        %1607 = vmatpush.bf16.msra.mxu0 0
        %1608 = vmatpush.bf16.msra.mxu0 0
        %1609 = vmatpush.bf16.msra.mxu0 0
        %1610 = vmatpush.bf16.msra.mxu0 0
        %1611 = vmatpush.bf16.msra.mxu0 %v1602
        %1612 = vmatmul.bf16.gmra.mxu0 %v1599
        %v1613 = vpop.f32.mrf.mxu0
        %v1614 = vadd.f32 0.0, %v1613
        %v1615 = vpop.f32.mrf.mxu0
        %1616 = vdwg.mxu0
        %1618 = vrot.lane.b32.xlu0 %v1515, 64
        %v1619 = vpop.permute.xlu0 %1618
        %v1621 = vsel %vm777, %v1619, 0
        %v1624 = vsel %vm930, %v1516, 0
        %1626 = vmatpush.bf16.msra.mxu0 0
        %1627 = vmatpush.bf16.msra.mxu0 0
        %1628 = vmatpush.bf16.msra.mxu0 0
        %1629 = vmatpush.bf16.msra.mxu0 0
        %1630 = vmatpush.bf16.msra.mxu0 0
        %1631 = vmatpush.bf16.msra.mxu0 0
        %1632 = vmatpush.bf16.msra.mxu0 0
        %1633 = vmatpush.bf16.msra.mxu0 %v1624
        %1634 = vmatmul.bf16.gmra.mxu0 %v1621
        %v1635 = vpop.f32.mrf.mxu0
        %v1636 = vadd.f32 %v1614, %v1635
        %v1637 = vpop.f32.mrf.mxu0
        %1638 = vdwg.mxu0
        %1639 = vrot.lane.b32.xlu0 %v1439, 112
        %v1640 = vpop.permute.xlu0 %1639
        %v1642 = vsel %vm777, %v1640, 0.0
        %1643 = vadd.xlane.f32.xlu0 %v1642
        %v1644 = vpop.xlane.xlu0 %1643
        %1645 = vrot.lane.b32.xlu0 %v1526, 112
        %v1646 = vpop.permute.xlu0 %1645
        %1647 = vrot.lane.b32.xlu0 %v1450, 80
        %v1648 = vpop.permute.xlu0 %1647
        %v1650 = vsel %vm777, %v1646, 0
        %v1653 = vsel %vm777, %v1648, 0
        %1655 = vmatpush.bf16.xpose.msra.mxu0 0
        %1656 = vmatpush.bf16.xpose.msra.mxu0 0
        %1657 = vmatpush.bf16.xpose.msra.mxu0 0
        %1658 = vmatpush.bf16.xpose.msra.mxu0 0
        %1659 = vmatpush.bf16.xpose.msra.mxu0 0
        %1660 = vmatpush.bf16.xpose.msra.mxu0 0
        %1661 = vmatpush.bf16.xpose.msra.mxu0 0
        %1662 = vmatpush.bf16.xpose.msra.mxu0 %v1653
        %1663 = vmatmul.bf16.gmra.mxu0 %v1650
        %v1664 = vpop.f32.mrf.mxu0
        %v1665 = vadd.f32 0.0, %v1664
        %v1666 = vpop.f32.mrf.mxu0
        %1667 = vdwg.mxu0
        %v1668 = vsel %vm798, %v1665, -inf
        %1669 = vmax.xlane.f32.xlu0 %v1668
        %v1670 = vpop.xlane.xlu0 %1669
        %v1671 = vmax.f32 %v1670, %v1644
        %v1672 = vsub.f32 %v1644, %v1671
        %v1673 = vmul.f32 %v1672, 1.442695
        %v1674 = vpow.pop %v1673
        %v1675 = vsub.f32 %v1665, %v1671
        %v1676 = vmul.f32 %v1675, 1.442695
        %v1677 = vpow.pop %v1676
        %v1678 = vsel %vm798, %v1677, 0.0
        %1679 = vadd.xlane.f32.xlu0 %v1678
        %v1680 = vpop.xlane.xlu0 %1679
        %v1681 = vadd.f32 %v1674, %v1680
        %v1682 = vrcp.pop %v1681
        %v1683 = vmul.f32 %v1674, %v1413
        %v1684 = vpack.c.bf16 %v1677, %v1677
        %1685 = vrot.lane.b32.xlu0 %v1450, 48
        %v1686 = vpop.permute.xlu0 %1685
        %v1689 = vsel %vm798, %v1684, 0
        %1691 = vmatpush.bf16.msra.mxu0 0
        %1692 = vmatpush.bf16.msra.mxu0 0
        %1693 = vmatpush.bf16.msra.mxu0 0
        %1694 = vmatpush.bf16.msra.mxu0 0
        %1695 = vmatpush.bf16.msra.mxu0 0
        %1696 = vmatpush.bf16.msra.mxu0 0
        %1697 = vmatpush.bf16.msra.mxu0 0
        %1698 = vmatpush.bf16.msra.mxu0 %v1686
        %1699 = vmatmul.bf16.gmra.mxu0 %v1689
        %v1700 = vpop.f32.mrf.mxu0
        %v1701 = vadd.f32 0.0, %v1700
        %v1702 = vpop.f32.mrf.mxu0
        %1703 = vdwg.mxu0
        %1705 = vrot.lane.b32.xlu0 %v1701, 80
        %v1706 = vpop.permute.xlu0 %1705
        %v1708 = vadd.f32 %v1683, %v1706
        %v1709 = vmul.f32 %v1708, %v1682
        %v1710 = vld [vmem:[#allocation14 + $0x10] sm:$0xff]
        %v1711 = vpack.c.bf16 %v1709, %v1709
        %v1712 = vpack.c.bf16 %v1710, %v1710
        %1714 = vrot.lane.b32.xlu0 %v1711, 48
        %v1715 = vpop.permute.xlu0 %1714
        %v1717 = vsel %vm777, %v1715, 0
        %v1720 = vsel %vm930, %v1712, 0
        %1722 = vmatpush.bf16.msra.mxu0 0
        %1723 = vmatpush.bf16.msra.mxu0 0
        %1724 = vmatpush.bf16.msra.mxu0 0
        %1725 = vmatpush.bf16.msra.mxu0 0
        %1726 = vmatpush.bf16.msra.mxu0 0
        %1727 = vmatpush.bf16.msra.mxu0 0
        %1728 = vmatpush.bf16.msra.mxu0 0
        %1729 = vmatpush.bf16.msra.mxu0 %v1720
        %1730 = vmatmul.bf16.gmra.mxu0 %v1717
        %v1731 = vpop.f32.mrf.mxu0
        %v1732 = vadd.f32 0.0, %v1731
        %v1733 = vpop.f32.mrf.mxu0
        %1734 = vdwg.mxu0
        %v1735 = vadd.f32 %v1636, %v1732
        %1736 = vrot.lane.b32.xlu0 %v1439, 104
        %v1737 = vpop.permute.xlu0 %1736
        %v1739 = vsel %vm777, %v1737, 0.0
        %1740 = vadd.xlane.f32.xlu0 %v1739
        %v1741 = vpop.xlane.xlu0 %1740
        %1742 = vrot.lane.b32.xlu0 %v1526, 104
        %v1743 = vpop.permute.xlu0 %1742
        %1744 = vrot.lane.b32.xlu0 %v1450, 72
        %v1745 = vpop.permute.xlu0 %1744
        %v1747 = vsel %vm777, %v1743, 0
        %v1750 = vsel %vm777, %v1745, 0
        %1752 = vmatpush.bf16.xpose.msra.mxu0 0
        %1753 = vmatpush.bf16.xpose.msra.mxu0 0
        %1754 = vmatpush.bf16.xpose.msra.mxu0 0
        %1755 = vmatpush.bf16.xpose.msra.mxu0 0
        %1756 = vmatpush.bf16.xpose.msra.mxu0 0
        %1757 = vmatpush.bf16.xpose.msra.mxu0 0
        %1758 = vmatpush.bf16.xpose.msra.mxu0 0
        %1759 = vmatpush.bf16.xpose.msra.mxu0 %v1750
        %1760 = vmatmul.bf16.gmra.mxu0 %v1747
        %v1761 = vpop.f32.mrf.mxu0
        %v1762 = vadd.f32 0.0, %v1761
        %v1763 = vpop.f32.mrf.mxu0
        %1764 = vdwg.mxu0
        %v1765 = vsel %vm798, %v1762, -inf
        %1766 = vmax.xlane.f32.xlu0 %v1765
        %v1767 = vpop.xlane.xlu0 %1766
        %v1768 = vmax.f32 %v1767, %v1741
        %v1769 = vsub.f32 %v1741, %v1768
        %v1770 = vmul.f32 %v1769, 1.442695
        %v1771 = vpow.pop %v1770
        %v1772 = vsub.f32 %v1762, %v1768
        %v1773 = vmul.f32 %v1772, 1.442695
        %v1774 = vpow.pop %v1773
        %v1775 = vsel %vm798, %v1774, 0.0
        %1776 = vadd.xlane.f32.xlu0 %v1775
        %v1777 = vpop.xlane.xlu0 %1776
        %v1778 = vadd.f32 %v1771, %v1777
        %v1779 = vrcp.pop %v1778
        %v1780 = vmul.f32 %v1771, %v1413
        %v1781 = vpack.c.bf16 %v1774, %v1774
        %1782 = vrot.lane.b32.xlu0 %v1450, 40
        %v1783 = vpop.permute.xlu0 %1782
        %v1786 = vsel %vm798, %v1781, 0
        %1788 = vmatpush.bf16.msra.mxu0 0
        %1789 = vmatpush.bf16.msra.mxu0 0
        %1790 = vmatpush.bf16.msra.mxu0 0
        %1791 = vmatpush.bf16.msra.mxu0 0
        %1792 = vmatpush.bf16.msra.mxu0 0
        %1793 = vmatpush.bf16.msra.mxu0 0
        %1794 = vmatpush.bf16.msra.mxu0 0
        %1795 = vmatpush.bf16.msra.mxu0 %v1783
        %1796 = vmatmul.bf16.gmra.mxu0 %v1786
        %v1797 = vpop.f32.mrf.mxu0
        %v1798 = vadd.f32 0.0, %v1797
        %v1799 = vpop.f32.mrf.mxu0
        %1800 = vdwg.mxu0
        %1802 = vrot.lane.b32.xlu0 %v1798, 88
        %v1803 = vpop.permute.xlu0 %1802
        %v1805 = vadd.f32 %v1780, %v1803
        %v1806 = vmul.f32 %v1805, %v1779
        %v1807 = vld [vmem:[#allocation14 + $0x18] sm:$0xff]
        %v1808 = vpack.c.bf16 %v1806, %v1806
        %v1809 = vpack.c.bf16 %v1807, %v1807
        %1811 = vrot.lane.b32.xlu0 %v1808, 40
        %v1812 = vpop.permute.xlu0 %1811
        %v1814 = vsel %vm777, %v1812, 0
        %v1817 = vsel %vm930, %v1809, 0
        %1819 = vmatpush.bf16.msra.mxu0 0
        %1820 = vmatpush.bf16.msra.mxu0 0
        %1821 = vmatpush.bf16.msra.mxu0 0
        %1822 = vmatpush.bf16.msra.mxu0 0
        %1823 = vmatpush.bf16.msra.mxu0 0
        %1824 = vmatpush.bf16.msra.mxu0 0
        %1825 = vmatpush.bf16.msra.mxu0 0
        %1826 = vmatpush.bf16.msra.mxu0 %v1817
        %1827 = vmatmul.bf16.gmra.mxu0 %v1814
        %v1828 = vpop.f32.mrf.mxu0
        %v1829 = vadd.f32 0.0, %v1828
        %v1830 = vpop.f32.mrf.mxu0
        %1831 = vdwg.mxu0
        %v1832 = vadd.f32 %v1735, %v1829
        %v1833 = vadd.f32 %v1832, %v1382
        %v1834 = vsel %vm741, %v1833, 0.0
        %1835 = vadd.xlane.f32.xlu0 %v1834
        %v1836 = vpop.xlane.xlu0 %1835
        %v1837 = vmul.f32 %v1836, %v1178
        %v1838 = vsub.f32 %v1833, %v1837
        %v1839 = vmul.f32 %v1838, %v1838
        %v1840 = vsel %vm741, %v1839, 0.0
        %1841 = vadd.xlane.f32.xlu0 %v1840
        %v1842 = vpop.xlane.xlu0 %1841
        %v1843 = vmul.f32 %v1842, %v1178
        %v1844 = vadd.f32 %v1843, 1e-06
        %v1845 = vrsqrt.pop %v1844
        %v1846 = vmul.f32 %v1845, %v1844
        %v1847 = vmul.f32 %v1846, %v1845
        %v1848 = vmul.f32 0.5, %v1847
        %v1849 = vsub.f32 1.5, %v1848
        %v1850 = vmul.f32 %v1845, %v1849
        %vm1851 = vweird.f32 %v1844
        %vm1852 = vweird.f32 %v1845
        %vm1853 = vmor %vm1851, %vm1852
        %v1854 = vsel %vm1853, %v1845, %v1850
        %v1855 = vmul.f32 %v1838, %v1854
        %v1856 = vperm.slane %v660, 0
        %v1857 = vmul.f32 %v1855, %v1856
        %v1858 = vperm.slane %v661, 0
        %v1859 = vadd.f32 %v1857, %v1858
        %v1860 = vld [vmem:[#allocation16] sm:$0xf]
        %v1861 = vld [vmem:[#allocation16 + $0x4] sm:$0xf]
        %v1862 = vld [vmem:[#allocation16 + $0x8] sm:$0xf]
        %v1863 = vld [vmem:[#allocation16 + $0xc] sm:$0xf]
        %v1864 = vpack.c.bf16 %v1859, %v1859
        %v1865 = vperm.slane %v662, 0
        %v1870 = vunpack.c.l.b16 %v1860
        %v1871 = vunpack.c.l.b16 %v1861
        %v1872 = vunpack.c.l.b16 %v1862
        %v1873 = vunpack.c.l.b16 %v1863
        %v1874 = vpack.c.b16 %v1871, %v1870
        %v1875 = vpack.c.b16 %v1873, %v1872
        %v1879 = vsel %vm741, %v1864, 0
        %1881 = vmatpush.bf16.msra.mxu0 0
        %1882 = vmatpush.bf16.msra.mxu0 0
        %1883 = vmatpush.bf16.msra.mxu0 0
        %1884 = vmatpush.bf16.msra.mxu0 0
        %1885 = vmatpush.bf16.msra.mxu0 0
        %1886 = vmatpush.bf16.msra.mxu0 0
        %1887 = vmatpush.bf16.msra.mxu0 %v1875
        %1888 = vmatpush.bf16.msra.mxu0 %v1874
        %1889 = vmatmul.bf16.gmra.mxu0 %v1879
        %v1890 = vpop.f32.mrf.mxu0
        %v1891 = vadd.f32 %v1865, %v1890
        %v1892 = vpop.f32.mrf.mxu0
        %1893 = vdwg.mxu0
        %v1894 = vmax.f32 %v1891, 0.0
        %v1895 = vld [vmem:[#allocation17] sm:$0xf]
        %v1896 = vld [vmem:[#allocation17 + $0x4] sm:$0xf]
        %v1897 = vld [vmem:[#allocation17 + $0x8] sm:$0xf]
        %v1898 = vld [vmem:[#allocation17 + $0xc] sm:$0xf]
        %v1899 = vpack.c.bf16 %v1894, %v1894
        %v1900 = vperm.slane %v663, 0
        %v1905 = vunpack.c.l.b16 %v1895
        %v1906 = vunpack.c.l.b16 %v1896
        %v1907 = vunpack.c.l.b16 %v1897
        %v1908 = vunpack.c.l.b16 %v1898
        %v1909 = vpack.c.b16 %v1906, %v1905
        %v1910 = vpack.c.b16 %v1908, %v1907
        %v1914 = vsel %vm741, %v1899, 0
        %1916 = vmatpush.bf16.msra.mxu0 0
        %1917 = vmatpush.bf16.msra.mxu0 0
        %1918 = vmatpush.bf16.msra.mxu0 0
        %1919 = vmatpush.bf16.msra.mxu0 0
        %1920 = vmatpush.bf16.msra.mxu0 0
        %1921 = vmatpush.bf16.msra.mxu0 0
        %1922 = vmatpush.bf16.msra.mxu0 %v1910
        %1923 = vmatpush.bf16.msra.mxu0 %v1909
        %1924 = vmatmul.bf16.gmra.mxu0 %v1914
        %v1925 = vpop.f32.mrf.mxu0
        %v1926 = vadd.f32 %v1900, %v1925
        %v1927 = vpop.f32.mrf.mxu0
        %1928 = vdwg.mxu0
        %v1929 = vadd.f32 %v1926, %v1859
        %v1930 = vsel %vm741, %v1929, 0.0
        %1931 = vadd.xlane.f32.xlu0 %v1930
        %v1932 = vpop.xlane.xlu0 %1931
        %v1933 = vmul.f32 %v1932, %v1178
        %v1934 = vsub.f32 %v1929, %v1933
        %v1935 = vmul.f32 %v1934, %v1934
        %v1936 = vsel %vm741, %v1935, 0.0
        %1937 = vadd.xlane.f32.xlu0 %v1936
        %v1938 = vpop.xlane.xlu0 %1937
        %v1939 = vmul.f32 %v1938, %v1178
        %v1940 = vadd.f32 %v1939, 1e-06
        %v1941 = vrsqrt.pop %v1940
        %v1942 = vmul.f32 %v1941, %v1940
        %v1943 = vmul.f32 %v1942, %v1941
        %v1944 = vmul.f32 0.5, %v1943
        %v1945 = vsub.f32 1.5, %v1944
        %v1946 = vmul.f32 %v1941, %v1945
        %vm1947 = vweird.f32 %v1940
        %vm1948 = vweird.f32 %v1941
        %vm1949 = vmor %vm1947, %vm1948
        %v1950 = vsel %vm1949, %v1941, %v1946
        %v1951 = vmul.f32 %v1934, %v1950
        %v1952 = vperm.slane %v664, 0
        %v1953 = vmul.f32 %v1951, %v1952
        %v1954 = vperm.slane %v665, 0
        %v1955 = vadd.f32 %v1953, %v1954
        %1956 = vst.msk [vmem:[%s639] sm:$0xff] %vm741, %v1955
        %s1957 = sand.u32 %s346, 1
        %s1958 = scalar_lea.sflag [#allocation4], %s1957
        %s1959 = sand.u32 %s346, 1
        %s1960 = smul.addr %s1959, 8
        %s1961 = scalar_lea.vmem [#allocation19], %s1960
        // Predicated region
        $region117: #{tpu_custom_call.1} parent=75 // pred_check
          %p1962 = pneg %p356
        $region118: #{tpu_custom_call.1} parent=75 // pred_check_branch
          %1964 = sbr.rel (%p1962) target = $region120
        $region119: #{tpu_custom_call.1} parent=75 // pred_region
          %1966 = vsyncadd %s1958, 0
          %s1967 = smul.addr %s34, 8
          %s1968 = scalar_lea.hbm %s14, %s1967
          %s1970 = sshll.u32 %s1961, 4
          %s1971 = int_to_ptr.vmem [resolvable:$true] %s1970
          %s1972 = sshll.u32 %s1968, 4
          %s1973 = int_to_ptr.hbm [resolvable:$true] %s1972
          %1975 = dma.vmem_to_hbm [thread:$0]  %s1971, 128, %s1973, %s1958
        $region120: #{tpu_custom_call.1} parent=75 // pred_fallthru
          _
      $region76: #{tpu_custom_call.1} parent=5 // pred_fallthru
        _
      %p1976 = scmp.le.s32.totalorder 2, %s29
      // Predicated region
      $region121: #{tpu_custom_call.1} parent=5 // pred_check
        %p1977 = pneg %p1976
      $region122: #{tpu_custom_call.1} parent=5 // pred_check_branch
        %1979 = sbr.rel (%p1977) target = $region124
      $region123: #{tpu_custom_call.1} parent=5 // pred_region
        %s1980 = ssub.s32 %s29, 2
        // Predicated region
        $region125: #{tpu_custom_call.1} parent=123 // pred_check
          %p1981 = pneg %p362
        $region126: #{tpu_custom_call.1} parent=123 // pred_check_branch
          %1983 = sbr.rel (%p1981) target = $region128
        $region127: #{tpu_custom_call.1} parent=123 // pred_region
          %s1984 = sand.u32 %s347, 1
          %s1985 = scalar_lea.sflag [#allocation4], %s1984
          %s1986 = sand.u32 %s347, 1
          %s1987 = smul.addr %s1986, 8
          %s1988 = scalar_lea.vmem [#allocation19], %s1987
          %1990 = dma.done %s1985, 128
        $region128: #{tpu_custom_call.1} parent=123 // pred_fallthru
          _
      $region124: #{tpu_custom_call.1} parent=5 // pred_fallthru
        _
    $region6: #{tpu_custom_call.1} parent=1 // loop_footer
      %s33 = sadd.s32 1, %s29
    $region7: #{tpu_custom_call.1} parent=1 // loop_footer_branch
      %28 = sbr.rel target = $region3
    $region8: #{tpu_custom_call.1} parent=1 // loop_exit
      _
    %1991 = vsyncpa [#allocation3], 1
    %s1992 = scalar_lea.sflag [#allocation3], 1
    %1993 = vsyncpa %s1992, 1
    %1994 = vsyncpa [#allocation6], 1
    %1995 = vsyncpa [#allocation9], 1
    %1996 = vsyncpa [#allocation12], 1
    %1997 = vsyncpa [#allocation15], 1
    %1998 = vsyncpa [#allocation18], 1
    %1999 = vsyncpa [#allocation4], 1
    %s2000 = scalar_lea.sflag [#allocation4], 1
    %2001 = vsyncpa %s2000, 1

</llo_original>
